<compile_context>
chip_gen: v7x
topology: tpu7x:2x2x1
jax: 0.10.0
libtpu: 0.0.40
codegen_flags: <defaults>
</compile_context>

<pallas_src>
import numpy as np
import jax
import jax.numpy as jnp
from jax.experimental import pallas as pl
from jax.experimental.pallas import tpu as pltpu


# ----------------------------------------------------------------------------
# Surrogate backbone: strided patch-embedding (bf16 matmul on MXU) + ReLU
# ----------------------------------------------------------------------------
def _patch_embed_kernel(x_ref, w_ref, b_ref, o_ref):
    # x_ref: (tm, K) bf16   w_ref: (K, C) bf16   b_ref: (1, C) f32   o_ref: (tm, C) bf16
    y = jnp.dot(x_ref[...], w_ref[...], preferred_element_type=jnp.float32)
    y = jnp.maximum(y + b_ref[...], 0.0)
    o_ref[...] = y.astype(o_ref.dtype)


def _choose_tile_m(m):
    # Mem-bound matmul with the weight resident: use the largest M tile that divides M.
    for tm in (1024, 512, 256, 128, 64, 32, 16, 8):
        if m % tm == 0:
            return tm
    return m


def patch_embed(patches2d, w, b):
    m, k = patches2d.shape
    c = w.shape[1]
    tm = _choose_tile_m(m)
    return pl.pallas_call(
        _patch_embed_kernel,
        out_shape=jax.ShapeDtypeStruct((m, c), jnp.bfloat16),
        grid_spec=pltpu.PrefetchScalarGridSpec(
            num_scalar_prefetch=0,
            grid=(m // tm,),
            in_specs=[
                pl.BlockSpec((tm, k), lambda i: (i, 0)),
                pl.BlockSpec((k, c), lambda i: (0, 0)),   # weight stays resident
                pl.BlockSpec((1, c), lambda i: (0, 0)),
            ],
            out_specs=pl.BlockSpec((tm, c), lambda i: (i, 0)),
        ),
        compiler_params=pltpu.CompilerParams(
            dimension_semantics=("parallel",),
            vmem_limit_bytes=64 * 1024 * 1024,
        ),
    )(patches2d.astype(jnp.bfloat16), w.astype(jnp.bfloat16), b.astype(jnp.float32))


def _patchify(x_nhwc, patch):
    b, h, w, c = x_nhwc.shape
    hp, wp = h // patch, w // patch
    x = x_nhwc.reshape(b, hp, patch, wp, patch, c)
    x = jnp.transpose(x, (0, 1, 3, 2, 4, 5))
    return x.reshape(b * hp * wp, patch * patch * c)


def _pad_k(x, mult=128):
    pad = (-x.shape[-1]) % mult
    if pad == 0:
        return x
    return jnp.pad(x, ((0, 0), (0, pad)))


def _pad_rows(x, mult=128):
    pad = (-x.shape[0]) % mult
    if pad == 0:
        return x
    return jnp.pad(x, ((0, pad), (0, 0)))


# ----------------------------------------------------------------------------
# Host-side 1-D operator matrices (PyTorch semantics)
# ----------------------------------------------------------------------------
def _pool_matrix(n):
    # 3-tap stride-1 average with zero padding, count_include_pad=True -> 1/3 taps.
    m = np.zeros((n, n), np.float32)
    for i in range(n):
        for j in (i - 1, i, i + 1):
            if 0 <= j < n:
                m[i, j] = 1.0 / 3.0
    return m


def _bilinear_matrix(out_size, in_size):
    # align_corners=False with PyTorch source-index clamp.
    m = np.zeros((out_size, in_size), np.float32)
    for p in range(out_size):
        src = max((p + 0.5) * (in_size / out_size) - 0.5, 0.0)
        i0 = min(int(np.floor(src)), in_size - 1)
        i1 = min(i0 + 1, in_size - 1)
        frac = src - i0
        m[p, i0] += 1.0 - frac
        m[p, i1] += frac
    return m


def _choose_strip(h2):
    for s in (16, 8):
        if h2 % s == 0:
            return s
    return h2


# ----------------------------------------------------------------------------
# Fused merge kernel: avg-pool both maps, bilinear-upsample feat3, channel concat
# ----------------------------------------------------------------------------
def pool_upsample_merge(feat2, feat3):
    B, H2, W2, C2 = feat2.shape
    _, H3, W3, C3 = feat3.shape
    Ct = C2 + C3
    Sh = _choose_strip(H2)
    ns = H2 // Sh

    # feat2 H-pool operator (per-strip rows sliced by the BlockSpec index_map).
    a2 = jnp.asarray(_pool_matrix(H2), jnp.bfloat16)                     # (H2, H2)
    # feat3 combined spatial operator: pool(3x3,pad1) then bilinear up to (H2, W2),
    # separable -> kron of the two 1-D (interp @ pool) operators.  Dense + MXU-only,
    # so no batched tiny matmuls / sublane interleaves are needed in-kernel.
    op3_np = np.kron(_bilinear_matrix(H2, H3) @ _pool_matrix(H3),
                     _bilinear_matrix(W2, W3) @ _pool_matrix(W3))        # (H2*W2, H3*W3)
    op3 = jnp.asarray(op3_np, jnp.bfloat16)

    # Free, contiguous layout changes so the kernel only needs safe reshapes.
    f2 = feat2.reshape(B, H2, W2 * C2)       # H on sublanes, (W,C) fused on lanes
    f3 = feat3.reshape(B, H3 * W3, C3)       # fused spatial dim on sublanes

    inv3 = 1.0 / 3.0

    def kernel(f2_ref, f3_ref, a2_ref, op3_ref, o_ref):
        # ---- feat2: AvgPool2d(3, stride=1, padding=1), count_include_pad=True ----
        # H-pool: one (Sh, H2) x (H2, W2*C2) bf16 matmul, f32 accumulation.
        t2 = jnp.dot(a2_ref[...], f2_ref[0], preferred_element_type=jnp.float32)
        # W-pool: two lane shifts by C2 (128-aligned) + zero edge columns + 3-tap add.
        z = jnp.zeros((Sh, C2), jnp.float32)
        left = jnp.concatenate([z, t2[:, : (W2 - 1) * C2]], axis=1)
        right = jnp.concatenate([t2[:, C2:], z], axis=1)
        p2 = (left + t2 + right) * inv3
        o_ref[0, :, :, 0:C2] = p2.reshape(Sh, W2, C2).astype(o_ref.dtype)

        # ---- feat3: pool + bilinear upsample fused into one MXU matmul ----
        t3 = jnp.dot(op3_ref[...], f3_ref[0], preferred_element_type=jnp.float32)
        o_ref[0, :, :, C2:Ct] = t3.reshape(Sh, W2, C3).astype(o_ref.dtype)

    return pl.pallas_call(
        kernel,
        out_shape=jax.ShapeDtypeStruct((B, H2, W2, Ct), jnp.bfloat16),
        grid_spec=pltpu.PrefetchScalarGridSpec(
            num_scalar_prefetch=0,
            grid=(B, ns),
            in_specs=[
                pl.BlockSpec((1, H2, W2 * C2), lambda b, s: (b, 0, 0)),
                pl.BlockSpec((1, H3 * W3, C3), lambda b, s: (b, 0, 0)),
                pl.BlockSpec((Sh, H2), lambda b, s: (s, 0)),
                pl.BlockSpec((Sh * W2, H3 * W3), lambda b, s: (s, 0)),
            ],
            out_specs=pl.BlockSpec((1, Sh, W2, Ct), lambda b, s: (b, s, 0, 0)),
        ),
        compiler_params=pltpu.CompilerParams(
            dimension_semantics=("parallel", "parallel"),
            vmem_limit_bytes=64 * 1024 * 1024,
        ),
    )(f2, f3, a2, op3)


# ----------------------------------------------------------------------------
# Full forward (matches FeatureExtractor.forward semantics / shapes)
# ----------------------------------------------------------------------------
def feature_extractor_forward(x_nchw, params):
    x = jnp.transpose(x_nchw, (0, 2, 3, 1)).astype(jnp.float32)          # NCHW -> NHWC
    b, h, w, _ = x.shape
    c2 = params["w2"].shape[1]
    c3 = params["w3"].shape[1]

    # surrogate "layer2" (c2 @ H/8) and "layer3" (c3 @ H/16); bf16 feature maps.
    # Patchify + K-pad + bf16 cast fuse into a single XLA pass into HBM.
    p2 = _pad_k(_patchify(x, 8)).astype(jnp.bfloat16)                    # K: 192 -> 256
    w2 = _pad_rows(params["w2"])
    p3 = _patchify(x, 16).astype(jnp.bfloat16)                           # K: 768
    feat2 = patch_embed(p2, w2, params["b2"]).reshape(b, h // 8, w // 8, c2)
    feat3 = patch_embed(p3, params["w3"], params["b3"]).reshape(b, h // 16, w // 16, c3)

    # pool both maps, bilinearly upsample feat3 to feat2's size, concat channels.
    merged = pool_upsample_merge(feat2, feat3)                           # NHWC, bf16

    # Match the module's NCHW/f32 output; consumers happy with NHWC/bf16 can skip this.
    return jnp.transpose(merged, (0, 3, 1, 2)).astype(jnp.float32)


def make_params(key):
    k1, k2, k3, k4 = jax.random.split(key, 4)
    return {
        "w2": 0.05 * jax.random.normal(k1, (8 * 8 * 3, 512), jnp.float32),
        "b2": 0.05 * jax.random.normal(k2, (1, 512), jnp.float32),
        "w3": 0.05 * jax.random.normal(k3, (16 * 16 * 3, 1024), jnp.float32),
        "b3": 0.05 * jax.random.normal(k4, (1, 1024), jnp.float32),
    }


if __name__ == "__main__":
    key = jax.random.PRNGKey(0)
    kp, kx = jax.random.split(key)
    params = make_params(kp)

    # small image batch, NCHW like PyTorch
    x = jax.random.normal(kx, (2, 3, 64, 64), jnp.float32)

    out = jax.jit(feature_extractor_forward)(x, params)
    out = jax.block_until_ready(out)

    assert out.shape == (2, 512 + 1024, 8, 8), out.shape
    assert bool(jnp.all(jnp.isfinite(out)))
    print("KERNEL_OK")
</pallas_src>

<mosaic_0001>
module attributes {stable_mosaic.version = 11 : i64} {
  func.func @_patch_embed_kernel(%arg0: i32, %arg1: memref<32x768xbf16, #tpu.memory_space<vmem>>, %arg2: memref<768x1024xbf16, #tpu.memory_space<vmem>>, %arg3: memref<1x1024xf32, #tpu.memory_space<vmem>>, %arg4: memref<32x1024xbf16, #tpu.memory_space<vmem>>) attributes {dimension_semantics = [#tpu.dimension_semantics<parallel>], iteration_bounds = array<i64: 1>, scalar_prefetch = 0 : i64, scratch_operands = 0 : i64, tpu.core_type = #tpu.core_type<tc>, window_params = [{transform_indices = @transform_0, window_bounds = array<i64: 32, 768>}, {pipeline_mode = #tpu.pipeline_mode<synchronous>, transform_indices = @transform_1, window_bounds = array<i64: 768, 1024>}, {pipeline_mode = #tpu.pipeline_mode<synchronous>, transform_indices = @transform_2, window_bounds = array<i64: 1, 1024>}, {transform_indices = @transform_3, window_bounds = array<i64: 32, 1024>}]} {
    %c0 = arith.constant 0 : index
    %c0_0 = arith.constant 0 : index
    %0 = vector.load %arg1[%c0, %c0_0] : memref<32x768xbf16, #tpu.memory_space<vmem>>, vector<32x768xbf16>
    %c0_1 = arith.constant 0 : index
    %c0_2 = arith.constant 0 : index
    %1 = vector.load %arg2[%c0_1, %c0_2] : memref<768x1024xbf16, #tpu.memory_space<vmem>>, vector<768x1024xbf16>
    %cst = arith.constant dense<0.000000e+00> : vector<32x1024xf32>
    %2 = tpu.matmul %0, %1, %cst {dimension_numbers = #tpu.dot_dimension_numbers<[1], [0], [0], [1], [0, 0, 1, 1], [], []>} : vector<32x768xbf16>, vector<768x1024xbf16>, vector<32x1024xf32> -> vector<32x1024xf32>
    %c0_3 = arith.constant 0 : index
    %c0_4 = arith.constant 0 : index
    %3 = vector.load %arg3[%c0_3, %c0_4] : memref<1x1024xf32, #tpu.memory_space<vmem>>, vector<1x1024xf32>
    %4 = vector.broadcast %3 : vector<1x1024xf32> to vector<32x1024xf32>
    %5 = arith.addf %2, %4 : vector<32x1024xf32>
    %cst_5 = arith.constant 0.000000e+00 : f32
    %6 = vector.broadcast %cst_5 : f32 to vector<32x1024xf32>
    %7 = arith.maximumf %5, %6 : vector<32x1024xf32>
    %8 = arith.truncf %7 : vector<32x1024xf32> to vector<32x1024xbf16>
    %c0_6 = arith.constant 0 : index
    %c0_7 = arith.constant 0 : index
    %9 = vector.load %arg4[%c0_6, %c0_7] : memref<32x1024xbf16, #tpu.memory_space<vmem>>, vector<32x1024xbf16>
    tpu.vector_store %arg4[%c0_6, %c0_7], %8 {strides = array<i32>} : memref<32x1024xbf16, #tpu.memory_space<vmem>>, vector<32x1024xbf16>,
    return
  }
  func.func @transform_0(%arg0: i32) -> (i32, i32) {
    %c0_i32 = arith.constant 0 : i32
    %c0_i32_0 = arith.constant 0 : i32
    return %arg0, %c0_i32 : i32, i32
  }
  func.func @transform_1(%arg0: i32) -> (i32, i32) {
    %c0_i32 = arith.constant 0 : i32
    %c0_i32_0 = arith.constant 0 : i32
    %c0_i32_1 = arith.constant 0 : i32
    return %c0_i32, %c0_i32_0 : i32, i32
  }
  func.func @transform_2(%arg0: i32) -> (i32, i32) {
    %c0_i32 = arith.constant 0 : i32
    %c0_i32_0 = arith.constant 0 : i32
    %c0_i32_1 = arith.constant 0 : i32
    return %c0_i32, %c0_i32_0 : i32, i32
  }
  func.func @transform_3(%arg0: i32) -> (i32, i32) {
    %c0_i32 = arith.constant 0 : i32
    %c0_i32_0 = arith.constant 0 : i32
    return %arg0, %c0_i32 : i32, i32
  }
}

module attributes {stable_mosaic.version = 11 : i64} {
  func.func @_patch_embed_kernel(%arg0: i32, %arg1: memref<128x256xbf16, #tpu.memory_space<vmem>>, %arg2: memref<256x512xbf16, #tpu.memory_space<vmem>>, %arg3: memref<1x512xf32, #tpu.memory_space<vmem>>, %arg4: memref<128x512xbf16, #tpu.memory_space<vmem>>) attributes {dimension_semantics = [#tpu.dimension_semantics<parallel>], iteration_bounds = array<i64: 1>, scalar_prefetch = 0 : i64, scratch_operands = 0 : i64, tpu.core_type = #tpu.core_type<tc>, window_params = [{transform_indices = @transform_0, window_bounds = array<i64: 128, 256>}, {pipeline_mode = #tpu.pipeline_mode<synchronous>, transform_indices = @transform_1, window_bounds = array<i64: 256, 512>}, {pipeline_mode = #tpu.pipeline_mode<synchronous>, transform_indices = @transform_2, window_bounds = array<i64: 1, 512>}, {transform_indices = @transform_3, window_bounds = array<i64: 128, 512>}]} {
    %c0 = arith.constant 0 : index
    %c0_0 = arith.constant 0 : index
    %0 = vector.load %arg1[%c0, %c0_0] : memref<128x256xbf16, #tpu.memory_space<vmem>>, vector<128x256xbf16>
    %c0_1 = arith.constant 0 : index
    %c0_2 = arith.constant 0 : index
    %1 = vector.load %arg2[%c0_1, %c0_2] : memref<256x512xbf16, #tpu.memory_space<vmem>>, vector<256x512xbf16>
    %cst = arith.constant dense<0.000000e+00> : vector<128x512xf32>
    %2 = tpu.matmul %0, %1, %cst {dimension_numbers = #tpu.dot_dimension_numbers<[1], [0], [0], [1], [0, 0, 1, 1], [], []>} : vector<128x256xbf16>, vector<256x512xbf16>, vector<128x512xf32> -> vector<128x512xf32>
    %c0_3 = arith.constant 0 : index
    %c0_4 = arith.constant 0 : index
    %3 = vector.load %arg3[%c0_3, %c0_4] : memref<1x512xf32, #tpu.memory_space<vmem>>, vector<1x512xf32>
    %4 = vector.broadcast %3 : vector<1x512xf32> to vector<128x512xf32>
    %5 = arith.addf %2, %4 : vector<128x512xf32>
    %cst_5 = arith.constant 0.000000e+00 : f32
    %6 = vector.broadcast %cst_5 : f32 to vector<128x512xf32>
    %7 = arith.maximumf %5, %6 : vector<128x512xf32>
    %8 = arith.truncf %7 : vector<128x512xf32> to vector<128x512xbf16>
    %c0_6 = arith.constant 0 : index
    %c0_7 = arith.constant 0 : index
    %9 = vector.load %arg4[%c0_6, %c0_7] : memref<128x512xbf16, #tpu.memory_space<vmem>>, vector<128x512xbf16>
    tpu.vector_store %arg4[%c0_6, %c0_7], %8 {strides = array<i32>} : memref<128x512xbf16, #tpu.memory_space<vmem>>, vector<128x512xbf16>,
    return
  }
  func.func @transform_0(%arg0: i32) -> (i32, i32) {
    %c0_i32 = arith.constant 0 : i32
    %c0_i32_0 = arith.constant 0 : i32
    return %arg0, %c0_i32 : i32, i32
  }
  func.func @transform_1(%arg0: i32) -> (i32, i32) {
    %c0_i32 = arith.constant 0 : i32
    %c0_i32_0 = arith.constant 0 : i32
    %c0_i32_1 = arith.constant 0 : i32
    return %c0_i32, %c0_i32_0 : i32, i32
  }
  func.func @transform_2(%arg0: i32) -> (i32, i32) {
    %c0_i32 = arith.constant 0 : i32
    %c0_i32_0 = arith.constant 0 : i32
    %c0_i32_1 = arith.constant 0 : i32
    return %c0_i32, %c0_i32_0 : i32, i32
  }
  func.func @transform_3(%arg0: i32) -> (i32, i32) {
    %c0_i32 = arith.constant 0 : i32
    %c0_i32_0 = arith.constant 0 : i32
    return %arg0, %c0_i32 : i32, i32
  }
}

module attributes {stable_mosaic.version = 11 : i64} {
  func.func @kernel(%arg0: i32, %arg1: i32, %arg2: memref<1x8x4096xbf16, #tpu.memory_space<vmem>>, %arg3: memref<1x16x1024xbf16, #tpu.memory_space<vmem>>, %arg4: memref<8x8xbf16, #tpu.memory_space<vmem>>, %arg5: memref<64x16xbf16, #tpu.memory_space<vmem>>, %arg6: memref<1x8x8x1536xbf16, #tpu.memory_space<vmem>>) attributes {dimension_semantics = [#tpu.dimension_semantics<parallel>, #tpu.dimension_semantics<parallel>], iteration_bounds = array<i64: 2, 1>, scalar_prefetch = 0 : i64, scratch_operands = 0 : i64, tpu.core_type = #tpu.core_type<tc>, window_params = [{transform_indices = @transform_0, window_bounds = array<i64: 1, 8, 4096>}, {transform_indices = @transform_1, window_bounds = array<i64: 1, 16, 1024>}, {transform_indices = @transform_2, window_bounds = array<i64: 8, 8>}, {transform_indices = @transform_3, window_bounds = array<i64: 64, 16>}, {transform_indices = @transform_4, window_bounds = array<i64: 1, 8, 8, 1536>}]} {
    %c0 = arith.constant 0 : index
    %c0_0 = arith.constant 0 : index
    %0 = vector.load %arg4[%c0, %c0_0] : memref<8x8xbf16, #tpu.memory_space<vmem>>, vector<8x8xbf16>
    %c0_1 = arith.constant 0 : index
    %c0_2 = arith.constant 0 : index
    %c0_3 = arith.constant 0 : index
    %1 = vector.load %arg2[%c0_1, %c0_2, %c0_3] : memref<1x8x4096xbf16, #tpu.memory_space<vmem>>, vector<1x8x4096xbf16>
    %2 = vector.shape_cast %1 : vector<1x8x4096xbf16> to vector<8x4096xbf16>
    %cst = arith.constant dense<0.000000e+00> : vector<8x4096xf32>
    %3 = tpu.matmul %0, %2, %cst {dimension_numbers = #tpu.dot_dimension_numbers<[1], [0], [0], [1], [0, 0, 1, 1], [], []>} : vector<8x8xbf16>, vector<8x4096xbf16>, vector<8x4096xf32> -> vector<8x4096xf32>
    %cst_4 = arith.constant 0.000000e+00 : f32
    %4 = vector.broadcast %cst_4 : f32 to vector<8x512xf32>
    %5 = vector.extract_strided_slice %3 {offsets = [0, 0], sizes = [8, 3584], strides = [1, 1]} : vector<8x4096xf32> to vector<8x3584xf32>
    %6 = tpu.concatenate %4, %5 in 1 : vector<8x512xf32>, vector<8x3584xf32> -> vector<8x4096xf32>
    %7 = vector.extract_strided_slice %3 {offsets = [0, 512], sizes = [8, 3584], strides = [1, 1]} : vector<8x4096xf32> to vector<8x3584xf32>
    %8 = tpu.concatenate %7, %4 in 1 : vector<8x3584xf32>, vector<8x512xf32> -> vector<8x4096xf32>
    %9 = arith.addf %6, %3 : vector<8x4096xf32>
    %10 = arith.addf %9, %8 : vector<8x4096xf32>
    %cst_5 = arith.constant 0.333333343 : f32
    %11 = vector.broadcast %cst_5 : f32 to vector<8x4096xf32>
    %12 = arith.mulf %10, %11 : vector<8x4096xf32>
    %13 = vector.shape_cast %12 : vector<8x4096xf32> to vector<8x8x512xf32>
    %14 = arith.truncf %13 : vector<8x8x512xf32> to vector<8x8x512xbf16>
    %c0_6 = arith.constant 0 : index
    %c0_7 = arith.constant 0 : index
    %c0_8 = arith.constant 0 : index
    %c0_9 = arith.constant 0 : index
    %15 = vector.load %arg6[%c0_6, %c0_7, %c0_8, %c0_9] : memref<1x8x8x1536xbf16, #tpu.memory_space<vmem>>, vector<1x8x8x512xbf16>
    %16 = vector.shape_cast %15 : vector<1x8x8x512xbf16> to vector<8x8x512xbf16>
    %17 = vector.shape_cast %14 : vector<8x8x512xbf16> to vector<1x8x8x512xbf16>
    tpu.vector_store %arg6[%c0_6, %c0_7, %c0_8, %c0_9], %17 {strides = array<i32>} : memref<1x8x8x1536xbf16, #tpu.memory_space<vmem>>, vector<1x8x8x512xbf16>,
    %c0_10 = arith.constant 0 : index
    %c0_11 = arith.constant 0 : index
    %18 = vector.load %arg5[%c0_10, %c0_11] : memref<64x16xbf16, #tpu.memory_space<vmem>>, vector<64x16xbf16>
    %c0_12 = arith.constant 0 : index
    %c0_13 = arith.constant 0 : index
    %c0_14 = arith.constant 0 : index
    %19 = vector.load %arg3[%c0_12, %c0_13, %c0_14] : memref<1x16x1024xbf16, #tpu.memory_space<vmem>>, vector<1x16x1024xbf16>
    %20 = vector.shape_cast %19 : vector<1x16x1024xbf16> to vector<16x1024xbf16>
    %cst_15 = arith.constant dense<0.000000e+00> : vector<64x1024xf32>
    %21 = tpu.matmul %18, %20, %cst_15 {dimension_numbers = #tpu.dot_dimension_numbers<[1], [0], [0], [1], [0, 0, 1, 1], [], []>} : vector<64x16xbf16>, vector<16x1024xbf16>, vector<64x1024xf32> -> vector<64x1024xf32>
    %22 = vector.shape_cast %21 : vector<64x1024xf32> to vector<8x8x1024xf32>
    %23 = arith.truncf %22 : vector<8x8x1024xf32> to vector<8x8x1024xbf16>
    %c0_16 = arith.constant 0 : index
    %c0_17 = arith.constant 0 : index
    %c0_18 = arith.constant 0 : index
    %c512 = arith.constant 512 : index
    %24 = vector.load %arg6[%c0_16, %c0_17, %c0_18, %c512] : memref<1x8x8x1536xbf16, #tpu.memory_space<vmem>>, vector<1x8x8x1024xbf16>
    %25 = vector.shape_cast %24 : vector<1x8x8x1024xbf16> to vector<8x8x1024xbf16>
    %26 = vector.shape_cast %23 : vector<8x8x1024xbf16> to vector<1x8x8x1024xbf16>
    tpu.vector_store %arg6[%c0_16, %c0_17, %c0_18, %c512], %26 {strides = array<i32>} : memref<1x8x8x1536xbf16, #tpu.memory_space<vmem>>, vector<1x8x8x1024xbf16>,
    return
  }
  func.func @transform_0(%arg0: i32, %arg1: i32) -> (i32, i32, i32) {
    %c0_i32 = arith.constant 0 : i32
    %c0_i32_0 = arith.constant 0 : i32
    %c0_i32_1 = arith.constant 0 : i32
    return %arg0, %c0_i32, %c0_i32_0 : i32, i32, i32
  }
  func.func @transform_1(%arg0: i32, %arg1: i32) -> (i32, i32, i32) {
    %c0_i32 = arith.constant 0 : i32
    %c0_i32_0 = arith.constant 0 : i32
    %c0_i32_1 = arith.constant 0 : i32
    return %arg0, %c0_i32, %c0_i32_0 : i32, i32, i32
  }
  func.func @transform_2(%arg0: i32, %arg1: i32) -> (i32, i32) {
    %c0_i32 = arith.constant 0 : i32
    %c0_i32_0 = arith.constant 0 : i32
    return %arg1, %c0_i32 : i32, i32
  }
  func.func @transform_3(%arg0: i32, %arg1: i32) -> (i32, i32) {
    %c0_i32 = arith.constant 0 : i32
    %c0_i32_0 = arith.constant 0 : i32
    return %arg1, %c0_i32 : i32, i32
  }
  func.func @transform_4(%arg0: i32, %arg1: i32) -> (i32, i32, i32, i32) {
    %c0_i32 = arith.constant 0 : i32
    %c0_i32_0 = arith.constant 0 : i32
    %c0_i32_1 = arith.constant 0 : i32
    return %arg0, %arg1, %c0_i32, %c0_i32_0 : i32, i32, i32, i32
  }
}

</mosaic_0001>

<llo_original>
// kernel: feature_extractor_forward.4
$region0: #{feature_extractor_forward.4}
  #allocation0 [shape = 'u32[]', space=smem, size = 0x4, offset = 0x4, fixed_abs, tag = 'smem constant byte address 0x4 - core index']
  #allocation1 [shape = 'u32[144,128]{1,0:T(1,128)}', space=vmem, size = 0x12000, scoped, tag = 'internal scratch']
  %s0 = inlined_call_operand.hbm [shape: bf16[32,768], index: 0, kind: input, shape index: {}]
  %s1 = inlined_call_operand.hbm [shape: bf16[768,1024], index: 1, kind: input, shape index: {}]
  %s2 = inlined_call_operand.hbm [shape: f32[1,1024], index: 2, kind: input, shape index: {}]
  %s3 = inlined_call_operand.hbm [shape: bf16[32,1024], index: 3, kind: output, shape index: {}]
  %s4 = sld [smem:[#allocation0]]
  $region34: #{feature_extractor_forward.4} parent=0
    _
  %s6 = ssub.s32 1, %s4
  %s7 = scalar_select 0, %s6, %s4
  $region1: #{feature_extractor_forward.4} parent=0
    #allocation2 [shape = 'u8[49152]{0}', space=vmem, size = 0xc000, scoped, tag = 'input window, operand 0, single buffered']
    #allocation3 [shape = 's32[1]{0}', space=sflag, size = 0x4, scoped, tag = 'scoped memory for feature_extractor_forward.4']
    #allocation4 [shape = 's32[1]{0}', space=sflag, size = 0x4, scoped, tag = 'scoped memory for feature_extractor_forward.4']
    #allocation5 [shape = 'u8[1572864]{0}', space=vmem, size = 0x180000, scoped, tag = 'input window, operand 1, single buffered']
    #allocation6 [shape = 's32[1]{0}', space=sflag, size = 0x4, scoped, tag = 'scoped memory for feature_extractor_forward.4']
    #allocation7 [shape = 'u8[4096]{0}', space=vmem, size = 0x1000, scoped, tag = 'input window, operand 2, single buffered']
    #allocation8 [shape = 'u8[65536]{0}', space=vmem, size = 0x10000, scoped, tag = 'output window, operand 0, single buffered']
    %8 = vsyncpa [#allocation3], 0
    %9 = vsyncpa [#allocation6], 0
    %10 = vsyncpa [#allocation4], 0
    // Predicated region
    $region2: #{feature_extractor_forward.4} parent=1 // pred_check
      _
    $region3: #{feature_extractor_forward.4} parent=1 // pred_check_branch
      %12 = sbr.rel (0) target = $region5
    $region4: #{feature_extractor_forward.4} parent=1 // pred_region
      %s14 = ssub.s32 1536, 1536
      %15 = vsyncadd [#allocation3], %s14
      %s16 = sshll.u32 [#allocation2], 4
      %s17 = int_to_ptr.vmem [resolvable:$true] %s16
      %22 = dma.hbm_to_vmem [thread:$0]  %s0, 1536, %s17, [#allocation3], 384, 384, 24
    $region5: #{feature_extractor_forward.4} parent=1 // pred_fallthru
      _
    // Predicated region
    $region6: #{feature_extractor_forward.4} parent=1 // pred_check
      _
    $region7: #{feature_extractor_forward.4} parent=1 // pred_check_branch
      %24 = sbr.rel (0) target = $region9
    $region8: #{feature_extractor_forward.4} parent=1 // pred_region
      %s26 = ssub.s32 49152, 49152
      %27 = vsyncadd [#allocation6], %s26
      %s28 = sshll.u32 [#allocation5], 4
      %s29 = int_to_ptr.vmem [resolvable:$true] %s28
      %34 = dma.hbm_to_vmem [thread:$0]  %s1, 49152, %s29, [#allocation6], 512, 512, 32
    $region9: #{feature_extractor_forward.4} parent=1 // pred_fallthru
      _
    // Predicated region
    $region10: #{feature_extractor_forward.4} parent=1 // pred_check
      _
    $region11: #{feature_extractor_forward.4} parent=1 // pred_check_branch
      %36 = sbr.rel (0) target = $region13
    $region12: #{feature_extractor_forward.4} parent=1 // pred_region
      %s38 = ssub.s32 128, 128
      %39 = vsyncadd [#allocation6], %s38
      %s41 = sshll.u32 [#allocation7], 4
      %s42 = int_to_ptr.vmem [resolvable:$true] %s41
      %44 = dma.hbm_to_vmem [thread:$0]  %s2, 128, %s42, [#allocation6]
    $region13: #{feature_extractor_forward.4} parent=1 // pred_fallthru
      _
    // Predicated region
    $region14: #{feature_extractor_forward.4} parent=1 // pred_check
      _
    $region15: #{feature_extractor_forward.4} parent=1 // pred_check_branch
      %46 = sbr.rel (0) target = $region17
    $region16: #{feature_extractor_forward.4} parent=1 // pred_region
      %47 = dma.done [#allocation3], 1536
    $region17: #{feature_extractor_forward.4} parent=1 // pred_fallthru
      _
    // Predicated region
    $region18: #{feature_extractor_forward.4} parent=1 // pred_check
      _
    $region19: #{feature_extractor_forward.4} parent=1 // pred_check_branch
      %49 = sbr.rel (0) target = $region21
    $region20: #{feature_extractor_forward.4} parent=1 // pred_region
      %50 = dma.done [#allocation6], 49152
    $region21: #{feature_extractor_forward.4} parent=1 // pred_fallthru
      _
    // Predicated region
    $region22: #{feature_extractor_forward.4} parent=1 // pred_check
      _
    $region23: #{feature_extractor_forward.4} parent=1 // pred_check_branch
      %52 = sbr.rel (0) target = $region25
    $region24: #{feature_extractor_forward.4} parent=1 // pred_region
      %53 = dma.done [#allocation6], 128
    $region25: #{feature_extractor_forward.4} parent=1 // pred_fallthru
      _
    %v54 = vld [vmem:[#allocation2] sm:$0xff]
    %v55 = vld [vmem:[#allocation2 + $0x8] sm:$0xff]
    %v56 = vld [vmem:[#allocation2 + $0x10] sm:$0xff]
    %v57 = vld [vmem:[#allocation2 + $0x18] sm:$0xff]
    %v58 = vld [vmem:[#allocation2 + $0x20] sm:$0xff]
    %v59 = vld [vmem:[#allocation2 + $0x28] sm:$0xff]
    %v60 = vld [vmem:[#allocation2 + $0x30] sm:$0xff]
    %v61 = vld [vmem:[#allocation2 + $0x38] sm:$0xff]
    %v62 = vld [vmem:[#allocation2 + $0x40] sm:$0xff]
    %v63 = vld [vmem:[#allocation2 + $0x48] sm:$0xff]
    %v64 = vld [vmem:[#allocation2 + $0x50] sm:$0xff]
    %v65 = vld [vmem:[#allocation2 + $0x58] sm:$0xff]
    %v66 = vld [vmem:[#allocation5] sm:$0xff]
    %v67 = vld [vmem:[#allocation5 + $0x8] sm:$0xff]
    %v68 = vld [vmem:[#allocation5 + $0x10] sm:$0xff]
    %v69 = vld [vmem:[#allocation5 + $0x18] sm:$0xff]
    %v70 = vld [vmem:[#allocation5 + $0x20] sm:$0xff]
    %v71 = vld [vmem:[#allocation5 + $0x28] sm:$0xff]
    %v72 = vld [vmem:[#allocation5 + $0x30] sm:$0xff]
    %v73 = vld [vmem:[#allocation5 + $0x38] sm:$0xff]
    %v74 = vld [vmem:[#allocation5 + $0x40] sm:$0xff]
    %v75 = vld [vmem:[#allocation5 + $0x48] sm:$0xff]
    %v76 = vld [vmem:[#allocation5 + $0x50] sm:$0xff]
    %v77 = vld [vmem:[#allocation5 + $0x58] sm:$0xff]
    %v78 = vld [vmem:[#allocation5 + $0x60] sm:$0xff]
    %v79 = vld [vmem:[#allocation5 + $0x68] sm:$0xff]
    %v80 = vld [vmem:[#allocation5 + $0x70] sm:$0xff]
    %v81 = vld [vmem:[#allocation5 + $0x78] sm:$0xff]
    %v82 = vld [vmem:[#allocation5 + $0x80] sm:$0xff]
    %v83 = vld [vmem:[#allocation5 + $0x88] sm:$0xff]
    %v84 = vld [vmem:[#allocation5 + $0x90] sm:$0xff]
    %v85 = vld [vmem:[#allocation5 + $0x98] sm:$0xff]
    %v86 = vld [vmem:[#allocation5 + $0xa0] sm:$0xff]
    %v87 = vld [vmem:[#allocation5 + $0xa8] sm:$0xff]
    %v88 = vld [vmem:[#allocation5 + $0xb0] sm:$0xff]
    %v89 = vld [vmem:[#allocation5 + $0xb8] sm:$0xff]
    %v90 = vld [vmem:[#allocation5 + $0xc0] sm:$0xff]
    %v91 = vld [vmem:[#allocation5 + $0xc8] sm:$0xff]
    %v92 = vld [vmem:[#allocation5 + $0xd0] sm:$0xff]
    %v93 = vld [vmem:[#allocation5 + $0xd8] sm:$0xff]
    %v94 = vld [vmem:[#allocation5 + $0xe0] sm:$0xff]
    %v95 = vld [vmem:[#allocation5 + $0xe8] sm:$0xff]
    %v96 = vld [vmem:[#allocation5 + $0xf0] sm:$0xff]
    %v97 = vld [vmem:[#allocation5 + $0xf8] sm:$0xff]
    %v98 = vld [vmem:[#allocation5 + $0x100] sm:$0xff]
    %v99 = vld [vmem:[#allocation5 + $0x108] sm:$0xff]
    %v100 = vld [vmem:[#allocation5 + $0x110] sm:$0xff]
    %v101 = vld [vmem:[#allocation5 + $0x118] sm:$0xff]
    %v102 = vld [vmem:[#allocation5 + $0x120] sm:$0xff]
    %v103 = vld [vmem:[#allocation5 + $0x128] sm:$0xff]
    %v104 = vld [vmem:[#allocation5 + $0x130] sm:$0xff]
    %v105 = vld [vmem:[#allocation5 + $0x138] sm:$0xff]
    %v106 = vld [vmem:[#allocation5 + $0x140] sm:$0xff]
    %v107 = vld [vmem:[#allocation5 + $0x148] sm:$0xff]
    %v108 = vld [vmem:[#allocation5 + $0x150] sm:$0xff]
    %v109 = vld [vmem:[#allocation5 + $0x158] sm:$0xff]
    %v110 = vld [vmem:[#allocation5 + $0x160] sm:$0xff]
    %v111 = vld [vmem:[#allocation5 + $0x168] sm:$0xff]
    %v112 = vld [vmem:[#allocation5 + $0x170] sm:$0xff]
    %v113 = vld [vmem:[#allocation5 + $0x178] sm:$0xff]
    %v114 = vld [vmem:[#allocation5 + $0x180] sm:$0xff]
    %v115 = vld [vmem:[#allocation5 + $0x188] sm:$0xff]
    %v116 = vld [vmem:[#allocation5 + $0x190] sm:$0xff]
    %v117 = vld [vmem:[#allocation5 + $0x198] sm:$0xff]
    %v118 = vld [vmem:[#allocation5 + $0x1a0] sm:$0xff]
    %v119 = vld [vmem:[#allocation5 + $0x1a8] sm:$0xff]
    %v120 = vld [vmem:[#allocation5 + $0x1b0] sm:$0xff]
    %v121 = vld [vmem:[#allocation5 + $0x1b8] sm:$0xff]
    %v122 = vld [vmem:[#allocation5 + $0x1c0] sm:$0xff]
    %v123 = vld [vmem:[#allocation5 + $0x1c8] sm:$0xff]
    %v124 = vld [vmem:[#allocation5 + $0x1d0] sm:$0xff]
    %v125 = vld [vmem:[#allocation5 + $0x1d8] sm:$0xff]
    %v126 = vld [vmem:[#allocation5 + $0x1e0] sm:$0xff]
    %v127 = vld [vmem:[#allocation5 + $0x1e8] sm:$0xff]
    %v128 = vld [vmem:[#allocation5 + $0x1f0] sm:$0xff]
    %v129 = vld [vmem:[#allocation5 + $0x1f8] sm:$0xff]
    %v130 = vld [vmem:[#allocation5 + $0x200] sm:$0xff]
    %v131 = vld [vmem:[#allocation5 + $0x208] sm:$0xff]
    %v132 = vld [vmem:[#allocation5 + $0x210] sm:$0xff]
    %v133 = vld [vmem:[#allocation5 + $0x218] sm:$0xff]
    %v134 = vld [vmem:[#allocation5 + $0x220] sm:$0xff]
    %v135 = vld [vmem:[#allocation5 + $0x228] sm:$0xff]
    %v136 = vld [vmem:[#allocation5 + $0x230] sm:$0xff]
    %v137 = vld [vmem:[#allocation5 + $0x238] sm:$0xff]
    %v138 = vld [vmem:[#allocation5 + $0x240] sm:$0xff]
    %v139 = vld [vmem:[#allocation5 + $0x248] sm:$0xff]
    %v140 = vld [vmem:[#allocation5 + $0x250] sm:$0xff]
    %v141 = vld [vmem:[#allocation5 + $0x258] sm:$0xff]
    %v142 = vld [vmem:[#allocation5 + $0x260] sm:$0xff]
    %v143 = vld [vmem:[#allocation5 + $0x268] sm:$0xff]
    %v144 = vld [vmem:[#allocation5 + $0x270] sm:$0xff]
    %v145 = vld [vmem:[#allocation5 + $0x278] sm:$0xff]
    %v146 = vld [vmem:[#allocation5 + $0x280] sm:$0xff]
    %v147 = vld [vmem:[#allocation5 + $0x288] sm:$0xff]
    %v148 = vld [vmem:[#allocation5 + $0x290] sm:$0xff]
    %v149 = vld [vmem:[#allocation5 + $0x298] sm:$0xff]
    %v150 = vld [vmem:[#allocation5 + $0x2a0] sm:$0xff]
    %v151 = vld [vmem:[#allocation5 + $0x2a8] sm:$0xff]
    %v152 = vld [vmem:[#allocation5 + $0x2b0] sm:$0xff]
    %v153 = vld [vmem:[#allocation5 + $0x2b8] sm:$0xff]
    %v154 = vld [vmem:[#allocation5 + $0x2c0] sm:$0xff]
    %v155 = vld [vmem:[#allocation5 + $0x2c8] sm:$0xff]
    %v156 = vld [vmem:[#allocation5 + $0x2d0] sm:$0xff]
    %v157 = vld [vmem:[#allocation5 + $0x2d8] sm:$0xff]
    %v158 = vld [vmem:[#allocation5 + $0x2e0] sm:$0xff]
    %v159 = vld [vmem:[#allocation5 + $0x2e8] sm:$0xff]
    %v160 = vld [vmem:[#allocation5 + $0x2f0] sm:$0xff]
    %v161 = vld [vmem:[#allocation5 + $0x2f8] sm:$0xff]
    %v162 = vld [vmem:[#allocation5 + $0x300] sm:$0xff]
    %v163 = vld [vmem:[#allocation5 + $0x308] sm:$0xff]
    %v164 = vld [vmem:[#allocation5 + $0x310] sm:$0xff]
    %v165 = vld [vmem:[#allocation5 + $0x318] sm:$0xff]
    %v166 = vld [vmem:[#allocation5 + $0x320] sm:$0xff]
    %v167 = vld [vmem:[#allocation5 + $0x328] sm:$0xff]
    %v168 = vld [vmem:[#allocation5 + $0x330] sm:$0xff]
    %v169 = vld [vmem:[#allocation5 + $0x338] sm:$0xff]
    %v170 = vld [vmem:[#allocation5 + $0x340] sm:$0xff]
    %v171 = vld [vmem:[#allocation5 + $0x348] sm:$0xff]
    %v172 = vld [vmem:[#allocation5 + $0x350] sm:$0xff]
    %v173 = vld [vmem:[#allocation5 + $0x358] sm:$0xff]
    %v174 = vld [vmem:[#allocation5 + $0x360] sm:$0xff]
    %v175 = vld [vmem:[#allocation5 + $0x368] sm:$0xff]
    %v176 = vld [vmem:[#allocation5 + $0x370] sm:$0xff]
    %v177 = vld [vmem:[#allocation5 + $0x378] sm:$0xff]
    %v178 = vld [vmem:[#allocation5 + $0x380] sm:$0xff]
    %v179 = vld [vmem:[#allocation5 + $0x388] sm:$0xff]
    %v180 = vld [vmem:[#allocation5 + $0x390] sm:$0xff]
    %v181 = vld [vmem:[#allocation5 + $0x398] sm:$0xff]
    %v182 = vld [vmem:[#allocation5 + $0x3a0] sm:$0xff]
    %v183 = vld [vmem:[#allocation5 + $0x3a8] sm:$0xff]
    %v184 = vld [vmem:[#allocation5 + $0x3b0] sm:$0xff]
    %v185 = vld [vmem:[#allocation5 + $0x3b8] sm:$0xff]
    %v186 = vld [vmem:[#allocation5 + $0x3c0] sm:$0xff]
    %v187 = vld [vmem:[#allocation5 + $0x3c8] sm:$0xff]
    %v188 = vld [vmem:[#allocation5 + $0x3d0] sm:$0xff]
    %v189 = vld [vmem:[#allocation5 + $0x3d8] sm:$0xff]
    %v190 = vld [vmem:[#allocation5 + $0x3e0] sm:$0xff]
    %v191 = vld [vmem:[#allocation5 + $0x3e8] sm:$0xff]
    %v192 = vld [vmem:[#allocation5 + $0x3f0] sm:$0xff]
    %v193 = vld [vmem:[#allocation5 + $0x3f8] sm:$0xff]
    %v194 = vld [vmem:[#allocation5 + $0x400] sm:$0xff]
    %v195 = vld [vmem:[#allocation5 + $0x408] sm:$0xff]
    %v196 = vld [vmem:[#allocation5 + $0x410] sm:$0xff]
    %v197 = vld [vmem:[#allocation5 + $0x418] sm:$0xff]
    %v198 = vld [vmem:[#allocation5 + $0x420] sm:$0xff]
    %v199 = vld [vmem:[#allocation5 + $0x428] sm:$0xff]
    %v200 = vld [vmem:[#allocation5 + $0x430] sm:$0xff]
    %v201 = vld [vmem:[#allocation5 + $0x438] sm:$0xff]
    %v202 = vld [vmem:[#allocation5 + $0x440] sm:$0xff]
    %v203 = vld [vmem:[#allocation5 + $0x448] sm:$0xff]
    %v204 = vld [vmem:[#allocation5 + $0x450] sm:$0xff]
    %v205 = vld [vmem:[#allocation5 + $0x458] sm:$0xff]
    %v206 = vld [vmem:[#allocation5 + $0x460] sm:$0xff]
    %v207 = vld [vmem:[#allocation5 + $0x468] sm:$0xff]
    %v208 = vld [vmem:[#allocation5 + $0x470] sm:$0xff]
    %v209 = vld [vmem:[#allocation5 + $0x478] sm:$0xff]
    %v210 = vld [vmem:[#allocation5 + $0x480] sm:$0xff]
    %v211 = vld [vmem:[#allocation5 + $0x488] sm:$0xff]
    %v212 = vld [vmem:[#allocation5 + $0x490] sm:$0xff]
    %v213 = vld [vmem:[#allocation5 + $0x498] sm:$0xff]
    %v214 = vld [vmem:[#allocation5 + $0x4a0] sm:$0xff]
    %v215 = vld [vmem:[#allocation5 + $0x4a8] sm:$0xff]
    %v216 = vld [vmem:[#allocation5 + $0x4b0] sm:$0xff]
    %v217 = vld [vmem:[#allocation5 + $0x4b8] sm:$0xff]
    %v218 = vld [vmem:[#allocation5 + $0x4c0] sm:$0xff]
    %v219 = vld [vmem:[#allocation5 + $0x4c8] sm:$0xff]
    %v220 = vld [vmem:[#allocation5 + $0x4d0] sm:$0xff]
    %v221 = vld [vmem:[#allocation5 + $0x4d8] sm:$0xff]
    %v222 = vld [vmem:[#allocation5 + $0x4e0] sm:$0xff]
    %v223 = vld [vmem:[#allocation5 + $0x4e8] sm:$0xff]
    %v224 = vld [vmem:[#allocation5 + $0x4f0] sm:$0xff]
    %v225 = vld [vmem:[#allocation5 + $0x4f8] sm:$0xff]
    %v226 = vld [vmem:[#allocation5 + $0x500] sm:$0xff]
    %v227 = vld [vmem:[#allocation5 + $0x508] sm:$0xff]
    %v228 = vld [vmem:[#allocation5 + $0x510] sm:$0xff]
    %v229 = vld [vmem:[#allocation5 + $0x518] sm:$0xff]
    %v230 = vld [vmem:[#allocation5 + $0x520] sm:$0xff]
    %v231 = vld [vmem:[#allocation5 + $0x528] sm:$0xff]
    %v232 = vld [vmem:[#allocation5 + $0x530] sm:$0xff]
    %v233 = vld [vmem:[#allocation5 + $0x538] sm:$0xff]
    %v234 = vld [vmem:[#allocation5 + $0x540] sm:$0xff]
    %v235 = vld [vmem:[#allocation5 + $0x548] sm:$0xff]
    %v236 = vld [vmem:[#allocation5 + $0x550] sm:$0xff]
    %v237 = vld [vmem:[#allocation5 + $0x558] sm:$0xff]
    %v238 = vld [vmem:[#allocation5 + $0x560] sm:$0xff]
    %v239 = vld [vmem:[#allocation5 + $0x568] sm:$0xff]
    %v240 = vld [vmem:[#allocation5 + $0x570] sm:$0xff]
    %v241 = vld [vmem:[#allocation5 + $0x578] sm:$0xff]
    %v242 = vld [vmem:[#allocation5 + $0x580] sm:$0xff]
    %v243 = vld [vmem:[#allocation5 + $0x588] sm:$0xff]
    %v244 = vld [vmem:[#allocation5 + $0x590] sm:$0xff]
    %v245 = vld [vmem:[#allocation5 + $0x598] sm:$0xff]
    %v246 = vld [vmem:[#allocation5 + $0x5a0] sm:$0xff]
    %v247 = vld [vmem:[#allocation5 + $0x5a8] sm:$0xff]
    %v248 = vld [vmem:[#allocation5 + $0x5b0] sm:$0xff]
    %v249 = vld [vmem:[#allocation5 + $0x5b8] sm:$0xff]
    %v250 = vld [vmem:[#allocation5 + $0x5c0] sm:$0xff]
    %v251 = vld [vmem:[#allocation5 + $0x5c8] sm:$0xff]
    %v252 = vld [vmem:[#allocation5 + $0x5d0] sm:$0xff]
    %v253 = vld [vmem:[#allocation5 + $0x5d8] sm:$0xff]
    %v254 = vld [vmem:[#allocation5 + $0x5e0] sm:$0xff]
    %v255 = vld [vmem:[#allocation5 + $0x5e8] sm:$0xff]
    %v256 = vld [vmem:[#allocation5 + $0x5f0] sm:$0xff]
    %v257 = vld [vmem:[#allocation5 + $0x5f8] sm:$0xff]
    %v258 = vld [vmem:[#allocation5 + $0x600] sm:$0xff]
    %v259 = vld [vmem:[#allocation5 + $0x608] sm:$0xff]
    %v260 = vld [vmem:[#allocation5 + $0x610] sm:$0xff]
    %v261 = vld [vmem:[#allocation5 + $0x618] sm:$0xff]
    %v262 = vld [vmem:[#allocation5 + $0x620] sm:$0xff]
    %v263 = vld [vmem:[#allocation5 + $0x628] sm:$0xff]
    %v264 = vld [vmem:[#allocation5 + $0x630] sm:$0xff]
    %v265 = vld [vmem:[#allocation5 + $0x638] sm:$0xff]
    %v266 = vld [vmem:[#allocation5 + $0x640] sm:$0xff]
    %v267 = vld [vmem:[#allocation5 + $0x648] sm:$0xff]
    %v268 = vld [vmem:[#allocation5 + $0x650] sm:$0xff]
    %v269 = vld [vmem:[#allocation5 + $0x658] sm:$0xff]
    %v270 = vld [vmem:[#allocation5 + $0x660] sm:$0xff]
    %v271 = vld [vmem:[#allocation5 + $0x668] sm:$0xff]
    %v272 = vld [vmem:[#allocation5 + $0x670] sm:$0xff]
    %v273 = vld [vmem:[#allocation5 + $0x678] sm:$0xff]
    %v274 = vld [vmem:[#allocation5 + $0x680] sm:$0xff]
    %v275 = vld [vmem:[#allocation5 + $0x688] sm:$0xff]
    %v276 = vld [vmem:[#allocation5 + $0x690] sm:$0xff]
    %v277 = vld [vmem:[#allocation5 + $0x698] sm:$0xff]
    %v278 = vld [vmem:[#allocation5 + $0x6a0] sm:$0xff]
    %v279 = vld [vmem:[#allocation5 + $0x6a8] sm:$0xff]
    %v280 = vld [vmem:[#allocation5 + $0x6b0] sm:$0xff]
    %v281 = vld [vmem:[#allocation5 + $0x6b8] sm:$0xff]
    %v282 = vld [vmem:[#allocation5 + $0x6c0] sm:$0xff]
    %v283 = vld [vmem:[#allocation5 + $0x6c8] sm:$0xff]
    %v284 = vld [vmem:[#allocation5 + $0x6d0] sm:$0xff]
    %v285 = vld [vmem:[#allocation5 + $0x6d8] sm:$0xff]
    %v286 = vld [vmem:[#allocation5 + $0x6e0] sm:$0xff]
    %v287 = vld [vmem:[#allocation5 + $0x6e8] sm:$0xff]
    %v288 = vld [vmem:[#allocation5 + $0x6f0] sm:$0xff]
    %v289 = vld [vmem:[#allocation5 + $0x6f8] sm:$0xff]
    %v290 = vld [vmem:[#allocation5 + $0x700] sm:$0xff]
    %v291 = vld [vmem:[#allocation5 + $0x708] sm:$0xff]
    %v292 = vld [vmem:[#allocation5 + $0x710] sm:$0xff]
    %v293 = vld [vmem:[#allocation5 + $0x718] sm:$0xff]
    %v294 = vld [vmem:[#allocation5 + $0x720] sm:$0xff]
    %v295 = vld [vmem:[#allocation5 + $0x728] sm:$0xff]
    %v296 = vld [vmem:[#allocation5 + $0x730] sm:$0xff]
    %v297 = vld [vmem:[#allocation5 + $0x738] sm:$0xff]
    %v298 = vld [vmem:[#allocation5 + $0x740] sm:$0xff]
    %v299 = vld [vmem:[#allocation5 + $0x748] sm:$0xff]
    %v300 = vld [vmem:[#allocation5 + $0x750] sm:$0xff]
    %v301 = vld [vmem:[#allocation5 + $0x758] sm:$0xff]
    %v302 = vld [vmem:[#allocation5 + $0x760] sm:$0xff]
    %v303 = vld [vmem:[#allocation5 + $0x768] sm:$0xff]
    %v304 = vld [vmem:[#allocation5 + $0x770] sm:$0xff]
    %v305 = vld [vmem:[#allocation5 + $0x778] sm:$0xff]
    %v306 = vld [vmem:[#allocation5 + $0x780] sm:$0xff]
    %v307 = vld [vmem:[#allocation5 + $0x788] sm:$0xff]
    %v308 = vld [vmem:[#allocation5 + $0x790] sm:$0xff]
    %v309 = vld [vmem:[#allocation5 + $0x798] sm:$0xff]
    %v310 = vld [vmem:[#allocation5 + $0x7a0] sm:$0xff]
    %v311 = vld [vmem:[#allocation5 + $0x7a8] sm:$0xff]
    %v312 = vld [vmem:[#allocation5 + $0x7b0] sm:$0xff]
    %v313 = vld [vmem:[#allocation5 + $0x7b8] sm:$0xff]
    %v314 = vld [vmem:[#allocation5 + $0x7c0] sm:$0xff]
    %v315 = vld [vmem:[#allocation5 + $0x7c8] sm:$0xff]
    %v316 = vld [vmem:[#allocation5 + $0x7d0] sm:$0xff]
    %v317 = vld [vmem:[#allocation5 + $0x7d8] sm:$0xff]
    %v318 = vld [vmem:[#allocation5 + $0x7e0] sm:$0xff]
    %v319 = vld [vmem:[#allocation5 + $0x7e8] sm:$0xff]
    %v320 = vld [vmem:[#allocation5 + $0x7f0] sm:$0xff]
    %v321 = vld [vmem:[#allocation5 + $0x7f8] sm:$0xff]
    %v322 = vld [vmem:[#allocation5 + $0x800] sm:$0xff]
    %v323 = vld [vmem:[#allocation5 + $0x808] sm:$0xff]
    %v324 = vld [vmem:[#allocation5 + $0x810] sm:$0xff]
    %v325 = vld [vmem:[#allocation5 + $0x818] sm:$0xff]
    %v326 = vld [vmem:[#allocation5 + $0x820] sm:$0xff]
    %v327 = vld [vmem:[#allocation5 + $0x828] sm:$0xff]
    %v328 = vld [vmem:[#allocation5 + $0x830] sm:$0xff]
    %v329 = vld [vmem:[#allocation5 + $0x838] sm:$0xff]
    %v330 = vld [vmem:[#allocation5 + $0x840] sm:$0xff]
    %v331 = vld [vmem:[#allocation5 + $0x848] sm:$0xff]
    %v332 = vld [vmem:[#allocation5 + $0x850] sm:$0xff]
    %v333 = vld [vmem:[#allocation5 + $0x858] sm:$0xff]
    %v334 = vld [vmem:[#allocation5 + $0x860] sm:$0xff]
    %v335 = vld [vmem:[#allocation5 + $0x868] sm:$0xff]
    %v336 = vld [vmem:[#allocation5 + $0x870] sm:$0xff]
    %v337 = vld [vmem:[#allocation5 + $0x878] sm:$0xff]
    %v338 = vld [vmem:[#allocation5 + $0x880] sm:$0xff]
    %v339 = vld [vmem:[#allocation5 + $0x888] sm:$0xff]
    %v340 = vld [vmem:[#allocation5 + $0x890] sm:$0xff]
    %v341 = vld [vmem:[#allocation5 + $0x898] sm:$0xff]
    %v342 = vld [vmem:[#allocation5 + $0x8a0] sm:$0xff]
    %v343 = vld [vmem:[#allocation5 + $0x8a8] sm:$0xff]
    %v344 = vld [vmem:[#allocation5 + $0x8b0] sm:$0xff]
    %v345 = vld [vmem:[#allocation5 + $0x8b8] sm:$0xff]
    %v346 = vld [vmem:[#allocation5 + $0x8c0] sm:$0xff]
    %v347 = vld [vmem:[#allocation5 + $0x8c8] sm:$0xff]
    %v348 = vld [vmem:[#allocation5 + $0x8d0] sm:$0xff]
    %v349 = vld [vmem:[#allocation5 + $0x8d8] sm:$0xff]
    %v350 = vld [vmem:[#allocation5 + $0x8e0] sm:$0xff]
    %v351 = vld [vmem:[#allocation5 + $0x8e8] sm:$0xff]
    %v352 = vld [vmem:[#allocation5 + $0x8f0] sm:$0xff]
    %v353 = vld [vmem:[#allocation5 + $0x8f8] sm:$0xff]
    %v354 = vld [vmem:[#allocation5 + $0x900] sm:$0xff]
    %v355 = vld [vmem:[#allocation5 + $0x908] sm:$0xff]
    %v356 = vld [vmem:[#allocation5 + $0x910] sm:$0xff]
    %v357 = vld [vmem:[#allocation5 + $0x918] sm:$0xff]
    %v358 = vld [vmem:[#allocation5 + $0x920] sm:$0xff]
    %v359 = vld [vmem:[#allocation5 + $0x928] sm:$0xff]
    %v360 = vld [vmem:[#allocation5 + $0x930] sm:$0xff]
    %v361 = vld [vmem:[#allocation5 + $0x938] sm:$0xff]
    %v362 = vld [vmem:[#allocation5 + $0x940] sm:$0xff]
    %v363 = vld [vmem:[#allocation5 + $0x948] sm:$0xff]
    %v364 = vld [vmem:[#allocation5 + $0x950] sm:$0xff]
    %v365 = vld [vmem:[#allocation5 + $0x958] sm:$0xff]
    %v366 = vld [vmem:[#allocation5 + $0x960] sm:$0xff]
    %v367 = vld [vmem:[#allocation5 + $0x968] sm:$0xff]
    %v368 = vld [vmem:[#allocation5 + $0x970] sm:$0xff]
    %v369 = vld [vmem:[#allocation5 + $0x978] sm:$0xff]
    %v370 = vld [vmem:[#allocation5 + $0x980] sm:$0xff]
    %v371 = vld [vmem:[#allocation5 + $0x988] sm:$0xff]
    %v372 = vld [vmem:[#allocation5 + $0x990] sm:$0xff]
    %v373 = vld [vmem:[#allocation5 + $0x998] sm:$0xff]
    %v374 = vld [vmem:[#allocation5 + $0x9a0] sm:$0xff]
    %v375 = vld [vmem:[#allocation5 + $0x9a8] sm:$0xff]
    %v376 = vld [vmem:[#allocation5 + $0x9b0] sm:$0xff]
    %v377 = vld [vmem:[#allocation5 + $0x9b8] sm:$0xff]
    %v378 = vld [vmem:[#allocation5 + $0x9c0] sm:$0xff]
    %v379 = vld [vmem:[#allocation5 + $0x9c8] sm:$0xff]
    %v380 = vld [vmem:[#allocation5 + $0x9d0] sm:$0xff]
    %v381 = vld [vmem:[#allocation5 + $0x9d8] sm:$0xff]
    %v382 = vld [vmem:[#allocation5 + $0x9e0] sm:$0xff]
    %v383 = vld [vmem:[#allocation5 + $0x9e8] sm:$0xff]
    %v384 = vld [vmem:[#allocation5 + $0x9f0] sm:$0xff]
    %v385 = vld [vmem:[#allocation5 + $0x9f8] sm:$0xff]
    %v386 = vld [vmem:[#allocation5 + $0xa00] sm:$0xff]
    %v387 = vld [vmem:[#allocation5 + $0xa08] sm:$0xff]
    %v388 = vld [vmem:[#allocation5 + $0xa10] sm:$0xff]
    %v389 = vld [vmem:[#allocation5 + $0xa18] sm:$0xff]
    %v390 = vld [vmem:[#allocation5 + $0xa20] sm:$0xff]
    %v391 = vld [vmem:[#allocation5 + $0xa28] sm:$0xff]
    %v392 = vld [vmem:[#allocation5 + $0xa30] sm:$0xff]
    %v393 = vld [vmem:[#allocation5 + $0xa38] sm:$0xff]
    %v394 = vld [vmem:[#allocation5 + $0xa40] sm:$0xff]
    %v395 = vld [vmem:[#allocation5 + $0xa48] sm:$0xff]
    %v396 = vld [vmem:[#allocation5 + $0xa50] sm:$0xff]
    %v397 = vld [vmem:[#allocation5 + $0xa58] sm:$0xff]
    %v398 = vld [vmem:[#allocation5 + $0xa60] sm:$0xff]
    %v399 = vld [vmem:[#allocation5 + $0xa68] sm:$0xff]
    %v400 = vld [vmem:[#allocation5 + $0xa70] sm:$0xff]
    %v401 = vld [vmem:[#allocation5 + $0xa78] sm:$0xff]
    %v402 = vld [vmem:[#allocation5 + $0xa80] sm:$0xff]
    %v403 = vld [vmem:[#allocation5 + $0xa88] sm:$0xff]
    %v404 = vld [vmem:[#allocation5 + $0xa90] sm:$0xff]
    %v405 = vld [vmem:[#allocation5 + $0xa98] sm:$0xff]
    %v406 = vld [vmem:[#allocation5 + $0xaa0] sm:$0xff]
    %v407 = vld [vmem:[#allocation5 + $0xaa8] sm:$0xff]
    %v408 = vld [vmem:[#allocation5 + $0xab0] sm:$0xff]
    %v409 = vld [vmem:[#allocation5 + $0xab8] sm:$0xff]
    %v410 = vld [vmem:[#allocation5 + $0xac0] sm:$0xff]
    %v411 = vld [vmem:[#allocation5 + $0xac8] sm:$0xff]
    %v412 = vld [vmem:[#allocation5 + $0xad0] sm:$0xff]
    %v413 = vld [vmem:[#allocation5 + $0xad8] sm:$0xff]
    %v414 = vld [vmem:[#allocation5 + $0xae0] sm:$0xff]
    %v415 = vld [vmem:[#allocation5 + $0xae8] sm:$0xff]
    %v416 = vld [vmem:[#allocation5 + $0xaf0] sm:$0xff]
    %v417 = vld [vmem:[#allocation5 + $0xaf8] sm:$0xff]
    %v418 = vld [vmem:[#allocation5 + $0xb00] sm:$0xff]
    %v419 = vld [vmem:[#allocation5 + $0xb08] sm:$0xff]
    %v420 = vld [vmem:[#allocation5 + $0xb10] sm:$0xff]
    %v421 = vld [vmem:[#allocation5 + $0xb18] sm:$0xff]
    %v422 = vld [vmem:[#allocation5 + $0xb20] sm:$0xff]
    %v423 = vld [vmem:[#allocation5 + $0xb28] sm:$0xff]
    %v424 = vld [vmem:[#allocation5 + $0xb30] sm:$0xff]
    %v425 = vld [vmem:[#allocation5 + $0xb38] sm:$0xff]
    %v426 = vld [vmem:[#allocation5 + $0xb40] sm:$0xff]
    %v427 = vld [vmem:[#allocation5 + $0xb48] sm:$0xff]
    %v428 = vld [vmem:[#allocation5 + $0xb50] sm:$0xff]
    %v429 = vld [vmem:[#allocation5 + $0xb58] sm:$0xff]
    %v430 = vld [vmem:[#allocation5 + $0xb60] sm:$0xff]
    %v431 = vld [vmem:[#allocation5 + $0xb68] sm:$0xff]
    %v432 = vld [vmem:[#allocation5 + $0xb70] sm:$0xff]
    %v433 = vld [vmem:[#allocation5 + $0xb78] sm:$0xff]
    %v434 = vld [vmem:[#allocation5 + $0xb80] sm:$0xff]
    %v435 = vld [vmem:[#allocation5 + $0xb88] sm:$0xff]
    %v436 = vld [vmem:[#allocation5 + $0xb90] sm:$0xff]
    %v437 = vld [vmem:[#allocation5 + $0xb98] sm:$0xff]
    %v438 = vld [vmem:[#allocation5 + $0xba0] sm:$0xff]
    %v439 = vld [vmem:[#allocation5 + $0xba8] sm:$0xff]
    %v440 = vld [vmem:[#allocation5 + $0xbb0] sm:$0xff]
    %v441 = vld [vmem:[#allocation5 + $0xbb8] sm:$0xff]
    %v442 = vld [vmem:[#allocation5 + $0xbc0] sm:$0xff]
    %v443 = vld [vmem:[#allocation5 + $0xbc8] sm:$0xff]
    %v444 = vld [vmem:[#allocation5 + $0xbd0] sm:$0xff]
    %v445 = vld [vmem:[#allocation5 + $0xbd8] sm:$0xff]
    %v446 = vld [vmem:[#allocation5 + $0xbe0] sm:$0xff]
    %v447 = vld [vmem:[#allocation5 + $0xbe8] sm:$0xff]
    %v448 = vld [vmem:[#allocation5 + $0xbf0] sm:$0xff]
    %v449 = vld [vmem:[#allocation5 + $0xbf8] sm:$0xff]
    %v450 = vld [vmem:[#allocation7] sm:$0xff]
    %v452 = vlaneseq
    %v453 = vshrl.u32 %v452, 7
    %v454 = vsub.s32 0, %v453
    %v455 = vrot.slane %v450, %v454
    %v456 = vlaneseq
    %v457 = vshrl.u32 %v456, 7
    %v458 = vsub.s32 1, %v457
    %v459 = vrot.slane %v450, %v458
    %v460 = vlaneseq
    %v461 = vshrl.u32 %v460, 7
    %v462 = vsub.s32 2, %v461
    %v463 = vrot.slane %v450, %v462
    %v464 = vlaneseq
    %v465 = vshrl.u32 %v464, 7
    %v466 = vsub.s32 3, %v465
    %v467 = vrot.slane %v450, %v466
    %v468 = vlaneseq
    %v469 = vshrl.u32 %v468, 7
    %v470 = vsub.s32 4, %v469
    %v471 = vrot.slane %v450, %v470
    %v472 = vlaneseq
    %v473 = vshrl.u32 %v472, 7
    %v474 = vsub.s32 5, %v473
    %v475 = vrot.slane %v450, %v474
    %v476 = vlaneseq
    %v477 = vshrl.u32 %v476, 7
    %v478 = vsub.s32 6, %v477
    %v479 = vrot.slane %v450, %v478
    %v480 = vlaneseq
    %v481 = vshrl.u32 %v480, 7
    %v482 = vsub.s32 7, %v481
    %v483 = vrot.slane %v450, %v482
    %v504 = vunpack.c.l.b16 %v54
    %v505 = vunpack.c.h.b16 %v54
    %v506 = vunpack.c.l.b16 %v55
    %v507 = vunpack.c.h.b16 %v55
    %v508 = vunpack.c.l.b16 %v56
    %v509 = vunpack.c.h.b16 %v56
    %v510 = vunpack.c.l.b16 %v57
    %v511 = vunpack.c.h.b16 %v57
    %v512 = vunpack.c.l.b16 %v58
    %v513 = vunpack.c.h.b16 %v58
    %v514 = vunpack.c.l.b16 %v59
    %v515 = vunpack.c.h.b16 %v59
    %v516 = vunpack.c.l.b16 %v60
    %v517 = vunpack.c.h.b16 %v60
    %v518 = vunpack.c.l.b16 %v61
    %v519 = vunpack.c.h.b16 %v61
    %v520 = vunpack.c.l.b16 %v62
    %v521 = vunpack.c.h.b16 %v62
    %v522 = vunpack.c.l.b16 %v63
    %v523 = vunpack.c.h.b16 %v63
    %v524 = vunpack.c.l.b16 %v64
    %v525 = vunpack.c.h.b16 %v64
    %v526 = vunpack.c.l.b16 %v65
    %v527 = vunpack.c.h.b16 %v65
    %v528 = vpack.c.b16 %v510, %v504
    %v529 = vpack.c.b16 %v511, %v505
    %v530 = vpack.c.b16 %v512, %v506
    %v531 = vpack.c.b16 %v513, %v507
    %v532 = vpack.c.b16 %v514, %v508
    %v533 = vpack.c.b16 %v515, %v509
    %v534 = vpack.c.b16 %v522, %v516
    %v535 = vpack.c.b16 %v523, %v517
    %v536 = vpack.c.b16 %v524, %v518
    %v537 = vpack.c.b16 %v525, %v519
    %v538 = vpack.c.b16 %v526, %v520
    %v539 = vpack.c.b16 %v527, %v521
    %v936 = vunpack.c.l.b16 %v66
    %v937 = vunpack.c.h.b16 %v66
    %v938 = vunpack.c.l.b16 %v67
    %v939 = vunpack.c.h.b16 %v67
    %v940 = vunpack.c.l.b16 %v68
    %v941 = vunpack.c.h.b16 %v68
    %v942 = vunpack.c.l.b16 %v69
    %v943 = vunpack.c.h.b16 %v69
    %v944 = vunpack.c.l.b16 %v70
    %v945 = vunpack.c.h.b16 %v70
    %v946 = vunpack.c.l.b16 %v71
    %v947 = vunpack.c.h.b16 %v71
    %v948 = vunpack.c.l.b16 %v72
    %v949 = vunpack.c.h.b16 %v72
    %v950 = vunpack.c.l.b16 %v73
    %v951 = vunpack.c.h.b16 %v73
    %v952 = vunpack.c.l.b16 %v74
    %v953 = vunpack.c.h.b16 %v74
    %v954 = vunpack.c.l.b16 %v75
    %v955 = vunpack.c.h.b16 %v75
    %v956 = vunpack.c.l.b16 %v76
    %v957 = vunpack.c.h.b16 %v76
    %v958 = vunpack.c.l.b16 %v77
    %v959 = vunpack.c.h.b16 %v77
    %v960 = vunpack.c.l.b16 %v78
    %v961 = vunpack.c.h.b16 %v78
    %v962 = vunpack.c.l.b16 %v79
    %v963 = vunpack.c.h.b16 %v79
    %v964 = vunpack.c.l.b16 %v80
    %v965 = vunpack.c.h.b16 %v80
    %v966 = vunpack.c.l.b16 %v81
    %v967 = vunpack.c.h.b16 %v81
    %v968 = vunpack.c.l.b16 %v82
    %v969 = vunpack.c.h.b16 %v82
    %v970 = vunpack.c.l.b16 %v83
    %v971 = vunpack.c.h.b16 %v83
    %v972 = vunpack.c.l.b16 %v84
    %v973 = vunpack.c.h.b16 %v84
    %v974 = vunpack.c.l.b16 %v85
    %v975 = vunpack.c.h.b16 %v85
    %v976 = vunpack.c.l.b16 %v86
    %v977 = vunpack.c.h.b16 %v86
    %v978 = vunpack.c.l.b16 %v87
    %v979 = vunpack.c.h.b16 %v87
    %v980 = vunpack.c.l.b16 %v88
    %v981 = vunpack.c.h.b16 %v88
    %v982 = vunpack.c.l.b16 %v89
    %v983 = vunpack.c.h.b16 %v89
    %v984 = vunpack.c.l.b16 %v90
    %v985 = vunpack.c.h.b16 %v90
    %v986 = vunpack.c.l.b16 %v91
    %v987 = vunpack.c.h.b16 %v91
    %v988 = vunpack.c.l.b16 %v92
    %v989 = vunpack.c.h.b16 %v92
    %v990 = vunpack.c.l.b16 %v93
    %v991 = vunpack.c.h.b16 %v93
    %v992 = vunpack.c.l.b16 %v94
    %v993 = vunpack.c.h.b16 %v94
    %v994 = vunpack.c.l.b16 %v95
    %v995 = vunpack.c.h.b16 %v95
    %v996 = vunpack.c.l.b16 %v96
    %v997 = vunpack.c.h.b16 %v96
    %v998 = vunpack.c.l.b16 %v97
    %v999 = vunpack.c.h.b16 %v97
    %v1000 = vunpack.c.l.b16 %v98
    %v1001 = vunpack.c.h.b16 %v98
    %v1002 = vunpack.c.l.b16 %v99
    %v1003 = vunpack.c.h.b16 %v99
    %v1004 = vunpack.c.l.b16 %v100
    %v1005 = vunpack.c.h.b16 %v100
    %v1006 = vunpack.c.l.b16 %v101
    %v1007 = vunpack.c.h.b16 %v101
    %v1008 = vunpack.c.l.b16 %v102
    %v1009 = vunpack.c.h.b16 %v102
    %v1010 = vunpack.c.l.b16 %v103
    %v1011 = vunpack.c.h.b16 %v103
    %v1012 = vunpack.c.l.b16 %v104
    %v1013 = vunpack.c.h.b16 %v104
    %v1014 = vunpack.c.l.b16 %v105
    %v1015 = vunpack.c.h.b16 %v105
    %v1016 = vunpack.c.l.b16 %v106
    %v1017 = vunpack.c.h.b16 %v106
    %v1018 = vunpack.c.l.b16 %v107
    %v1019 = vunpack.c.h.b16 %v107
    %v1020 = vunpack.c.l.b16 %v108
    %v1021 = vunpack.c.h.b16 %v108
    %v1022 = vunpack.c.l.b16 %v109
    %v1023 = vunpack.c.h.b16 %v109
    %v1024 = vunpack.c.l.b16 %v110
    %v1025 = vunpack.c.h.b16 %v110
    %v1026 = vunpack.c.l.b16 %v111
    %v1027 = vunpack.c.h.b16 %v111
    %v1028 = vunpack.c.l.b16 %v112
    %v1029 = vunpack.c.h.b16 %v112
    %v1030 = vunpack.c.l.b16 %v113
    %v1031 = vunpack.c.h.b16 %v113
    %v1032 = vunpack.c.l.b16 %v114
    %v1033 = vunpack.c.h.b16 %v114
    %v1034 = vunpack.c.l.b16 %v115
    %v1035 = vunpack.c.h.b16 %v115
    %v1036 = vunpack.c.l.b16 %v116
    %v1037 = vunpack.c.h.b16 %v116
    %v1038 = vunpack.c.l.b16 %v117
    %v1039 = vunpack.c.h.b16 %v117
    %v1040 = vunpack.c.l.b16 %v118
    %v1041 = vunpack.c.h.b16 %v118
    %v1042 = vunpack.c.l.b16 %v119
    %v1043 = vunpack.c.h.b16 %v119
    %v1044 = vunpack.c.l.b16 %v120
    %v1045 = vunpack.c.h.b16 %v120
    %v1046 = vunpack.c.l.b16 %v121
    %v1047 = vunpack.c.h.b16 %v121
    %v1048 = vunpack.c.l.b16 %v122
    %v1049 = vunpack.c.h.b16 %v122
    %v1050 = vunpack.c.l.b16 %v123
    %v1051 = vunpack.c.h.b16 %v123
    %v1052 = vunpack.c.l.b16 %v124
    %v1053 = vunpack.c.h.b16 %v124
    %v1054 = vunpack.c.l.b16 %v125
    %v1055 = vunpack.c.h.b16 %v125
    %v1056 = vunpack.c.l.b16 %v126
    %v1057 = vunpack.c.h.b16 %v126
    %v1058 = vunpack.c.l.b16 %v127
    %v1059 = vunpack.c.h.b16 %v127
    %v1060 = vunpack.c.l.b16 %v128
    %v1061 = vunpack.c.h.b16 %v128
    %v1062 = vunpack.c.l.b16 %v129
    %v1063 = vunpack.c.h.b16 %v129
    %v1064 = vunpack.c.l.b16 %v130
    %v1065 = vunpack.c.h.b16 %v130
    %v1066 = vunpack.c.l.b16 %v131
    %v1067 = vunpack.c.h.b16 %v131
    %v1068 = vunpack.c.l.b16 %v132
    %v1069 = vunpack.c.h.b16 %v132
    %v1070 = vunpack.c.l.b16 %v133
    %v1071 = vunpack.c.h.b16 %v133
    %v1072 = vunpack.c.l.b16 %v134
    %v1073 = vunpack.c.h.b16 %v134
    %v1074 = vunpack.c.l.b16 %v135
    %v1075 = vunpack.c.h.b16 %v135
    %v1076 = vunpack.c.l.b16 %v136
    %v1077 = vunpack.c.h.b16 %v136
    %v1078 = vunpack.c.l.b16 %v137
    %v1079 = vunpack.c.h.b16 %v137
    %v1080 = vunpack.c.l.b16 %v138
    %v1081 = vunpack.c.h.b16 %v138
    %v1082 = vunpack.c.l.b16 %v139
    %v1083 = vunpack.c.h.b16 %v139
    %v1084 = vunpack.c.l.b16 %v140
    %v1085 = vunpack.c.h.b16 %v140
    %v1086 = vunpack.c.l.b16 %v141
    %v1087 = vunpack.c.h.b16 %v141
    %v1088 = vunpack.c.l.b16 %v142
    %v1089 = vunpack.c.h.b16 %v142
    %v1090 = vunpack.c.l.b16 %v143
    %v1091 = vunpack.c.h.b16 %v143
    %v1092 = vunpack.c.l.b16 %v144
    %v1093 = vunpack.c.h.b16 %v144
    %v1094 = vunpack.c.l.b16 %v145
    %v1095 = vunpack.c.h.b16 %v145
    %v1096 = vunpack.c.l.b16 %v146
    %v1097 = vunpack.c.h.b16 %v146
    %v1098 = vunpack.c.l.b16 %v147
    %v1099 = vunpack.c.h.b16 %v147
    %v1100 = vunpack.c.l.b16 %v148
    %v1101 = vunpack.c.h.b16 %v148
    %v1102 = vunpack.c.l.b16 %v149
    %v1103 = vunpack.c.h.b16 %v149
    %v1104 = vunpack.c.l.b16 %v150
    %v1105 = vunpack.c.h.b16 %v150
    %v1106 = vunpack.c.l.b16 %v151
    %v1107 = vunpack.c.h.b16 %v151
    %v1108 = vunpack.c.l.b16 %v152
    %v1109 = vunpack.c.h.b16 %v152
    %v1110 = vunpack.c.l.b16 %v153
    %v1111 = vunpack.c.h.b16 %v153
    %v1112 = vunpack.c.l.b16 %v154
    %v1113 = vunpack.c.h.b16 %v154
    %v1114 = vunpack.c.l.b16 %v155
    %v1115 = vunpack.c.h.b16 %v155
    %v1116 = vunpack.c.l.b16 %v156
    %v1117 = vunpack.c.h.b16 %v156
    %v1118 = vunpack.c.l.b16 %v157
    %v1119 = vunpack.c.h.b16 %v157
    %v1120 = vunpack.c.l.b16 %v158
    %v1121 = vunpack.c.h.b16 %v158
    %v1122 = vunpack.c.l.b16 %v159
    %v1123 = vunpack.c.h.b16 %v159
    %v1124 = vunpack.c.l.b16 %v160
    %v1125 = vunpack.c.h.b16 %v160
    %v1126 = vunpack.c.l.b16 %v161
    %v1127 = vunpack.c.h.b16 %v161
    %v1128 = vunpack.c.l.b16 %v162
    %v1129 = vunpack.c.h.b16 %v162
    %v1130 = vunpack.c.l.b16 %v163
    %v1131 = vunpack.c.h.b16 %v163
    %v1132 = vunpack.c.l.b16 %v164
    %v1133 = vunpack.c.h.b16 %v164
    %v1134 = vunpack.c.l.b16 %v165
    %v1135 = vunpack.c.h.b16 %v165
    %v1136 = vunpack.c.l.b16 %v166
    %v1137 = vunpack.c.h.b16 %v166
    %v1138 = vunpack.c.l.b16 %v167
    %v1139 = vunpack.c.h.b16 %v167
    %v1140 = vunpack.c.l.b16 %v168
    %v1141 = vunpack.c.h.b16 %v168
    %v1142 = vunpack.c.l.b16 %v169
    %v1143 = vunpack.c.h.b16 %v169
    %v1144 = vunpack.c.l.b16 %v170
    %v1145 = vunpack.c.h.b16 %v170
    %v1146 = vunpack.c.l.b16 %v171
    %v1147 = vunpack.c.h.b16 %v171
    %v1148 = vunpack.c.l.b16 %v172
    %v1149 = vunpack.c.h.b16 %v172
    %v1150 = vunpack.c.l.b16 %v173
    %v1151 = vunpack.c.h.b16 %v173
    %v1152 = vunpack.c.l.b16 %v174
    %v1153 = vunpack.c.h.b16 %v174
    %v1154 = vunpack.c.l.b16 %v175
    %v1155 = vunpack.c.h.b16 %v175
    %v1156 = vunpack.c.l.b16 %v176
    %v1157 = vunpack.c.h.b16 %v176
    %v1158 = vunpack.c.l.b16 %v177
    %v1159 = vunpack.c.h.b16 %v177
    %v1160 = vunpack.c.l.b16 %v178
    %v1161 = vunpack.c.h.b16 %v178
    %v1162 = vunpack.c.l.b16 %v179
    %v1163 = vunpack.c.h.b16 %v179
    %v1164 = vunpack.c.l.b16 %v180
    %v1165 = vunpack.c.h.b16 %v180
    %v1166 = vunpack.c.l.b16 %v181
    %v1167 = vunpack.c.h.b16 %v181
    %v1168 = vunpack.c.l.b16 %v182
    %v1169 = vunpack.c.h.b16 %v182
    %v1170 = vunpack.c.l.b16 %v183
    %v1171 = vunpack.c.h.b16 %v183
    %v1172 = vunpack.c.l.b16 %v184
    %v1173 = vunpack.c.h.b16 %v184
    %v1174 = vunpack.c.l.b16 %v185
    %v1175 = vunpack.c.h.b16 %v185
    %v1176 = vunpack.c.l.b16 %v186
    %v1177 = vunpack.c.h.b16 %v186
    %v1178 = vunpack.c.l.b16 %v187
    %v1179 = vunpack.c.h.b16 %v187
    %v1180 = vunpack.c.l.b16 %v188
    %v1181 = vunpack.c.h.b16 %v188
    %v1182 = vunpack.c.l.b16 %v189
    %v1183 = vunpack.c.h.b16 %v189
    %v1184 = vunpack.c.l.b16 %v190
    %v1185 = vunpack.c.h.b16 %v190
    %v1186 = vunpack.c.l.b16 %v191
    %v1187 = vunpack.c.h.b16 %v191
    %v1188 = vunpack.c.l.b16 %v192
    %v1189 = vunpack.c.h.b16 %v192
    %v1190 = vunpack.c.l.b16 %v193
    %v1191 = vunpack.c.h.b16 %v193
    %v1192 = vunpack.c.l.b16 %v194
    %v1193 = vunpack.c.h.b16 %v194
    %v1194 = vunpack.c.l.b16 %v195
    %v1195 = vunpack.c.h.b16 %v195
    %v1196 = vunpack.c.l.b16 %v196
    %v1197 = vunpack.c.h.b16 %v196
    %v1198 = vunpack.c.l.b16 %v197
    %v1199 = vunpack.c.h.b16 %v197
    %v1200 = vunpack.c.l.b16 %v198
    %v1201 = vunpack.c.h.b16 %v198
    %v1202 = vunpack.c.l.b16 %v199
    %v1203 = vunpack.c.h.b16 %v199
    %v1204 = vunpack.c.l.b16 %v200
    %v1205 = vunpack.c.h.b16 %v200
    %v1206 = vunpack.c.l.b16 %v201
    %v1207 = vunpack.c.h.b16 %v201
    %v1208 = vunpack.c.l.b16 %v202
    %v1209 = vunpack.c.h.b16 %v202
    %v1210 = vunpack.c.l.b16 %v203
    %v1211 = vunpack.c.h.b16 %v203
    %v1212 = vunpack.c.l.b16 %v204
    %v1213 = vunpack.c.h.b16 %v204
    %v1214 = vunpack.c.l.b16 %v205
    %v1215 = vunpack.c.h.b16 %v205
    %v1216 = vunpack.c.l.b16 %v206
    %v1217 = vunpack.c.h.b16 %v206
    %v1218 = vunpack.c.l.b16 %v207
    %v1219 = vunpack.c.h.b16 %v207
    %v1220 = vunpack.c.l.b16 %v208
    %v1221 = vunpack.c.h.b16 %v208
    %v1222 = vunpack.c.l.b16 %v209
    %v1223 = vunpack.c.h.b16 %v209
    %v1224 = vunpack.c.l.b16 %v210
    %v1225 = vunpack.c.h.b16 %v210
    %v1226 = vunpack.c.l.b16 %v211
    %v1227 = vunpack.c.h.b16 %v211
    %v1228 = vunpack.c.l.b16 %v212
    %v1229 = vunpack.c.h.b16 %v212
    %v1230 = vunpack.c.l.b16 %v213
    %v1231 = vunpack.c.h.b16 %v213
    %v1232 = vunpack.c.l.b16 %v214
    %v1233 = vunpack.c.h.b16 %v214
    %v1234 = vunpack.c.l.b16 %v215
    %v1235 = vunpack.c.h.b16 %v215
    %v1236 = vunpack.c.l.b16 %v216
    %v1237 = vunpack.c.h.b16 %v216
    %v1238 = vunpack.c.l.b16 %v217
    %v1239 = vunpack.c.h.b16 %v217
    %v1240 = vunpack.c.l.b16 %v218
    %v1241 = vunpack.c.h.b16 %v218
    %v1242 = vunpack.c.l.b16 %v219
    %v1243 = vunpack.c.h.b16 %v219
    %v1244 = vunpack.c.l.b16 %v220
    %v1245 = vunpack.c.h.b16 %v220
    %v1246 = vunpack.c.l.b16 %v221
    %v1247 = vunpack.c.h.b16 %v221
    %v1248 = vunpack.c.l.b16 %v222
    %v1249 = vunpack.c.h.b16 %v222
    %v1250 = vunpack.c.l.b16 %v223
    %v1251 = vunpack.c.h.b16 %v223
    %v1252 = vunpack.c.l.b16 %v224
    %v1253 = vunpack.c.h.b16 %v224
    %v1254 = vunpack.c.l.b16 %v225
    %v1255 = vunpack.c.h.b16 %v225
    %v1256 = vunpack.c.l.b16 %v226
    %v1257 = vunpack.c.h.b16 %v226
    %v1258 = vunpack.c.l.b16 %v227
    %v1259 = vunpack.c.h.b16 %v227
    %v1260 = vunpack.c.l.b16 %v228
    %v1261 = vunpack.c.h.b16 %v228
    %v1262 = vunpack.c.l.b16 %v229
    %v1263 = vunpack.c.h.b16 %v229
    %v1264 = vunpack.c.l.b16 %v230
    %v1265 = vunpack.c.h.b16 %v230
    %v1266 = vunpack.c.l.b16 %v231
    %v1267 = vunpack.c.h.b16 %v231
    %v1268 = vunpack.c.l.b16 %v232
    %v1269 = vunpack.c.h.b16 %v232
    %v1270 = vunpack.c.l.b16 %v233
    %v1271 = vunpack.c.h.b16 %v233
    %v1272 = vunpack.c.l.b16 %v234
    %v1273 = vunpack.c.h.b16 %v234
    %v1274 = vunpack.c.l.b16 %v235
    %v1275 = vunpack.c.h.b16 %v235
    %v1276 = vunpack.c.l.b16 %v236
    %v1277 = vunpack.c.h.b16 %v236
    %v1278 = vunpack.c.l.b16 %v237
    %v1279 = vunpack.c.h.b16 %v237
    %v1280 = vunpack.c.l.b16 %v238
    %v1281 = vunpack.c.h.b16 %v238
    %v1282 = vunpack.c.l.b16 %v239
    %v1283 = vunpack.c.h.b16 %v239
    %v1284 = vunpack.c.l.b16 %v240
    %v1285 = vunpack.c.h.b16 %v240
    %v1286 = vunpack.c.l.b16 %v241
    %v1287 = vunpack.c.h.b16 %v241
    %v1288 = vunpack.c.l.b16 %v242
    %v1289 = vunpack.c.h.b16 %v242
    %v1290 = vunpack.c.l.b16 %v243
    %v1291 = vunpack.c.h.b16 %v243
    %v1292 = vunpack.c.l.b16 %v244
    %v1293 = vunpack.c.h.b16 %v244
    %v1294 = vunpack.c.l.b16 %v245
    %v1295 = vunpack.c.h.b16 %v245
    %v1296 = vunpack.c.l.b16 %v246
    %v1297 = vunpack.c.h.b16 %v246
    %v1298 = vunpack.c.l.b16 %v247
    %v1299 = vunpack.c.h.b16 %v247
    %v1300 = vunpack.c.l.b16 %v248
    %v1301 = vunpack.c.h.b16 %v248
    %v1302 = vunpack.c.l.b16 %v249
    %v1303 = vunpack.c.h.b16 %v249
    %v1304 = vunpack.c.l.b16 %v250
    %v1305 = vunpack.c.h.b16 %v250
    %v1306 = vunpack.c.l.b16 %v251
    %v1307 = vunpack.c.h.b16 %v251
    %v1308 = vunpack.c.l.b16 %v252
    %v1309 = vunpack.c.h.b16 %v252
    %v1310 = vunpack.c.l.b16 %v253
    %v1311 = vunpack.c.h.b16 %v253
    %v1312 = vunpack.c.l.b16 %v254
    %v1313 = vunpack.c.h.b16 %v254
    %v1314 = vunpack.c.l.b16 %v255
    %v1315 = vunpack.c.h.b16 %v255
    %v1316 = vunpack.c.l.b16 %v256
    %v1317 = vunpack.c.h.b16 %v256
    %v1318 = vunpack.c.l.b16 %v257
    %v1319 = vunpack.c.h.b16 %v257
    %v1320 = vunpack.c.l.b16 %v258
    %v1321 = vunpack.c.h.b16 %v258
    %v1322 = vunpack.c.l.b16 %v259
    %v1323 = vunpack.c.h.b16 %v259
    %v1324 = vunpack.c.l.b16 %v260
    %v1325 = vunpack.c.h.b16 %v260
    %v1326 = vunpack.c.l.b16 %v261
    %v1327 = vunpack.c.h.b16 %v261
    %v1328 = vunpack.c.l.b16 %v262
    %v1329 = vunpack.c.h.b16 %v262
    %v1330 = vunpack.c.l.b16 %v263
    %v1331 = vunpack.c.h.b16 %v263
    %v1332 = vunpack.c.l.b16 %v264
    %v1333 = vunpack.c.h.b16 %v264
    %v1334 = vunpack.c.l.b16 %v265
    %v1335 = vunpack.c.h.b16 %v265
    %v1336 = vunpack.c.l.b16 %v266
    %v1337 = vunpack.c.h.b16 %v266
    %v1338 = vunpack.c.l.b16 %v267
    %v1339 = vunpack.c.h.b16 %v267
    %v1340 = vunpack.c.l.b16 %v268
    %v1341 = vunpack.c.h.b16 %v268
    %v1342 = vunpack.c.l.b16 %v269
    %v1343 = vunpack.c.h.b16 %v269
    %v1344 = vunpack.c.l.b16 %v270
    %v1345 = vunpack.c.h.b16 %v270
    %v1346 = vunpack.c.l.b16 %v271
    %v1347 = vunpack.c.h.b16 %v271
    %v1348 = vunpack.c.l.b16 %v272
    %v1349 = vunpack.c.h.b16 %v272
    %v1350 = vunpack.c.l.b16 %v273
    %v1351 = vunpack.c.h.b16 %v273
    %v1352 = vunpack.c.l.b16 %v274
    %v1353 = vunpack.c.h.b16 %v274
    %v1354 = vunpack.c.l.b16 %v275
    %v1355 = vunpack.c.h.b16 %v275
    %v1356 = vunpack.c.l.b16 %v276
    %v1357 = vunpack.c.h.b16 %v276
    %v1358 = vunpack.c.l.b16 %v277
    %v1359 = vunpack.c.h.b16 %v277
    %v1360 = vunpack.c.l.b16 %v278
    %v1361 = vunpack.c.h.b16 %v278
    %v1362 = vunpack.c.l.b16 %v279
    %v1363 = vunpack.c.h.b16 %v279
    %v1364 = vunpack.c.l.b16 %v280
    %v1365 = vunpack.c.h.b16 %v280
    %v1366 = vunpack.c.l.b16 %v281
    %v1367 = vunpack.c.h.b16 %v281
    %v1368 = vunpack.c.l.b16 %v282
    %v1369 = vunpack.c.h.b16 %v282
    %v1370 = vunpack.c.l.b16 %v283
    %v1371 = vunpack.c.h.b16 %v283
    %v1372 = vunpack.c.l.b16 %v284
    %v1373 = vunpack.c.h.b16 %v284
    %v1374 = vunpack.c.l.b16 %v285
    %v1375 = vunpack.c.h.b16 %v285
    %v1376 = vunpack.c.l.b16 %v286
    %v1377 = vunpack.c.h.b16 %v286
    %v1378 = vunpack.c.l.b16 %v287
    %v1379 = vunpack.c.h.b16 %v287
    %v1380 = vunpack.c.l.b16 %v288
    %v1381 = vunpack.c.h.b16 %v288
    %v1382 = vunpack.c.l.b16 %v289
    %v1383 = vunpack.c.h.b16 %v289
    %v1384 = vunpack.c.l.b16 %v290
    %v1385 = vunpack.c.h.b16 %v290
    %v1386 = vunpack.c.l.b16 %v291
    %v1387 = vunpack.c.h.b16 %v291
    %v1388 = vunpack.c.l.b16 %v292
    %v1389 = vunpack.c.h.b16 %v292
    %v1390 = vunpack.c.l.b16 %v293
    %v1391 = vunpack.c.h.b16 %v293
    %v1392 = vunpack.c.l.b16 %v294
    %v1393 = vunpack.c.h.b16 %v294
    %v1394 = vunpack.c.l.b16 %v295
    %v1395 = vunpack.c.h.b16 %v295
    %v1396 = vunpack.c.l.b16 %v296
    %v1397 = vunpack.c.h.b16 %v296
    %v1398 = vunpack.c.l.b16 %v297
    %v1399 = vunpack.c.h.b16 %v297
    %v1400 = vunpack.c.l.b16 %v298
    %v1401 = vunpack.c.h.b16 %v298
    %v1402 = vunpack.c.l.b16 %v299
    %v1403 = vunpack.c.h.b16 %v299
    %v1404 = vunpack.c.l.b16 %v300
    %v1405 = vunpack.c.h.b16 %v300
    %v1406 = vunpack.c.l.b16 %v301
    %v1407 = vunpack.c.h.b16 %v301
    %v1408 = vunpack.c.l.b16 %v302
    %v1409 = vunpack.c.h.b16 %v302
    %v1410 = vunpack.c.l.b16 %v303
    %v1411 = vunpack.c.h.b16 %v303
    %v1412 = vunpack.c.l.b16 %v304
    %v1413 = vunpack.c.h.b16 %v304
    %v1414 = vunpack.c.l.b16 %v305
    %v1415 = vunpack.c.h.b16 %v305
    %v1416 = vunpack.c.l.b16 %v306
    %v1417 = vunpack.c.h.b16 %v306
    %v1418 = vunpack.c.l.b16 %v307
    %v1419 = vunpack.c.h.b16 %v307
    %v1420 = vunpack.c.l.b16 %v308
    %v1421 = vunpack.c.h.b16 %v308
    %v1422 = vunpack.c.l.b16 %v309
    %v1423 = vunpack.c.h.b16 %v309
    %v1424 = vunpack.c.l.b16 %v310
    %v1425 = vunpack.c.h.b16 %v310
    %v1426 = vunpack.c.l.b16 %v311
    %v1427 = vunpack.c.h.b16 %v311
    %v1428 = vunpack.c.l.b16 %v312
    %v1429 = vunpack.c.h.b16 %v312
    %v1430 = vunpack.c.l.b16 %v313
    %v1431 = vunpack.c.h.b16 %v313
    %v1432 = vunpack.c.l.b16 %v314
    %v1433 = vunpack.c.h.b16 %v314
    %v1434 = vunpack.c.l.b16 %v315
    %v1435 = vunpack.c.h.b16 %v315
    %v1436 = vunpack.c.l.b16 %v316
    %v1437 = vunpack.c.h.b16 %v316
    %v1438 = vunpack.c.l.b16 %v317
    %v1439 = vunpack.c.h.b16 %v317
    %v1440 = vunpack.c.l.b16 %v318
    %v1441 = vunpack.c.h.b16 %v318
    %v1442 = vunpack.c.l.b16 %v319
    %v1443 = vunpack.c.h.b16 %v319
    %v1444 = vunpack.c.l.b16 %v320
    %v1445 = vunpack.c.h.b16 %v320
    %v1446 = vunpack.c.l.b16 %v321
    %v1447 = vunpack.c.h.b16 %v321
    %v1448 = vunpack.c.l.b16 %v322
    %v1449 = vunpack.c.h.b16 %v322
    %v1450 = vunpack.c.l.b16 %v323
    %v1451 = vunpack.c.h.b16 %v323
    %v1452 = vunpack.c.l.b16 %v324
    %v1453 = vunpack.c.h.b16 %v324
    %v1454 = vunpack.c.l.b16 %v325
    %v1455 = vunpack.c.h.b16 %v325
    %v1456 = vunpack.c.l.b16 %v326
    %v1457 = vunpack.c.h.b16 %v326
    %v1458 = vunpack.c.l.b16 %v327
    %v1459 = vunpack.c.h.b16 %v327
    %v1460 = vunpack.c.l.b16 %v328
    %v1461 = vunpack.c.h.b16 %v328
    %v1462 = vunpack.c.l.b16 %v329
    %v1463 = vunpack.c.h.b16 %v329
    %v1464 = vunpack.c.l.b16 %v330
    %v1465 = vunpack.c.h.b16 %v330
    %v1466 = vunpack.c.l.b16 %v331
    %v1467 = vunpack.c.h.b16 %v331
    %v1468 = vunpack.c.l.b16 %v332
    %v1469 = vunpack.c.h.b16 %v332
    %v1470 = vunpack.c.l.b16 %v333
    %v1471 = vunpack.c.h.b16 %v333
    %v1472 = vunpack.c.l.b16 %v334
    %v1473 = vunpack.c.h.b16 %v334
    %v1474 = vunpack.c.l.b16 %v335
    %v1475 = vunpack.c.h.b16 %v335
    %v1476 = vunpack.c.l.b16 %v336
    %v1477 = vunpack.c.h.b16 %v336
    %v1478 = vunpack.c.l.b16 %v337
    %v1479 = vunpack.c.h.b16 %v337
    %v1480 = vunpack.c.l.b16 %v338
    %v1481 = vunpack.c.h.b16 %v338
    %v1482 = vunpack.c.l.b16 %v339
    %v1483 = vunpack.c.h.b16 %v339
    %v1484 = vunpack.c.l.b16 %v340
    %v1485 = vunpack.c.h.b16 %v340
    %v1486 = vunpack.c.l.b16 %v341
    %v1487 = vunpack.c.h.b16 %v341
    %v1488 = vunpack.c.l.b16 %v342
    %v1489 = vunpack.c.h.b16 %v342
    %v1490 = vunpack.c.l.b16 %v343
    %v1491 = vunpack.c.h.b16 %v343
    %v1492 = vunpack.c.l.b16 %v344
    %v1493 = vunpack.c.h.b16 %v344
    %v1494 = vunpack.c.l.b16 %v345
    %v1495 = vunpack.c.h.b16 %v345
    %v1496 = vunpack.c.l.b16 %v346
    %v1497 = vunpack.c.h.b16 %v346
    %v1498 = vunpack.c.l.b16 %v347
    %v1499 = vunpack.c.h.b16 %v347
    %v1500 = vunpack.c.l.b16 %v348
    %v1501 = vunpack.c.h.b16 %v348
    %v1502 = vunpack.c.l.b16 %v349
    %v1503 = vunpack.c.h.b16 %v349
    %v1504 = vunpack.c.l.b16 %v350
    %v1505 = vunpack.c.h.b16 %v350
    %v1506 = vunpack.c.l.b16 %v351
    %v1507 = vunpack.c.h.b16 %v351
    %v1508 = vunpack.c.l.b16 %v352
    %v1509 = vunpack.c.h.b16 %v352
    %v1510 = vunpack.c.l.b16 %v353
    %v1511 = vunpack.c.h.b16 %v353
    %v1512 = vunpack.c.l.b16 %v354
    %v1513 = vunpack.c.h.b16 %v354
    %v1514 = vunpack.c.l.b16 %v355
    %v1515 = vunpack.c.h.b16 %v355
    %v1516 = vunpack.c.l.b16 %v356
    %v1517 = vunpack.c.h.b16 %v356
    %v1518 = vunpack.c.l.b16 %v357
    %v1519 = vunpack.c.h.b16 %v357
    %v1520 = vunpack.c.l.b16 %v358
    %v1521 = vunpack.c.h.b16 %v358
    %v1522 = vunpack.c.l.b16 %v359
    %v1523 = vunpack.c.h.b16 %v359
    %v1524 = vunpack.c.l.b16 %v360
    %v1525 = vunpack.c.h.b16 %v360
    %v1526 = vunpack.c.l.b16 %v361
    %v1527 = vunpack.c.h.b16 %v361
    %v1528 = vunpack.c.l.b16 %v362
    %v1529 = vunpack.c.h.b16 %v362
    %v1530 = vunpack.c.l.b16 %v363
    %v1531 = vunpack.c.h.b16 %v363
    %v1532 = vunpack.c.l.b16 %v364
    %v1533 = vunpack.c.h.b16 %v364
    %v1534 = vunpack.c.l.b16 %v365
    %v1535 = vunpack.c.h.b16 %v365
    %v1536 = vunpack.c.l.b16 %v366
    %v1537 = vunpack.c.h.b16 %v366
    %v1538 = vunpack.c.l.b16 %v367
    %v1539 = vunpack.c.h.b16 %v367
    %v1540 = vunpack.c.l.b16 %v368
    %v1541 = vunpack.c.h.b16 %v368
    %v1542 = vunpack.c.l.b16 %v369
    %v1543 = vunpack.c.h.b16 %v369
    %v1544 = vunpack.c.l.b16 %v370
    %v1545 = vunpack.c.h.b16 %v370
    %v1546 = vunpack.c.l.b16 %v371
    %v1547 = vunpack.c.h.b16 %v371
    %v1548 = vunpack.c.l.b16 %v372
    %v1549 = vunpack.c.h.b16 %v372
    %v1550 = vunpack.c.l.b16 %v373
    %v1551 = vunpack.c.h.b16 %v373
    %v1552 = vunpack.c.l.b16 %v374
    %v1553 = vunpack.c.h.b16 %v374
    %v1554 = vunpack.c.l.b16 %v375
    %v1555 = vunpack.c.h.b16 %v375
    %v1556 = vunpack.c.l.b16 %v376
    %v1557 = vunpack.c.h.b16 %v376
    %v1558 = vunpack.c.l.b16 %v377
    %v1559 = vunpack.c.h.b16 %v377
    %v1560 = vunpack.c.l.b16 %v378
    %v1561 = vunpack.c.h.b16 %v378
    %v1562 = vunpack.c.l.b16 %v379
    %v1563 = vunpack.c.h.b16 %v379
    %v1564 = vunpack.c.l.b16 %v380
    %v1565 = vunpack.c.h.b16 %v380
    %v1566 = vunpack.c.l.b16 %v381
    %v1567 = vunpack.c.h.b16 %v381
    %v1568 = vunpack.c.l.b16 %v382
    %v1569 = vunpack.c.h.b16 %v382
    %v1570 = vunpack.c.l.b16 %v383
    %v1571 = vunpack.c.h.b16 %v383
    %v1572 = vunpack.c.l.b16 %v384
    %v1573 = vunpack.c.h.b16 %v384
    %v1574 = vunpack.c.l.b16 %v385
    %v1575 = vunpack.c.h.b16 %v385
    %v1576 = vunpack.c.l.b16 %v386
    %v1577 = vunpack.c.h.b16 %v386
    %v1578 = vunpack.c.l.b16 %v387
    %v1579 = vunpack.c.h.b16 %v387
    %v1580 = vunpack.c.l.b16 %v388
    %v1581 = vunpack.c.h.b16 %v388
    %v1582 = vunpack.c.l.b16 %v389
    %v1583 = vunpack.c.h.b16 %v389
    %v1584 = vunpack.c.l.b16 %v390
    %v1585 = vunpack.c.h.b16 %v390
    %v1586 = vunpack.c.l.b16 %v391
    %v1587 = vunpack.c.h.b16 %v391
    %v1588 = vunpack.c.l.b16 %v392
    %v1589 = vunpack.c.h.b16 %v392
    %v1590 = vunpack.c.l.b16 %v393
    %v1591 = vunpack.c.h.b16 %v393
    %v1592 = vunpack.c.l.b16 %v394
    %v1593 = vunpack.c.h.b16 %v394
    %v1594 = vunpack.c.l.b16 %v395
    %v1595 = vunpack.c.h.b16 %v395
    %v1596 = vunpack.c.l.b16 %v396
    %v1597 = vunpack.c.h.b16 %v396
    %v1598 = vunpack.c.l.b16 %v397
    %v1599 = vunpack.c.h.b16 %v397
    %v1600 = vunpack.c.l.b16 %v398
    %v1601 = vunpack.c.h.b16 %v398
    %v1602 = vunpack.c.l.b16 %v399
    %v1603 = vunpack.c.h.b16 %v399
    %v1604 = vunpack.c.l.b16 %v400
    %v1605 = vunpack.c.h.b16 %v400
    %v1606 = vunpack.c.l.b16 %v401
    %v1607 = vunpack.c.h.b16 %v401
    %v1608 = vunpack.c.l.b16 %v402
    %v1609 = vunpack.c.h.b16 %v402
    %v1610 = vunpack.c.l.b16 %v403
    %v1611 = vunpack.c.h.b16 %v403
    %v1612 = vunpack.c.l.b16 %v404
    %v1613 = vunpack.c.h.b16 %v404
    %v1614 = vunpack.c.l.b16 %v405
    %v1615 = vunpack.c.h.b16 %v405
    %v1616 = vunpack.c.l.b16 %v406
    %v1617 = vunpack.c.h.b16 %v406
    %v1618 = vunpack.c.l.b16 %v407
    %v1619 = vunpack.c.h.b16 %v407
    %v1620 = vunpack.c.l.b16 %v408
    %v1621 = vunpack.c.h.b16 %v408
    %v1622 = vunpack.c.l.b16 %v409
    %v1623 = vunpack.c.h.b16 %v409
    %v1624 = vunpack.c.l.b16 %v410
    %v1625 = vunpack.c.h.b16 %v410
    %v1626 = vunpack.c.l.b16 %v411
    %v1627 = vunpack.c.h.b16 %v411
    %v1628 = vunpack.c.l.b16 %v412
    %v1629 = vunpack.c.h.b16 %v412
    %v1630 = vunpack.c.l.b16 %v413
    %v1631 = vunpack.c.h.b16 %v413
    %v1632 = vunpack.c.l.b16 %v414
    %v1633 = vunpack.c.h.b16 %v414
    %v1634 = vunpack.c.l.b16 %v415
    %v1635 = vunpack.c.h.b16 %v415
    %v1636 = vunpack.c.l.b16 %v416
    %v1637 = vunpack.c.h.b16 %v416
    %v1638 = vunpack.c.l.b16 %v417
    %v1639 = vunpack.c.h.b16 %v417
    %v1640 = vunpack.c.l.b16 %v418
    %v1641 = vunpack.c.h.b16 %v418
    %v1642 = vunpack.c.l.b16 %v419
    %v1643 = vunpack.c.h.b16 %v419
    %v1644 = vunpack.c.l.b16 %v420
    %v1645 = vunpack.c.h.b16 %v420
    %v1646 = vunpack.c.l.b16 %v421
    %v1647 = vunpack.c.h.b16 %v421
    %v1648 = vunpack.c.l.b16 %v422
    %v1649 = vunpack.c.h.b16 %v422
    %v1650 = vunpack.c.l.b16 %v423
    %v1651 = vunpack.c.h.b16 %v423
    %v1652 = vunpack.c.l.b16 %v424
    %v1653 = vunpack.c.h.b16 %v424
    %v1654 = vunpack.c.l.b16 %v425
    %v1655 = vunpack.c.h.b16 %v425
    %v1656 = vunpack.c.l.b16 %v426
    %v1657 = vunpack.c.h.b16 %v426
    %v1658 = vunpack.c.l.b16 %v427
    %v1659 = vunpack.c.h.b16 %v427
    %v1660 = vunpack.c.l.b16 %v428
    %v1661 = vunpack.c.h.b16 %v428
    %v1662 = vunpack.c.l.b16 %v429
    %v1663 = vunpack.c.h.b16 %v429
    %v1664 = vunpack.c.l.b16 %v430
    %v1665 = vunpack.c.h.b16 %v430
    %v1666 = vunpack.c.l.b16 %v431
    %v1667 = vunpack.c.h.b16 %v431
    %v1668 = vunpack.c.l.b16 %v432
    %v1669 = vunpack.c.h.b16 %v432
    %v1670 = vunpack.c.l.b16 %v433
    %v1671 = vunpack.c.h.b16 %v433
    %v1672 = vunpack.c.l.b16 %v434
    %v1673 = vunpack.c.h.b16 %v434
    %v1674 = vunpack.c.l.b16 %v435
    %v1675 = vunpack.c.h.b16 %v435
    %v1676 = vunpack.c.l.b16 %v436
    %v1677 = vunpack.c.h.b16 %v436
    %v1678 = vunpack.c.l.b16 %v437
    %v1679 = vunpack.c.h.b16 %v437
    %v1680 = vunpack.c.l.b16 %v438
    %v1681 = vunpack.c.h.b16 %v438
    %v1682 = vunpack.c.l.b16 %v439
    %v1683 = vunpack.c.h.b16 %v439
    %v1684 = vunpack.c.l.b16 %v440
    %v1685 = vunpack.c.h.b16 %v440
    %v1686 = vunpack.c.l.b16 %v441
    %v1687 = vunpack.c.h.b16 %v441
    %v1688 = vunpack.c.l.b16 %v442
    %v1689 = vunpack.c.h.b16 %v442
    %v1690 = vunpack.c.l.b16 %v443
    %v1691 = vunpack.c.h.b16 %v443
    %v1692 = vunpack.c.l.b16 %v444
    %v1693 = vunpack.c.h.b16 %v444
    %v1694 = vunpack.c.l.b16 %v445
    %v1695 = vunpack.c.h.b16 %v445
    %v1696 = vunpack.c.l.b16 %v446
    %v1697 = vunpack.c.h.b16 %v446
    %v1698 = vunpack.c.l.b16 %v447
    %v1699 = vunpack.c.h.b16 %v447
    %v1700 = vunpack.c.l.b16 %v448
    %v1701 = vunpack.c.h.b16 %v448
    %v1702 = vunpack.c.l.b16 %v449
    %v1703 = vunpack.c.h.b16 %v449
    %v1704 = vpack.c.b16 %v944, %v936
    %v1705 = vpack.c.b16 %v945, %v937
    %v1706 = vpack.c.b16 %v946, %v938
    %v1707 = vpack.c.b16 %v947, %v939
    %v1708 = vpack.c.b16 %v948, %v940
    %v1709 = vpack.c.b16 %v949, %v941
    %v1710 = vpack.c.b16 %v950, %v942
    %v1711 = vpack.c.b16 %v951, %v943
    %v1712 = vpack.c.b16 %v960, %v952
    %v1713 = vpack.c.b16 %v961, %v953
    %v1714 = vpack.c.b16 %v962, %v954
    %v1715 = vpack.c.b16 %v963, %v955
    %v1716 = vpack.c.b16 %v964, %v956
    %v1717 = vpack.c.b16 %v965, %v957
    %v1718 = vpack.c.b16 %v966, %v958
    %v1719 = vpack.c.b16 %v967, %v959
    %v1720 = vpack.c.b16 %v976, %v968
    %v1721 = vpack.c.b16 %v977, %v969
    %v1722 = vpack.c.b16 %v978, %v970
    %v1723 = vpack.c.b16 %v979, %v971
    %v1724 = vpack.c.b16 %v980, %v972
    %v1725 = vpack.c.b16 %v981, %v973
    %v1726 = vpack.c.b16 %v982, %v974
    %v1727 = vpack.c.b16 %v983, %v975
    %v1728 = vpack.c.b16 %v992, %v984
    %v1729 = vpack.c.b16 %v993, %v985
    %v1730 = vpack.c.b16 %v994, %v986
    %v1731 = vpack.c.b16 %v995, %v987
    %v1732 = vpack.c.b16 %v996, %v988
    %v1733 = vpack.c.b16 %v997, %v989
    %v1734 = vpack.c.b16 %v998, %v990
    %v1735 = vpack.c.b16 %v999, %v991
    %v1736 = vpack.c.b16 %v1008, %v1000
    %v1737 = vpack.c.b16 %v1009, %v1001
    %v1738 = vpack.c.b16 %v1010, %v1002
    %v1739 = vpack.c.b16 %v1011, %v1003
    %v1740 = vpack.c.b16 %v1012, %v1004
    %v1741 = vpack.c.b16 %v1013, %v1005
    %v1742 = vpack.c.b16 %v1014, %v1006
    %v1743 = vpack.c.b16 %v1015, %v1007
    %v1744 = vpack.c.b16 %v1024, %v1016
    %v1745 = vpack.c.b16 %v1025, %v1017
    %v1746 = vpack.c.b16 %v1026, %v1018
    %v1747 = vpack.c.b16 %v1027, %v1019
    %v1748 = vpack.c.b16 %v1028, %v1020
    %v1749 = vpack.c.b16 %v1029, %v1021
    %v1750 = vpack.c.b16 %v1030, %v1022
    %v1751 = vpack.c.b16 %v1031, %v1023
    %v1752 = vpack.c.b16 %v1040, %v1032
    %v1753 = vpack.c.b16 %v1041, %v1033
    %v1754 = vpack.c.b16 %v1042, %v1034
    %v1755 = vpack.c.b16 %v1043, %v1035
    %v1756 = vpack.c.b16 %v1044, %v1036
    %v1757 = vpack.c.b16 %v1045, %v1037
    %v1758 = vpack.c.b16 %v1046, %v1038
    %v1759 = vpack.c.b16 %v1047, %v1039
    %v1760 = vpack.c.b16 %v1056, %v1048
    %v1761 = vpack.c.b16 %v1057, %v1049
    %v1762 = vpack.c.b16 %v1058, %v1050
    %v1763 = vpack.c.b16 %v1059, %v1051
    %v1764 = vpack.c.b16 %v1060, %v1052
    %v1765 = vpack.c.b16 %v1061, %v1053
    %v1766 = vpack.c.b16 %v1062, %v1054
    %v1767 = vpack.c.b16 %v1063, %v1055
    %v1768 = vpack.c.b16 %v1072, %v1064
    %v1769 = vpack.c.b16 %v1073, %v1065
    %v1770 = vpack.c.b16 %v1074, %v1066
    %v1771 = vpack.c.b16 %v1075, %v1067
    %v1772 = vpack.c.b16 %v1076, %v1068
    %v1773 = vpack.c.b16 %v1077, %v1069
    %v1774 = vpack.c.b16 %v1078, %v1070
    %v1775 = vpack.c.b16 %v1079, %v1071
    %v1776 = vpack.c.b16 %v1088, %v1080
    %v1777 = vpack.c.b16 %v1089, %v1081
    %v1778 = vpack.c.b16 %v1090, %v1082
    %v1779 = vpack.c.b16 %v1091, %v1083
    %v1780 = vpack.c.b16 %v1092, %v1084
    %v1781 = vpack.c.b16 %v1093, %v1085
    %v1782 = vpack.c.b16 %v1094, %v1086
    %v1783 = vpack.c.b16 %v1095, %v1087
    %v1784 = vpack.c.b16 %v1104, %v1096
    %v1785 = vpack.c.b16 %v1105, %v1097
    %v1786 = vpack.c.b16 %v1106, %v1098
    %v1787 = vpack.c.b16 %v1107, %v1099
    %v1788 = vpack.c.b16 %v1108, %v1100
    %v1789 = vpack.c.b16 %v1109, %v1101
    %v1790 = vpack.c.b16 %v1110, %v1102
    %v1791 = vpack.c.b16 %v1111, %v1103
    %v1792 = vpack.c.b16 %v1120, %v1112
    %v1793 = vpack.c.b16 %v1121, %v1113
    %v1794 = vpack.c.b16 %v1122, %v1114
    %v1795 = vpack.c.b16 %v1123, %v1115
    %v1796 = vpack.c.b16 %v1124, %v1116
    %v1797 = vpack.c.b16 %v1125, %v1117
    %v1798 = vpack.c.b16 %v1126, %v1118
    %v1799 = vpack.c.b16 %v1127, %v1119
    %v1800 = vpack.c.b16 %v1136, %v1128
    %v1801 = vpack.c.b16 %v1137, %v1129
    %v1802 = vpack.c.b16 %v1138, %v1130
    %v1803 = vpack.c.b16 %v1139, %v1131
    %v1804 = vpack.c.b16 %v1140, %v1132
    %v1805 = vpack.c.b16 %v1141, %v1133
    %v1806 = vpack.c.b16 %v1142, %v1134
    %v1807 = vpack.c.b16 %v1143, %v1135
    %v1808 = vpack.c.b16 %v1152, %v1144
    %v1809 = vpack.c.b16 %v1153, %v1145
    %v1810 = vpack.c.b16 %v1154, %v1146
    %v1811 = vpack.c.b16 %v1155, %v1147
    %v1812 = vpack.c.b16 %v1156, %v1148
    %v1813 = vpack.c.b16 %v1157, %v1149
    %v1814 = vpack.c.b16 %v1158, %v1150
    %v1815 = vpack.c.b16 %v1159, %v1151
    %v1816 = vpack.c.b16 %v1168, %v1160
    %v1817 = vpack.c.b16 %v1169, %v1161
    %v1818 = vpack.c.b16 %v1170, %v1162
    %v1819 = vpack.c.b16 %v1171, %v1163
    %v1820 = vpack.c.b16 %v1172, %v1164
    %v1821 = vpack.c.b16 %v1173, %v1165
    %v1822 = vpack.c.b16 %v1174, %v1166
    %v1823 = vpack.c.b16 %v1175, %v1167
    %v1824 = vpack.c.b16 %v1184, %v1176
    %v1825 = vpack.c.b16 %v1185, %v1177
    %v1826 = vpack.c.b16 %v1186, %v1178
    %v1827 = vpack.c.b16 %v1187, %v1179
    %v1828 = vpack.c.b16 %v1188, %v1180
    %v1829 = vpack.c.b16 %v1189, %v1181
    %v1830 = vpack.c.b16 %v1190, %v1182
    %v1831 = vpack.c.b16 %v1191, %v1183
    %v1832 = vpack.c.b16 %v1200, %v1192
    %v1833 = vpack.c.b16 %v1201, %v1193
    %v1834 = vpack.c.b16 %v1202, %v1194
    %v1835 = vpack.c.b16 %v1203, %v1195
    %v1836 = vpack.c.b16 %v1204, %v1196
    %v1837 = vpack.c.b16 %v1205, %v1197
    %v1838 = vpack.c.b16 %v1206, %v1198
    %v1839 = vpack.c.b16 %v1207, %v1199
    %v1840 = vpack.c.b16 %v1216, %v1208
    %v1841 = vpack.c.b16 %v1217, %v1209
    %v1842 = vpack.c.b16 %v1218, %v1210
    %v1843 = vpack.c.b16 %v1219, %v1211
    %v1844 = vpack.c.b16 %v1220, %v1212
    %v1845 = vpack.c.b16 %v1221, %v1213
    %v1846 = vpack.c.b16 %v1222, %v1214
    %v1847 = vpack.c.b16 %v1223, %v1215
    %v1848 = vpack.c.b16 %v1232, %v1224
    %v1849 = vpack.c.b16 %v1233, %v1225
    %v1850 = vpack.c.b16 %v1234, %v1226
    %v1851 = vpack.c.b16 %v1235, %v1227
    %v1852 = vpack.c.b16 %v1236, %v1228
    %v1853 = vpack.c.b16 %v1237, %v1229
    %v1854 = vpack.c.b16 %v1238, %v1230
    %v1855 = vpack.c.b16 %v1239, %v1231
    %v1856 = vpack.c.b16 %v1248, %v1240
    %v1857 = vpack.c.b16 %v1249, %v1241
    %v1858 = vpack.c.b16 %v1250, %v1242
    %v1859 = vpack.c.b16 %v1251, %v1243
    %v1860 = vpack.c.b16 %v1252, %v1244
    %v1861 = vpack.c.b16 %v1253, %v1245
    %v1862 = vpack.c.b16 %v1254, %v1246
    %v1863 = vpack.c.b16 %v1255, %v1247
    %v1864 = vpack.c.b16 %v1264, %v1256
    %v1865 = vpack.c.b16 %v1265, %v1257
    %v1866 = vpack.c.b16 %v1266, %v1258
    %v1867 = vpack.c.b16 %v1267, %v1259
    %v1868 = vpack.c.b16 %v1268, %v1260
    %v1869 = vpack.c.b16 %v1269, %v1261
    %v1870 = vpack.c.b16 %v1270, %v1262
    %v1871 = vpack.c.b16 %v1271, %v1263
    %v1872 = vpack.c.b16 %v1280, %v1272
    %v1873 = vpack.c.b16 %v1281, %v1273
    %v1874 = vpack.c.b16 %v1282, %v1274
    %v1875 = vpack.c.b16 %v1283, %v1275
    %v1876 = vpack.c.b16 %v1284, %v1276
    %v1877 = vpack.c.b16 %v1285, %v1277
    %v1878 = vpack.c.b16 %v1286, %v1278
    %v1879 = vpack.c.b16 %v1287, %v1279
    %v1880 = vpack.c.b16 %v1296, %v1288
    %v1881 = vpack.c.b16 %v1297, %v1289
    %v1882 = vpack.c.b16 %v1298, %v1290
    %v1883 = vpack.c.b16 %v1299, %v1291
    %v1884 = vpack.c.b16 %v1300, %v1292
    %v1885 = vpack.c.b16 %v1301, %v1293
    %v1886 = vpack.c.b16 %v1302, %v1294
    %v1887 = vpack.c.b16 %v1303, %v1295
    %v1888 = vpack.c.b16 %v1312, %v1304
    %v1889 = vpack.c.b16 %v1313, %v1305
    %v1890 = vpack.c.b16 %v1314, %v1306
    %v1891 = vpack.c.b16 %v1315, %v1307
    %v1892 = vpack.c.b16 %v1316, %v1308
    %v1893 = vpack.c.b16 %v1317, %v1309
    %v1894 = vpack.c.b16 %v1318, %v1310
    %v1895 = vpack.c.b16 %v1319, %v1311
    %v1896 = vpack.c.b16 %v1328, %v1320
    %v1897 = vpack.c.b16 %v1329, %v1321
    %v1898 = vpack.c.b16 %v1330, %v1322
    %v1899 = vpack.c.b16 %v1331, %v1323
    %v1900 = vpack.c.b16 %v1332, %v1324
    %v1901 = vpack.c.b16 %v1333, %v1325
    %v1902 = vpack.c.b16 %v1334, %v1326
    %v1903 = vpack.c.b16 %v1335, %v1327
    %v1904 = vpack.c.b16 %v1344, %v1336
    %v1905 = vpack.c.b16 %v1345, %v1337
    %v1906 = vpack.c.b16 %v1346, %v1338
    %v1907 = vpack.c.b16 %v1347, %v1339
    %v1908 = vpack.c.b16 %v1348, %v1340
    %v1909 = vpack.c.b16 %v1349, %v1341
    %v1910 = vpack.c.b16 %v1350, %v1342
    %v1911 = vpack.c.b16 %v1351, %v1343
    %v1912 = vpack.c.b16 %v1360, %v1352
    %v1913 = vpack.c.b16 %v1361, %v1353
    %v1914 = vpack.c.b16 %v1362, %v1354
    %v1915 = vpack.c.b16 %v1363, %v1355
    %v1916 = vpack.c.b16 %v1364, %v1356
    %v1917 = vpack.c.b16 %v1365, %v1357
    %v1918 = vpack.c.b16 %v1366, %v1358
    %v1919 = vpack.c.b16 %v1367, %v1359
    %v1920 = vpack.c.b16 %v1376, %v1368
    %v1921 = vpack.c.b16 %v1377, %v1369
    %v1922 = vpack.c.b16 %v1378, %v1370
    %v1923 = vpack.c.b16 %v1379, %v1371
    %v1924 = vpack.c.b16 %v1380, %v1372
    %v1925 = vpack.c.b16 %v1381, %v1373
    %v1926 = vpack.c.b16 %v1382, %v1374
    %v1927 = vpack.c.b16 %v1383, %v1375
    %v1928 = vpack.c.b16 %v1392, %v1384
    %v1929 = vpack.c.b16 %v1393, %v1385
    %v1930 = vpack.c.b16 %v1394, %v1386
    %v1931 = vpack.c.b16 %v1395, %v1387
    %v1932 = vpack.c.b16 %v1396, %v1388
    %v1933 = vpack.c.b16 %v1397, %v1389
    %v1934 = vpack.c.b16 %v1398, %v1390
    %v1935 = vpack.c.b16 %v1399, %v1391
    %v1936 = vpack.c.b16 %v1408, %v1400
    %v1937 = vpack.c.b16 %v1409, %v1401
    %v1938 = vpack.c.b16 %v1410, %v1402
    %v1939 = vpack.c.b16 %v1411, %v1403
    %v1940 = vpack.c.b16 %v1412, %v1404
    %v1941 = vpack.c.b16 %v1413, %v1405
    %v1942 = vpack.c.b16 %v1414, %v1406
    %v1943 = vpack.c.b16 %v1415, %v1407
    %v1944 = vpack.c.b16 %v1424, %v1416
    %v1945 = vpack.c.b16 %v1425, %v1417
    %v1946 = vpack.c.b16 %v1426, %v1418
    %v1947 = vpack.c.b16 %v1427, %v1419
    %v1948 = vpack.c.b16 %v1428, %v1420
    %v1949 = vpack.c.b16 %v1429, %v1421
    %v1950 = vpack.c.b16 %v1430, %v1422
    %v1951 = vpack.c.b16 %v1431, %v1423
    %v1952 = vpack.c.b16 %v1440, %v1432
    %v1953 = vpack.c.b16 %v1441, %v1433
    %v1954 = vpack.c.b16 %v1442, %v1434
    %v1955 = vpack.c.b16 %v1443, %v1435
    %v1956 = vpack.c.b16 %v1444, %v1436
    %v1957 = vpack.c.b16 %v1445, %v1437
    %v1958 = vpack.c.b16 %v1446, %v1438
    %v1959 = vpack.c.b16 %v1447, %v1439
    %v1960 = vpack.c.b16 %v1456, %v1448
    %v1961 = vpack.c.b16 %v1457, %v1449
    %v1962 = vpack.c.b16 %v1458, %v1450
    %v1963 = vpack.c.b16 %v1459, %v1451
    %v1964 = vpack.c.b16 %v1460, %v1452
    %v1965 = vpack.c.b16 %v1461, %v1453
    %v1966 = vpack.c.b16 %v1462, %v1454
    %v1967 = vpack.c.b16 %v1463, %v1455
    %v1968 = vpack.c.b16 %v1472, %v1464
    %v1969 = vpack.c.b16 %v1473, %v1465
    %v1970 = vpack.c.b16 %v1474, %v1466
    %v1971 = vpack.c.b16 %v1475, %v1467
    %v1972 = vpack.c.b16 %v1476, %v1468
    %v1973 = vpack.c.b16 %v1477, %v1469
    %v1974 = vpack.c.b16 %v1478, %v1470
    %v1975 = vpack.c.b16 %v1479, %v1471
    %v1976 = vpack.c.b16 %v1488, %v1480
    %v1977 = vpack.c.b16 %v1489, %v1481
    %v1978 = vpack.c.b16 %v1490, %v1482
    %v1979 = vpack.c.b16 %v1491, %v1483
    %v1980 = vpack.c.b16 %v1492, %v1484
    %v1981 = vpack.c.b16 %v1493, %v1485
    %v1982 = vpack.c.b16 %v1494, %v1486
    %v1983 = vpack.c.b16 %v1495, %v1487
    %v1984 = vpack.c.b16 %v1504, %v1496
    %v1985 = vpack.c.b16 %v1505, %v1497
    %v1986 = vpack.c.b16 %v1506, %v1498
    %v1987 = vpack.c.b16 %v1507, %v1499
    %v1988 = vpack.c.b16 %v1508, %v1500
    %v1989 = vpack.c.b16 %v1509, %v1501
    %v1990 = vpack.c.b16 %v1510, %v1502
    %v1991 = vpack.c.b16 %v1511, %v1503
    %v1992 = vpack.c.b16 %v1520, %v1512
    %v1993 = vpack.c.b16 %v1521, %v1513
    %v1994 = vpack.c.b16 %v1522, %v1514
    %v1995 = vpack.c.b16 %v1523, %v1515
    %v1996 = vpack.c.b16 %v1524, %v1516
    %v1997 = vpack.c.b16 %v1525, %v1517
    %v1998 = vpack.c.b16 %v1526, %v1518
    %v1999 = vpack.c.b16 %v1527, %v1519
    %v2000 = vpack.c.b16 %v1536, %v1528
    %v2001 = vpack.c.b16 %v1537, %v1529
    %v2002 = vpack.c.b16 %v1538, %v1530
    %v2003 = vpack.c.b16 %v1539, %v1531
    %v2004 = vpack.c.b16 %v1540, %v1532
    %v2005 = vpack.c.b16 %v1541, %v1533
    %v2006 = vpack.c.b16 %v1542, %v1534
    %v2007 = vpack.c.b16 %v1543, %v1535
    %v2008 = vpack.c.b16 %v1552, %v1544
    %v2009 = vpack.c.b16 %v1553, %v1545
    %v2010 = vpack.c.b16 %v1554, %v1546
    %v2011 = vpack.c.b16 %v1555, %v1547
    %v2012 = vpack.c.b16 %v1556, %v1548
    %v2013 = vpack.c.b16 %v1557, %v1549
    %v2014 = vpack.c.b16 %v1558, %v1550
    %v2015 = vpack.c.b16 %v1559, %v1551
    %v2016 = vpack.c.b16 %v1568, %v1560
    %v2017 = vpack.c.b16 %v1569, %v1561
    %v2018 = vpack.c.b16 %v1570, %v1562
    %v2019 = vpack.c.b16 %v1571, %v1563
    %v2020 = vpack.c.b16 %v1572, %v1564
    %v2021 = vpack.c.b16 %v1573, %v1565
    %v2022 = vpack.c.b16 %v1574, %v1566
    %v2023 = vpack.c.b16 %v1575, %v1567
    %v2024 = vpack.c.b16 %v1584, %v1576
    %v2025 = vpack.c.b16 %v1585, %v1577
    %v2026 = vpack.c.b16 %v1586, %v1578
    %v2027 = vpack.c.b16 %v1587, %v1579
    %v2028 = vpack.c.b16 %v1588, %v1580
    %v2029 = vpack.c.b16 %v1589, %v1581
    %v2030 = vpack.c.b16 %v1590, %v1582
    %v2031 = vpack.c.b16 %v1591, %v1583
    %v2032 = vpack.c.b16 %v1600, %v1592
    %v2033 = vpack.c.b16 %v1601, %v1593
    %v2034 = vpack.c.b16 %v1602, %v1594
    %v2035 = vpack.c.b16 %v1603, %v1595
    %v2036 = vpack.c.b16 %v1604, %v1596
    %v2037 = vpack.c.b16 %v1605, %v1597
    %v2038 = vpack.c.b16 %v1606, %v1598
    %v2039 = vpack.c.b16 %v1607, %v1599
    %v2040 = vpack.c.b16 %v1616, %v1608
    %v2041 = vpack.c.b16 %v1617, %v1609
    %v2042 = vpack.c.b16 %v1618, %v1610
    %v2043 = vpack.c.b16 %v1619, %v1611
    %v2044 = vpack.c.b16 %v1620, %v1612
    %v2045 = vpack.c.b16 %v1621, %v1613
    %v2046 = vpack.c.b16 %v1622, %v1614
    %v2047 = vpack.c.b16 %v1623, %v1615
    %v2048 = vpack.c.b16 %v1632, %v1624
    %v2049 = vpack.c.b16 %v1633, %v1625
    %v2050 = vpack.c.b16 %v1634, %v1626
    %v2051 = vpack.c.b16 %v1635, %v1627
    %v2052 = vpack.c.b16 %v1636, %v1628
    %v2053 = vpack.c.b16 %v1637, %v1629
    %v2054 = vpack.c.b16 %v1638, %v1630
    %v2055 = vpack.c.b16 %v1639, %v1631
    %v2056 = vpack.c.b16 %v1648, %v1640
    %v2057 = vpack.c.b16 %v1649, %v1641
    %v2058 = vpack.c.b16 %v1650, %v1642
    %v2059 = vpack.c.b16 %v1651, %v1643
    %v2060 = vpack.c.b16 %v1652, %v1644
    %v2061 = vpack.c.b16 %v1653, %v1645
    %v2062 = vpack.c.b16 %v1654, %v1646
    %v2063 = vpack.c.b16 %v1655, %v1647
    %v2064 = vpack.c.b16 %v1664, %v1656
    %v2065 = vpack.c.b16 %v1665, %v1657
    %v2066 = vpack.c.b16 %v1666, %v1658
    %v2067 = vpack.c.b16 %v1667, %v1659
    %v2068 = vpack.c.b16 %v1668, %v1660
    %v2069 = vpack.c.b16 %v1669, %v1661
    %v2070 = vpack.c.b16 %v1670, %v1662
    %v2071 = vpack.c.b16 %v1671, %v1663
    %v2072 = vpack.c.b16 %v1680, %v1672
    %v2073 = vpack.c.b16 %v1681, %v1673
    %v2074 = vpack.c.b16 %v1682, %v1674
    %v2075 = vpack.c.b16 %v1683, %v1675
    %v2076 = vpack.c.b16 %v1684, %v1676
    %v2077 = vpack.c.b16 %v1685, %v1677
    %v2078 = vpack.c.b16 %v1686, %v1678
    %v2079 = vpack.c.b16 %v1687, %v1679
    %v2080 = vpack.c.b16 %v1696, %v1688
    %v2081 = vpack.c.b16 %v1697, %v1689
    %v2082 = vpack.c.b16 %v1698, %v1690
    %v2083 = vpack.c.b16 %v1699, %v1691
    %v2084 = vpack.c.b16 %v1700, %v1692
    %v2085 = vpack.c.b16 %v1701, %v1693
    %v2086 = vpack.c.b16 %v1702, %v1694
    %v2087 = vpack.c.b16 %v1703, %v1695
    %2472 = vmatprep.subr.bf16.mxu0 %v1705
    %2473 = vmatpush1.bf16.msra.mxu0 %v1704
    %2474 = vmatprep.subr.bf16.mxu0 %v1713
    %2475 = vmatpush1.bf16.msra.mxu0 %v1712
    %2476 = vmatprep.subr.bf16.mxu0 %v1721
    %2477 = vmatpush1.bf16.msra.mxu0 %v1720
    %2478 = vmatprep.subr.bf16.mxu0 %v1729
    %2479 = vmatpush1.bf16.msra.mxu0 %v1728
    %2480 = vmatprep.subr.bf16.mxu0 %v1737
    %2481 = vmatpush1.bf16.msra.mxu0 %v1736
    %2482 = vmatprep.subr.bf16.mxu0 %v1745
    %2483 = vmatpush1.bf16.msra.mxu0 %v1744
    %2484 = vmatprep.subr.bf16.mxu0 %v1753
    %2485 = vmatpush1.bf16.msra.mxu0 %v1752
    %2486 = vmatprep.subr.bf16.mxu0 %v1761
    %2487 = vmatpush1.bf16.msra.mxu0 %v1760
    %2488 = vmatprep.subr.bf16.mxu0 %v1769
    %2489 = vmatpush1.bf16.msra.mxu0 %v1768
    %2490 = vmatprep.subr.bf16.mxu0 %v1777
    %2491 = vmatpush1.bf16.msra.mxu0 %v1776
    %2492 = vmatprep.subr.bf16.mxu0 %v1785
    %2493 = vmatpush1.bf16.msra.mxu0 %v1784
    %2494 = vmatprep.subr.bf16.mxu0 %v1793
    %2495 = vmatpush1.bf16.msra.mxu0 %v1792
    %2496 = vmatprep.subr.bf16.mxu0 %v1801
    %2497 = vmatpush1.bf16.msra.mxu0 %v1800
    %2498 = vmatprep.subr.bf16.mxu0 %v1809
    %2499 = vmatpush1.bf16.msra.mxu0 %v1808
    %2500 = vmatprep.subr.bf16.mxu0 %v1817
    %2501 = vmatpush1.bf16.msra.mxu0 %v1816
    %2502 = vmatprep.subr.bf16.mxu0 %v1825
    %2503 = vmatpush1.bf16.msra.mxu0 %v1824
    %2504 = vmatprep.mubr.bf16.mxu0 %v529
    %2505 = vmatmul.mubr.bf16.gmra.mrb[0].mxu0 %v528
    %v2506 = vpop.f32.mrb[0].mxu0
    %v2507 = vadd.f32 %v455, %v2506
    %v2508 = vpop.f32.mrb[0].mxu0
    %v2509 = vadd.f32 %v459, %v2508
    %v2510 = vpop.f32.mrb[0].mxu0
    %v2511 = vadd.f32 %v455, %v2510
    %v2512 = vpop.f32.mrb[0].mxu0
    %v2513 = vadd.f32 %v459, %v2512
    %2514 = vmatprep.mubr.bf16.mxu0 %v535
    %2515 = vmatmul.mubr.bf16.gmra.mrb[0].mxu0 %v534
    %v2516 = vpop.f32.mrb[0].mxu0
    %v2517 = vadd.f32 %v455, %v2516
    %v2518 = vpop.f32.mrb[0].mxu0
    %v2519 = vadd.f32 %v459, %v2518
    %v2520 = vpop.f32.mrb[0].mxu0
    %v2521 = vadd.f32 %v455, %v2520
    %v2522 = vpop.f32.mrb[0].mxu0
    %v2523 = vadd.f32 %v459, %v2522
    %2524 = vdwg.mxu0
    %2525 = vmatprep.subr.bf16.mxu0 %v1833
    %2526 = vmatpush1.bf16.msra.mxu0 %v1832
    %2527 = vmatprep.subr.bf16.mxu0 %v1841
    %2528 = vmatpush1.bf16.msra.mxu0 %v1840
    %2529 = vmatprep.subr.bf16.mxu0 %v1849
    %2530 = vmatpush1.bf16.msra.mxu0 %v1848
    %2531 = vmatprep.subr.bf16.mxu0 %v1857
    %2532 = vmatpush1.bf16.msra.mxu0 %v1856
    %2533 = vmatprep.subr.bf16.mxu0 %v1865
    %2534 = vmatpush1.bf16.msra.mxu0 %v1864
    %2535 = vmatprep.subr.bf16.mxu0 %v1873
    %2536 = vmatpush1.bf16.msra.mxu0 %v1872
    %2537 = vmatprep.subr.bf16.mxu0 %v1881
    %2538 = vmatpush1.bf16.msra.mxu0 %v1880
    %2539 = vmatprep.subr.bf16.mxu0 %v1889
    %2540 = vmatpush1.bf16.msra.mxu0 %v1888
    %2541 = vmatprep.subr.bf16.mxu0 %v1897
    %2542 = vmatpush1.bf16.msra.mxu0 %v1896
    %2543 = vmatprep.subr.bf16.mxu0 %v1905
    %2544 = vmatpush1.bf16.msra.mxu0 %v1904
    %2545 = vmatprep.subr.bf16.mxu0 %v1913
    %2546 = vmatpush1.bf16.msra.mxu0 %v1912
    %2547 = vmatprep.subr.bf16.mxu0 %v1921
    %2548 = vmatpush1.bf16.msra.mxu0 %v1920
    %2549 = vmatprep.subr.bf16.mxu0 %v1929
    %2550 = vmatpush1.bf16.msra.mxu0 %v1928
    %2551 = vmatprep.subr.bf16.mxu0 %v1937
    %2552 = vmatpush1.bf16.msra.mxu0 %v1936
    %2553 = vmatprep.subr.bf16.mxu0 %v1945
    %2554 = vmatpush1.bf16.msra.mxu0 %v1944
    %2555 = vmatprep.subr.bf16.mxu0 %v1953
    %2556 = vmatpush1.bf16.msra.mxu0 %v1952
    %2557 = vmatprep.mubr.bf16.mxu0 %v531
    %2558 = vmatmul.mubr.bf16.gmra.mrb[0].mxu0 %v530
    %v2559 = vpop.f32.mrb[0].mxu0
    %v2560 = vadd.f32 %v2507, %v2559
    %v2561 = vpop.f32.mrb[0].mxu0
    %v2562 = vadd.f32 %v2509, %v2561
    %v2563 = vpop.f32.mrb[0].mxu0
    %v2564 = vadd.f32 %v2511, %v2563
    %v2565 = vpop.f32.mrb[0].mxu0
    %v2566 = vadd.f32 %v2513, %v2565
    %2567 = vmatprep.mubr.bf16.mxu0 %v537
    %2568 = vmatmul.mubr.bf16.gmra.mrb[0].mxu0 %v536
    %v2569 = vpop.f32.mrb[0].mxu0
    %v2570 = vadd.f32 %v2517, %v2569
    %v2571 = vpop.f32.mrb[0].mxu0
    %v2572 = vadd.f32 %v2519, %v2571
    %v2573 = vpop.f32.mrb[0].mxu0
    %v2574 = vadd.f32 %v2521, %v2573
    %v2575 = vpop.f32.mrb[0].mxu0
    %v2576 = vadd.f32 %v2523, %v2575
    %2577 = vdwg.mxu0
    %2578 = vmatprep.subr.bf16.mxu0 %v1961
    %2579 = vmatpush1.bf16.msra.mxu0 %v1960
    %2580 = vmatprep.subr.bf16.mxu0 %v1969
    %2581 = vmatpush1.bf16.msra.mxu0 %v1968
    %2582 = vmatprep.subr.bf16.mxu0 %v1977
    %2583 = vmatpush1.bf16.msra.mxu0 %v1976
    %2584 = vmatprep.subr.bf16.mxu0 %v1985
    %2585 = vmatpush1.bf16.msra.mxu0 %v1984
    %2586 = vmatprep.subr.bf16.mxu0 %v1993
    %2587 = vmatpush1.bf16.msra.mxu0 %v1992
    %2588 = vmatprep.subr.bf16.mxu0 %v2001
    %2589 = vmatpush1.bf16.msra.mxu0 %v2000
    %2590 = vmatprep.subr.bf16.mxu0 %v2009
    %2591 = vmatpush1.bf16.msra.mxu0 %v2008
    %2592 = vmatprep.subr.bf16.mxu0 %v2017
    %2593 = vmatpush1.bf16.msra.mxu0 %v2016
    %2594 = vmatprep.subr.bf16.mxu0 %v2025
    %2595 = vmatpush1.bf16.msra.mxu0 %v2024
    %2596 = vmatprep.subr.bf16.mxu0 %v2033
    %2597 = vmatpush1.bf16.msra.mxu0 %v2032
    %2598 = vmatprep.subr.bf16.mxu0 %v2041
    %2599 = vmatpush1.bf16.msra.mxu0 %v2040
    %2600 = vmatprep.subr.bf16.mxu0 %v2049
    %2601 = vmatpush1.bf16.msra.mxu0 %v2048
    %2602 = vmatprep.subr.bf16.mxu0 %v2057
    %2603 = vmatpush1.bf16.msra.mxu0 %v2056
    %2604 = vmatprep.subr.bf16.mxu0 %v2065
    %2605 = vmatpush1.bf16.msra.mxu0 %v2064
    %2606 = vmatprep.subr.bf16.mxu0 %v2073
    %2607 = vmatpush1.bf16.msra.mxu0 %v2072
    %2608 = vmatprep.subr.bf16.mxu0 %v2081
    %2609 = vmatpush1.bf16.msra.mxu0 %v2080
    %2610 = vmatprep.mubr.bf16.mxu0 %v533
    %2611 = vmatmul.mubr.bf16.gmra.mrb[0].mxu0 %v532
    %v2612 = vpop.f32.mrb[0].mxu0
    %v2613 = vadd.f32 %v2560, %v2612
    %v2614 = vpop.f32.mrb[0].mxu0
    %v2615 = vadd.f32 %v2562, %v2614
    %v2616 = vpop.f32.mrb[0].mxu0
    %v2617 = vadd.f32 %v2564, %v2616
    %v2618 = vpop.f32.mrb[0].mxu0
    %v2619 = vadd.f32 %v2566, %v2618
    %2620 = vmatprep.mubr.bf16.mxu0 %v539
    %2621 = vmatmul.mubr.bf16.gmra.mrb[0].mxu0 %v538
    %v2622 = vpop.f32.mrb[0].mxu0
    %v2623 = vadd.f32 %v2570, %v2622
    %v2624 = vpop.f32.mrb[0].mxu0
    %v2625 = vadd.f32 %v2572, %v2624
    %v2626 = vpop.f32.mrb[0].mxu0
    %v2627 = vadd.f32 %v2574, %v2626
    %v2628 = vpop.f32.mrb[0].mxu0
    %v2629 = vadd.f32 %v2576, %v2628
    %2630 = vdwg.mxu0
    %2631 = vmatprep.subr.bf16.mxu0 %v1707
    %2632 = vmatpush1.bf16.msra.mxu0 %v1706
    %2633 = vmatprep.subr.bf16.mxu0 %v1715
    %2634 = vmatpush1.bf16.msra.mxu0 %v1714
    %2635 = vmatprep.subr.bf16.mxu0 %v1723
    %2636 = vmatpush1.bf16.msra.mxu0 %v1722
    %2637 = vmatprep.subr.bf16.mxu0 %v1731
    %2638 = vmatpush1.bf16.msra.mxu0 %v1730
    %2639 = vmatprep.subr.bf16.mxu0 %v1739
    %2640 = vmatpush1.bf16.msra.mxu0 %v1738
    %2641 = vmatprep.subr.bf16.mxu0 %v1747
    %2642 = vmatpush1.bf16.msra.mxu0 %v1746
    %2643 = vmatprep.subr.bf16.mxu0 %v1755
    %2644 = vmatpush1.bf16.msra.mxu0 %v1754
    %2645 = vmatprep.subr.bf16.mxu0 %v1763
    %2646 = vmatpush1.bf16.msra.mxu0 %v1762
    %2647 = vmatprep.subr.bf16.mxu0 %v1771
    %2648 = vmatpush1.bf16.msra.mxu0 %v1770
    %2649 = vmatprep.subr.bf16.mxu0 %v1779
    %2650 = vmatpush1.bf16.msra.mxu0 %v1778
    %2651 = vmatprep.subr.bf16.mxu0 %v1787
    %2652 = vmatpush1.bf16.msra.mxu0 %v1786
    %2653 = vmatprep.subr.bf16.mxu0 %v1795
    %2654 = vmatpush1.bf16.msra.mxu0 %v1794
    %2655 = vmatprep.subr.bf16.mxu0 %v1803
    %2656 = vmatpush1.bf16.msra.mxu0 %v1802
    %2657 = vmatprep.subr.bf16.mxu0 %v1811
    %2658 = vmatpush1.bf16.msra.mxu0 %v1810
    %2659 = vmatprep.subr.bf16.mxu0 %v1819
    %2660 = vmatpush1.bf16.msra.mxu0 %v1818
    %2661 = vmatprep.subr.bf16.mxu0 %v1827
    %2662 = vmatpush1.bf16.msra.mxu0 %v1826
    %2663 = vmatprep.mubr.bf16.mxu0 %v529
    %2664 = vmatmul.mubr.bf16.gmra.mrb[0].mxu0 %v528
    %v2665 = vpop.f32.mrb[0].mxu0
    %v2666 = vadd.f32 %v463, %v2665
    %v2667 = vpop.f32.mrb[0].mxu0
    %v2668 = vadd.f32 %v467, %v2667
    %v2669 = vpop.f32.mrb[0].mxu0
    %v2670 = vadd.f32 %v463, %v2669
    %v2671 = vpop.f32.mrb[0].mxu0
    %v2672 = vadd.f32 %v467, %v2671
    %2673 = vmatprep.mubr.bf16.mxu0 %v535
    %2674 = vmatmul.mubr.bf16.gmra.mrb[0].mxu0 %v534
    %v2675 = vpop.f32.mrb[0].mxu0
    %v2676 = vadd.f32 %v463, %v2675
    %v2677 = vpop.f32.mrb[0].mxu0
    %v2678 = vadd.f32 %v467, %v2677
    %v2679 = vpop.f32.mrb[0].mxu0
    %v2680 = vadd.f32 %v463, %v2679
    %v2681 = vpop.f32.mrb[0].mxu0
    %v2682 = vadd.f32 %v467, %v2681
    %2683 = vdwg.mxu0
    %2684 = vmatprep.subr.bf16.mxu0 %v1835
    %2685 = vmatpush1.bf16.msra.mxu0 %v1834
    %2686 = vmatprep.subr.bf16.mxu0 %v1843
    %2687 = vmatpush1.bf16.msra.mxu0 %v1842
    %2688 = vmatprep.subr.bf16.mxu0 %v1851
    %2689 = vmatpush1.bf16.msra.mxu0 %v1850
    %2690 = vmatprep.subr.bf16.mxu0 %v1859
    %2691 = vmatpush1.bf16.msra.mxu0 %v1858
    %2692 = vmatprep.subr.bf16.mxu0 %v1867
    %2693 = vmatpush1.bf16.msra.mxu0 %v1866
    %2694 = vmatprep.subr.bf16.mxu0 %v1875
    %2695 = vmatpush1.bf16.msra.mxu0 %v1874
    %2696 = vmatprep.subr.bf16.mxu0 %v1883
    %2697 = vmatpush1.bf16.msra.mxu0 %v1882
    %2698 = vmatprep.subr.bf16.mxu0 %v1891
    %2699 = vmatpush1.bf16.msra.mxu0 %v1890
    %2700 = vmatprep.subr.bf16.mxu0 %v1899
    %2701 = vmatpush1.bf16.msra.mxu0 %v1898
    %2702 = vmatprep.subr.bf16.mxu0 %v1907
    %2703 = vmatpush1.bf16.msra.mxu0 %v1906
    %2704 = vmatprep.subr.bf16.mxu0 %v1915
    %2705 = vmatpush1.bf16.msra.mxu0 %v1914
    %2706 = vmatprep.subr.bf16.mxu0 %v1923
    %2707 = vmatpush1.bf16.msra.mxu0 %v1922
    %2708 = vmatprep.subr.bf16.mxu0 %v1931
    %2709 = vmatpush1.bf16.msra.mxu0 %v1930
    %2710 = vmatprep.subr.bf16.mxu0 %v1939
    %2711 = vmatpush1.bf16.msra.mxu0 %v1938
    %2712 = vmatprep.subr.bf16.mxu0 %v1947
    %2713 = vmatpush1.bf16.msra.mxu0 %v1946
    %2714 = vmatprep.subr.bf16.mxu0 %v1955
    %2715 = vmatpush1.bf16.msra.mxu0 %v1954
    %2716 = vmatprep.mubr.bf16.mxu0 %v531
    %2717 = vmatmul.mubr.bf16.gmra.mrb[0].mxu0 %v530
    %v2718 = vpop.f32.mrb[0].mxu0
    %v2719 = vadd.f32 %v2666, %v2718
    %v2720 = vpop.f32.mrb[0].mxu0
    %v2721 = vadd.f32 %v2668, %v2720
    %v2722 = vpop.f32.mrb[0].mxu0
    %v2723 = vadd.f32 %v2670, %v2722
    %v2724 = vpop.f32.mrb[0].mxu0
    %v2725 = vadd.f32 %v2672, %v2724
    %2726 = vmatprep.mubr.bf16.mxu0 %v537
    %2727 = vmatmul.mubr.bf16.gmra.mrb[0].mxu0 %v536
    %v2728 = vpop.f32.mrb[0].mxu0
    %v2729 = vadd.f32 %v2676, %v2728
    %v2730 = vpop.f32.mrb[0].mxu0
    %v2731 = vadd.f32 %v2678, %v2730
    %v2732 = vpop.f32.mrb[0].mxu0
    %v2733 = vadd.f32 %v2680, %v2732
    %v2734 = vpop.f32.mrb[0].mxu0
    %v2735 = vadd.f32 %v2682, %v2734
    %2736 = vdwg.mxu0
    %2737 = vmatprep.subr.bf16.mxu0 %v1963
    %2738 = vmatpush1.bf16.msra.mxu0 %v1962
    %2739 = vmatprep.subr.bf16.mxu0 %v1971
    %2740 = vmatpush1.bf16.msra.mxu0 %v1970
    %2741 = vmatprep.subr.bf16.mxu0 %v1979
    %2742 = vmatpush1.bf16.msra.mxu0 %v1978
    %2743 = vmatprep.subr.bf16.mxu0 %v1987
    %2744 = vmatpush1.bf16.msra.mxu0 %v1986
    %2745 = vmatprep.subr.bf16.mxu0 %v1995
    %2746 = vmatpush1.bf16.msra.mxu0 %v1994
    %2747 = vmatprep.subr.bf16.mxu0 %v2003
    %2748 = vmatpush1.bf16.msra.mxu0 %v2002
    %2749 = vmatprep.subr.bf16.mxu0 %v2011
    %2750 = vmatpush1.bf16.msra.mxu0 %v2010
    %2751 = vmatprep.subr.bf16.mxu0 %v2019
    %2752 = vmatpush1.bf16.msra.mxu0 %v2018
    %2753 = vmatprep.subr.bf16.mxu0 %v2027
    %2754 = vmatpush1.bf16.msra.mxu0 %v2026
    %2755 = vmatprep.subr.bf16.mxu0 %v2035
    %2756 = vmatpush1.bf16.msra.mxu0 %v2034
    %2757 = vmatprep.subr.bf16.mxu0 %v2043
    %2758 = vmatpush1.bf16.msra.mxu0 %v2042
    %2759 = vmatprep.subr.bf16.mxu0 %v2051
    %2760 = vmatpush1.bf16.msra.mxu0 %v2050
    %2761 = vmatprep.subr.bf16.mxu0 %v2059
    %2762 = vmatpush1.bf16.msra.mxu0 %v2058
    %2763 = vmatprep.subr.bf16.mxu0 %v2067
    %2764 = vmatpush1.bf16.msra.mxu0 %v2066
    %2765 = vmatprep.subr.bf16.mxu0 %v2075
    %2766 = vmatpush1.bf16.msra.mxu0 %v2074
    %2767 = vmatprep.subr.bf16.mxu0 %v2083
    %2768 = vmatpush1.bf16.msra.mxu0 %v2082
    %2769 = vmatprep.mubr.bf16.mxu0 %v533
    %2770 = vmatmul.mubr.bf16.gmra.mrb[0].mxu0 %v532
    %v2771 = vpop.f32.mrb[0].mxu0
    %v2772 = vadd.f32 %v2719, %v2771
    %v2773 = vpop.f32.mrb[0].mxu0
    %v2774 = vadd.f32 %v2721, %v2773
    %v2775 = vpop.f32.mrb[0].mxu0
    %v2776 = vadd.f32 %v2723, %v2775
    %v2777 = vpop.f32.mrb[0].mxu0
    %v2778 = vadd.f32 %v2725, %v2777
    %2779 = vmatprep.mubr.bf16.mxu0 %v539
    %2780 = vmatmul.mubr.bf16.gmra.mrb[0].mxu0 %v538
    %v2781 = vpop.f32.mrb[0].mxu0
    %v2782 = vadd.f32 %v2729, %v2781
    %v2783 = vpop.f32.mrb[0].mxu0
    %v2784 = vadd.f32 %v2731, %v2783
    %v2785 = vpop.f32.mrb[0].mxu0
    %v2786 = vadd.f32 %v2733, %v2785
    %v2787 = vpop.f32.mrb[0].mxu0
    %v2788 = vadd.f32 %v2735, %v2787
    %2789 = vdwg.mxu0
    %2790 = vmatprep.subr.bf16.mxu0 %v1709
    %2791 = vmatpush1.bf16.msra.mxu0 %v1708
    %2792 = vmatprep.subr.bf16.mxu0 %v1717
    %2793 = vmatpush1.bf16.msra.mxu0 %v1716
    %2794 = vmatprep.subr.bf16.mxu0 %v1725
    %2795 = vmatpush1.bf16.msra.mxu0 %v1724
    %2796 = vmatprep.subr.bf16.mxu0 %v1733
    %2797 = vmatpush1.bf16.msra.mxu0 %v1732
    %2798 = vmatprep.subr.bf16.mxu0 %v1741
    %2799 = vmatpush1.bf16.msra.mxu0 %v1740
    %2800 = vmatprep.subr.bf16.mxu0 %v1749
    %2801 = vmatpush1.bf16.msra.mxu0 %v1748
    %2802 = vmatprep.subr.bf16.mxu0 %v1757
    %2803 = vmatpush1.bf16.msra.mxu0 %v1756
    %2804 = vmatprep.subr.bf16.mxu0 %v1765
    %2805 = vmatpush1.bf16.msra.mxu0 %v1764
    %2806 = vmatprep.subr.bf16.mxu0 %v1773
    %2807 = vmatpush1.bf16.msra.mxu0 %v1772
    %2808 = vmatprep.subr.bf16.mxu0 %v1781
    %2809 = vmatpush1.bf16.msra.mxu0 %v1780
    %2810 = vmatprep.subr.bf16.mxu0 %v1789
    %2811 = vmatpush1.bf16.msra.mxu0 %v1788
    %2812 = vmatprep.subr.bf16.mxu0 %v1797
    %2813 = vmatpush1.bf16.msra.mxu0 %v1796
    %2814 = vmatprep.subr.bf16.mxu0 %v1805
    %2815 = vmatpush1.bf16.msra.mxu0 %v1804
    %2816 = vmatprep.subr.bf16.mxu0 %v1813
    %2817 = vmatpush1.bf16.msra.mxu0 %v1812
    %2818 = vmatprep.subr.bf16.mxu0 %v1821
    %2819 = vmatpush1.bf16.msra.mxu0 %v1820
    %2820 = vmatprep.subr.bf16.mxu0 %v1829
    %2821 = vmatpush1.bf16.msra.mxu0 %v1828
    %2822 = vmatprep.mubr.bf16.mxu0 %v529
    %2823 = vmatmul.mubr.bf16.gmra.mrb[0].mxu0 %v528
    %v2824 = vpop.f32.mrb[0].mxu0
    %v2825 = vadd.f32 %v471, %v2824
    %v2826 = vpop.f32.mrb[0].mxu0
    %v2827 = vadd.f32 %v475, %v2826
    %v2828 = vpop.f32.mrb[0].mxu0
    %v2829 = vadd.f32 %v471, %v2828
    %v2830 = vpop.f32.mrb[0].mxu0
    %v2831 = vadd.f32 %v475, %v2830
    %2832 = vmatprep.mubr.bf16.mxu0 %v535
    %2833 = vmatmul.mubr.bf16.gmra.mrb[0].mxu0 %v534
    %v2834 = vpop.f32.mrb[0].mxu0
    %v2835 = vadd.f32 %v471, %v2834
    %v2836 = vpop.f32.mrb[0].mxu0
    %v2837 = vadd.f32 %v475, %v2836
    %v2838 = vpop.f32.mrb[0].mxu0
    %v2839 = vadd.f32 %v471, %v2838
    %v2840 = vpop.f32.mrb[0].mxu0
    %v2841 = vadd.f32 %v475, %v2840
    %2842 = vdwg.mxu0
    %2843 = vmatprep.subr.bf16.mxu0 %v1837
    %2844 = vmatpush1.bf16.msra.mxu0 %v1836
    %2845 = vmatprep.subr.bf16.mxu0 %v1845
    %2846 = vmatpush1.bf16.msra.mxu0 %v1844
    %2847 = vmatprep.subr.bf16.mxu0 %v1853
    %2848 = vmatpush1.bf16.msra.mxu0 %v1852
    %2849 = vmatprep.subr.bf16.mxu0 %v1861
    %2850 = vmatpush1.bf16.msra.mxu0 %v1860
    %2851 = vmatprep.subr.bf16.mxu0 %v1869
    %2852 = vmatpush1.bf16.msra.mxu0 %v1868
    %2853 = vmatprep.subr.bf16.mxu0 %v1877
    %2854 = vmatpush1.bf16.msra.mxu0 %v1876
    %2855 = vmatprep.subr.bf16.mxu0 %v1885
    %2856 = vmatpush1.bf16.msra.mxu0 %v1884
    %2857 = vmatprep.subr.bf16.mxu0 %v1893
    %2858 = vmatpush1.bf16.msra.mxu0 %v1892
    %2859 = vmatprep.subr.bf16.mxu0 %v1901
    %2860 = vmatpush1.bf16.msra.mxu0 %v1900
    %2861 = vmatprep.subr.bf16.mxu0 %v1909
    %2862 = vmatpush1.bf16.msra.mxu0 %v1908
    %2863 = vmatprep.subr.bf16.mxu0 %v1917
    %2864 = vmatpush1.bf16.msra.mxu0 %v1916
    %2865 = vmatprep.subr.bf16.mxu0 %v1925
    %2866 = vmatpush1.bf16.msra.mxu0 %v1924
    %2867 = vmatprep.subr.bf16.mxu0 %v1933
    %2868 = vmatpush1.bf16.msra.mxu0 %v1932
    %2869 = vmatprep.subr.bf16.mxu0 %v1941
    %2870 = vmatpush1.bf16.msra.mxu0 %v1940
    %2871 = vmatprep.subr.bf16.mxu0 %v1949
    %2872 = vmatpush1.bf16.msra.mxu0 %v1948
    %2873 = vmatprep.subr.bf16.mxu0 %v1957
    %2874 = vmatpush1.bf16.msra.mxu0 %v1956
    %2875 = vmatprep.mubr.bf16.mxu0 %v531
    %2876 = vmatmul.mubr.bf16.gmra.mrb[0].mxu0 %v530
    %v2877 = vpop.f32.mrb[0].mxu0
    %v2878 = vadd.f32 %v2825, %v2877
    %v2879 = vpop.f32.mrb[0].mxu0
    %v2880 = vadd.f32 %v2827, %v2879
    %v2881 = vpop.f32.mrb[0].mxu0
    %v2882 = vadd.f32 %v2829, %v2881
    %v2883 = vpop.f32.mrb[0].mxu0
    %v2884 = vadd.f32 %v2831, %v2883
    %2885 = vmatprep.mubr.bf16.mxu0 %v537
    %2886 = vmatmul.mubr.bf16.gmra.mrb[0].mxu0 %v536
    %v2887 = vpop.f32.mrb[0].mxu0
    %v2888 = vadd.f32 %v2835, %v2887
    %v2889 = vpop.f32.mrb[0].mxu0
    %v2890 = vadd.f32 %v2837, %v2889
    %v2891 = vpop.f32.mrb[0].mxu0
    %v2892 = vadd.f32 %v2839, %v2891
    %v2893 = vpop.f32.mrb[0].mxu0
    %v2894 = vadd.f32 %v2841, %v2893
    %2895 = vdwg.mxu0
    %2896 = vmatprep.subr.bf16.mxu0 %v1965
    %2897 = vmatpush1.bf16.msra.mxu0 %v1964
    %2898 = vmatprep.subr.bf16.mxu0 %v1973
    %2899 = vmatpush1.bf16.msra.mxu0 %v1972
    %2900 = vmatprep.subr.bf16.mxu0 %v1981
    %2901 = vmatpush1.bf16.msra.mxu0 %v1980
    %2902 = vmatprep.subr.bf16.mxu0 %v1989
    %2903 = vmatpush1.bf16.msra.mxu0 %v1988
    %2904 = vmatprep.subr.bf16.mxu0 %v1997
    %2905 = vmatpush1.bf16.msra.mxu0 %v1996
    %2906 = vmatprep.subr.bf16.mxu0 %v2005
    %2907 = vmatpush1.bf16.msra.mxu0 %v2004
    %2908 = vmatprep.subr.bf16.mxu0 %v2013
    %2909 = vmatpush1.bf16.msra.mxu0 %v2012
    %2910 = vmatprep.subr.bf16.mxu0 %v2021
    %2911 = vmatpush1.bf16.msra.mxu0 %v2020
    %2912 = vmatprep.subr.bf16.mxu0 %v2029
    %2913 = vmatpush1.bf16.msra.mxu0 %v2028
    %2914 = vmatprep.subr.bf16.mxu0 %v2037
    %2915 = vmatpush1.bf16.msra.mxu0 %v2036
    %2916 = vmatprep.subr.bf16.mxu0 %v2045
    %2917 = vmatpush1.bf16.msra.mxu0 %v2044
    %2918 = vmatprep.subr.bf16.mxu0 %v2053
    %2919 = vmatpush1.bf16.msra.mxu0 %v2052
    %2920 = vmatprep.subr.bf16.mxu0 %v2061
    %2921 = vmatpush1.bf16.msra.mxu0 %v2060
    %2922 = vmatprep.subr.bf16.mxu0 %v2069
    %2923 = vmatpush1.bf16.msra.mxu0 %v2068
    %2924 = vmatprep.subr.bf16.mxu0 %v2077
    %2925 = vmatpush1.bf16.msra.mxu0 %v2076
    %2926 = vmatprep.subr.bf16.mxu0 %v2085
    %2927 = vmatpush1.bf16.msra.mxu0 %v2084
    %2928 = vmatprep.mubr.bf16.mxu0 %v533
    %2929 = vmatmul.mubr.bf16.gmra.mrb[0].mxu0 %v532
    %v2930 = vpop.f32.mrb[0].mxu0
    %v2931 = vadd.f32 %v2878, %v2930
    %v2932 = vpop.f32.mrb[0].mxu0
    %v2933 = vadd.f32 %v2880, %v2932
    %v2934 = vpop.f32.mrb[0].mxu0
    %v2935 = vadd.f32 %v2882, %v2934
    %v2936 = vpop.f32.mrb[0].mxu0
    %v2937 = vadd.f32 %v2884, %v2936
    %2938 = vmatprep.mubr.bf16.mxu0 %v539
    %2939 = vmatmul.mubr.bf16.gmra.mrb[0].mxu0 %v538
    %v2940 = vpop.f32.mrb[0].mxu0
    %v2941 = vadd.f32 %v2888, %v2940
    %v2942 = vpop.f32.mrb[0].mxu0
    %v2943 = vadd.f32 %v2890, %v2942
    %v2944 = vpop.f32.mrb[0].mxu0
    %v2945 = vadd.f32 %v2892, %v2944
    %v2946 = vpop.f32.mrb[0].mxu0
    %v2947 = vadd.f32 %v2894, %v2946
    %2948 = vdwg.mxu0
    %2949 = vmatprep.subr.bf16.mxu0 %v1711
    %2950 = vmatpush1.bf16.msra.mxu0 %v1710
    %2951 = vmatprep.subr.bf16.mxu0 %v1719
    %2952 = vmatpush1.bf16.msra.mxu0 %v1718
    %2953 = vmatprep.subr.bf16.mxu0 %v1727
    %2954 = vmatpush1.bf16.msra.mxu0 %v1726
    %2955 = vmatprep.subr.bf16.mxu0 %v1735
    %2956 = vmatpush1.bf16.msra.mxu0 %v1734
    %2957 = vmatprep.subr.bf16.mxu0 %v1743
    %2958 = vmatpush1.bf16.msra.mxu0 %v1742
    %2959 = vmatprep.subr.bf16.mxu0 %v1751
    %2960 = vmatpush1.bf16.msra.mxu0 %v1750
    %2961 = vmatprep.subr.bf16.mxu0 %v1759
    %2962 = vmatpush1.bf16.msra.mxu0 %v1758
    %2963 = vmatprep.subr.bf16.mxu0 %v1767
    %2964 = vmatpush1.bf16.msra.mxu0 %v1766
    %2965 = vmatprep.subr.bf16.mxu0 %v1775
    %2966 = vmatpush1.bf16.msra.mxu0 %v1774
    %2967 = vmatprep.subr.bf16.mxu0 %v1783
    %2968 = vmatpush1.bf16.msra.mxu0 %v1782
    %2969 = vmatprep.subr.bf16.mxu0 %v1791
    %2970 = vmatpush1.bf16.msra.mxu0 %v1790
    %2971 = vmatprep.subr.bf16.mxu0 %v1799
    %2972 = vmatpush1.bf16.msra.mxu0 %v1798
    %2973 = vmatprep.subr.bf16.mxu0 %v1807
    %2974 = vmatpush1.bf16.msra.mxu0 %v1806
    %2975 = vmatprep.subr.bf16.mxu0 %v1815
    %2976 = vmatpush1.bf16.msra.mxu0 %v1814
    %2977 = vmatprep.subr.bf16.mxu0 %v1823
    %2978 = vmatpush1.bf16.msra.mxu0 %v1822
    %2979 = vmatprep.subr.bf16.mxu0 %v1831
    %2980 = vmatpush1.bf16.msra.mxu0 %v1830
    %2981 = vmatprep.mubr.bf16.mxu0 %v529
    %2982 = vmatmul.mubr.bf16.gmra.mrb[0].mxu0 %v528
    %v2983 = vpop.f32.mrb[0].mxu0
    %v2984 = vadd.f32 %v479, %v2983
    %v2985 = vpop.f32.mrb[0].mxu0
    %v2986 = vadd.f32 %v483, %v2985
    %v2987 = vpop.f32.mrb[0].mxu0
    %v2988 = vadd.f32 %v479, %v2987
    %v2989 = vpop.f32.mrb[0].mxu0
    %v2990 = vadd.f32 %v483, %v2989
    %2991 = vmatprep.mubr.bf16.mxu0 %v535
    %2992 = vmatmul.mubr.bf16.gmra.mrb[0].mxu0 %v534
    %v2993 = vpop.f32.mrb[0].mxu0
    %v2994 = vadd.f32 %v479, %v2993
    %v2995 = vpop.f32.mrb[0].mxu0
    %v2996 = vadd.f32 %v483, %v2995
    %v2997 = vpop.f32.mrb[0].mxu0
    %v2998 = vadd.f32 %v479, %v2997
    %v2999 = vpop.f32.mrb[0].mxu0
    %v3000 = vadd.f32 %v483, %v2999
    %3001 = vdwg.mxu0
    %3002 = vmatprep.subr.bf16.mxu0 %v1839
    %3003 = vmatpush1.bf16.msra.mxu0 %v1838
    %3004 = vmatprep.subr.bf16.mxu0 %v1847
    %3005 = vmatpush1.bf16.msra.mxu0 %v1846
    %3006 = vmatprep.subr.bf16.mxu0 %v1855
    %3007 = vmatpush1.bf16.msra.mxu0 %v1854
    %3008 = vmatprep.subr.bf16.mxu0 %v1863
    %3009 = vmatpush1.bf16.msra.mxu0 %v1862
    %3010 = vmatprep.subr.bf16.mxu0 %v1871
    %3011 = vmatpush1.bf16.msra.mxu0 %v1870
    %3012 = vmatprep.subr.bf16.mxu0 %v1879
    %3013 = vmatpush1.bf16.msra.mxu0 %v1878
    %3014 = vmatprep.subr.bf16.mxu0 %v1887
    %3015 = vmatpush1.bf16.msra.mxu0 %v1886
    %3016 = vmatprep.subr.bf16.mxu0 %v1895
    %3017 = vmatpush1.bf16.msra.mxu0 %v1894
    %3018 = vmatprep.subr.bf16.mxu0 %v1903
    %3019 = vmatpush1.bf16.msra.mxu0 %v1902
    %3020 = vmatprep.subr.bf16.mxu0 %v1911
    %3021 = vmatpush1.bf16.msra.mxu0 %v1910
    %3022 = vmatprep.subr.bf16.mxu0 %v1919
    %3023 = vmatpush1.bf16.msra.mxu0 %v1918
    %3024 = vmatprep.subr.bf16.mxu0 %v1927
    %3025 = vmatpush1.bf16.msra.mxu0 %v1926
    %3026 = vmatprep.subr.bf16.mxu0 %v1935
    %3027 = vmatpush1.bf16.msra.mxu0 %v1934
    %3028 = vmatprep.subr.bf16.mxu0 %v1943
    %3029 = vmatpush1.bf16.msra.mxu0 %v1942
    %3030 = vmatprep.subr.bf16.mxu0 %v1951
    %3031 = vmatpush1.bf16.msra.mxu0 %v1950
    %3032 = vmatprep.subr.bf16.mxu0 %v1959
    %3033 = vmatpush1.bf16.msra.mxu0 %v1958
    %3034 = vmatprep.mubr.bf16.mxu0 %v531
    %3035 = vmatmul.mubr.bf16.gmra.mrb[0].mxu0 %v530
    %v3036 = vpop.f32.mrb[0].mxu0
    %v3037 = vadd.f32 %v2984, %v3036
    %v3038 = vpop.f32.mrb[0].mxu0
    %v3039 = vadd.f32 %v2986, %v3038
    %v3040 = vpop.f32.mrb[0].mxu0
    %v3041 = vadd.f32 %v2988, %v3040
    %v3042 = vpop.f32.mrb[0].mxu0
    %v3043 = vadd.f32 %v2990, %v3042
    %3044 = vmatprep.mubr.bf16.mxu0 %v537
    %3045 = vmatmul.mubr.bf16.gmra.mrb[0].mxu0 %v536
    %v3046 = vpop.f32.mrb[0].mxu0
    %v3047 = vadd.f32 %v2994, %v3046
    %v3048 = vpop.f32.mrb[0].mxu0
    %v3049 = vadd.f32 %v2996, %v3048
    %v3050 = vpop.f32.mrb[0].mxu0
    %v3051 = vadd.f32 %v2998, %v3050
    %v3052 = vpop.f32.mrb[0].mxu0
    %v3053 = vadd.f32 %v3000, %v3052
    %3054 = vdwg.mxu0
    %3055 = vmatprep.subr.bf16.mxu0 %v1967
    %3056 = vmatpush1.bf16.msra.mxu0 %v1966
    %3057 = vmatprep.subr.bf16.mxu0 %v1975
    %3058 = vmatpush1.bf16.msra.mxu0 %v1974
    %3059 = vmatprep.subr.bf16.mxu0 %v1983
    %3060 = vmatpush1.bf16.msra.mxu0 %v1982
    %3061 = vmatprep.subr.bf16.mxu0 %v1991
    %3062 = vmatpush1.bf16.msra.mxu0 %v1990
    %3063 = vmatprep.subr.bf16.mxu0 %v1999
    %3064 = vmatpush1.bf16.msra.mxu0 %v1998
    %3065 = vmatprep.subr.bf16.mxu0 %v2007
    %3066 = vmatpush1.bf16.msra.mxu0 %v2006
    %3067 = vmatprep.subr.bf16.mxu0 %v2015
    %3068 = vmatpush1.bf16.msra.mxu0 %v2014
    %3069 = vmatprep.subr.bf16.mxu0 %v2023
    %3070 = vmatpush1.bf16.msra.mxu0 %v2022
    %3071 = vmatprep.subr.bf16.mxu0 %v2031
    %3072 = vmatpush1.bf16.msra.mxu0 %v2030
    %3073 = vmatprep.subr.bf16.mxu0 %v2039
    %3074 = vmatpush1.bf16.msra.mxu0 %v2038
    %3075 = vmatprep.subr.bf16.mxu0 %v2047
    %3076 = vmatpush1.bf16.msra.mxu0 %v2046
    %3077 = vmatprep.subr.bf16.mxu0 %v2055
    %3078 = vmatpush1.bf16.msra.mxu0 %v2054
    %3079 = vmatprep.subr.bf16.mxu0 %v2063
    %3080 = vmatpush1.bf16.msra.mxu0 %v2062
    %3081 = vmatprep.subr.bf16.mxu0 %v2071
    %3082 = vmatpush1.bf16.msra.mxu0 %v2070
    %3083 = vmatprep.subr.bf16.mxu0 %v2079
    %3084 = vmatpush1.bf16.msra.mxu0 %v2078
    %3085 = vmatprep.subr.bf16.mxu0 %v2087
    %3086 = vmatpush1.bf16.msra.mxu0 %v2086
    %3087 = vmatprep.mubr.bf16.mxu0 %v533
    %3088 = vmatmul.mubr.bf16.gmra.mrb[0].mxu0 %v532
    %v3089 = vpop.f32.mrb[0].mxu0
    %v3090 = vadd.f32 %v3037, %v3089
    %v3091 = vpop.f32.mrb[0].mxu0
    %v3092 = vadd.f32 %v3039, %v3091
    %v3093 = vpop.f32.mrb[0].mxu0
    %v3094 = vadd.f32 %v3041, %v3093
    %v3095 = vpop.f32.mrb[0].mxu0
    %v3096 = vadd.f32 %v3043, %v3095
    %3097 = vmatprep.mubr.bf16.mxu0 %v539
    %3098 = vmatmul.mubr.bf16.gmra.mrb[0].mxu0 %v538
    %v3099 = vpop.f32.mrb[0].mxu0
    %v3100 = vadd.f32 %v3047, %v3099
    %v3101 = vpop.f32.mrb[0].mxu0
    %v3102 = vadd.f32 %v3049, %v3101
    %v3103 = vpop.f32.mrb[0].mxu0
    %v3104 = vadd.f32 %v3051, %v3103
    %v3105 = vpop.f32.mrb[0].mxu0
    %v3106 = vadd.f32 %v3053, %v3105
    %3107 = vdwg.mxu0
    %v3108 = vmax.f32 %v2613, 0.0
    %v3109 = vmax.f32 %v2615, 0.0
    %v3110 = vmax.f32 %v2772, 0.0
    %v3111 = vmax.f32 %v2774, 0.0
    %v3112 = vmax.f32 %v2931, 0.0
    %v3113 = vmax.f32 %v2933, 0.0
    %v3114 = vmax.f32 %v3090, 0.0
    %v3115 = vmax.f32 %v3092, 0.0
    %v3116 = vmax.f32 %v2617, 0.0
    %v3117 = vmax.f32 %v2619, 0.0
    %v3118 = vmax.f32 %v2776, 0.0
    %v3119 = vmax.f32 %v2778, 0.0
    %v3120 = vmax.f32 %v2935, 0.0
    %v3121 = vmax.f32 %v2937, 0.0
    %v3122 = vmax.f32 %v3094, 0.0
    %v3123 = vmax.f32 %v3096, 0.0
    %v3124 = vmax.f32 %v2623, 0.0
    %v3125 = vmax.f32 %v2625, 0.0
    %v3126 = vmax.f32 %v2782, 0.0
    %v3127 = vmax.f32 %v2784, 0.0
    %v3128 = vmax.f32 %v2941, 0.0
    %v3129 = vmax.f32 %v2943, 0.0
    %v3130 = vmax.f32 %v3100, 0.0
    %v3131 = vmax.f32 %v3102, 0.0
    %v3132 = vmax.f32 %v2627, 0.0
    %v3133 = vmax.f32 %v2629, 0.0
    %v3134 = vmax.f32 %v2786, 0.0
    %v3135 = vmax.f32 %v2788, 0.0
    %v3136 = vmax.f32 %v2945, 0.0
    %v3137 = vmax.f32 %v2947, 0.0
    %v3138 = vmax.f32 %v3104, 0.0
    %v3139 = vmax.f32 %v3106, 0.0
    %v3140 = vpack.c.bf16 %v3116, %v3108
    %v3141 = vpack.c.bf16 %v3117, %v3109
    %v3142 = vpack.c.bf16 %v3118, %v3110
    %v3143 = vpack.c.bf16 %v3119, %v3111
    %v3144 = vpack.c.bf16 %v3120, %v3112
    %v3145 = vpack.c.bf16 %v3121, %v3113
    %v3146 = vpack.c.bf16 %v3122, %v3114
    %v3147 = vpack.c.bf16 %v3123, %v3115
    %v3148 = vpack.c.bf16 %v3132, %v3124
    %v3149 = vpack.c.bf16 %v3133, %v3125
    %v3150 = vpack.c.bf16 %v3134, %v3126
    %v3151 = vpack.c.bf16 %v3135, %v3127
    %v3152 = vpack.c.bf16 %v3136, %v3128
    %v3153 = vpack.c.bf16 %v3137, %v3129
    %v3154 = vpack.c.bf16 %v3138, %v3130
    %v3155 = vpack.c.bf16 %v3139, %v3131
    %v3172 = vunpack.c.l.b16 %v3140
    %v3173 = vunpack.c.l.b16 %v3141
    %v3174 = vunpack.c.l.b16 %v3142
    %v3175 = vunpack.c.l.b16 %v3143
    %v3176 = vunpack.c.l.b16 %v3144
    %v3177 = vunpack.c.l.b16 %v3145
    %v3178 = vunpack.c.l.b16 %v3146
    %v3179 = vunpack.c.l.b16 %v3147
    %v3180 = vunpack.c.h.b16 %v3140
    %v3181 = vunpack.c.h.b16 %v3141
    %v3182 = vunpack.c.h.b16 %v3142
    %v3183 = vunpack.c.h.b16 %v3143
    %v3184 = vunpack.c.h.b16 %v3144
    %v3185 = vunpack.c.h.b16 %v3145
    %v3186 = vunpack.c.h.b16 %v3146
    %v3187 = vunpack.c.h.b16 %v3147
    %v3188 = vunpack.c.l.b16 %v3148
    %v3189 = vunpack.c.l.b16 %v3149
    %v3190 = vunpack.c.l.b16 %v3150
    %v3191 = vunpack.c.l.b16 %v3151
    %v3192 = vunpack.c.l.b16 %v3152
    %v3193 = vunpack.c.l.b16 %v3153
    %v3194 = vunpack.c.l.b16 %v3154
    %v3195 = vunpack.c.l.b16 %v3155
    %v3196 = vunpack.c.h.b16 %v3148
    %v3197 = vunpack.c.h.b16 %v3149
    %v3198 = vunpack.c.h.b16 %v3150
    %v3199 = vunpack.c.h.b16 %v3151
    %v3200 = vunpack.c.h.b16 %v3152
    %v3201 = vunpack.c.h.b16 %v3153
    %v3202 = vunpack.c.h.b16 %v3154
    %v3203 = vunpack.c.h.b16 %v3155
    %v3204 = vpack.c.b16 %v3173, %v3172
    %v3205 = vpack.c.b16 %v3175, %v3174
    %v3206 = vpack.c.b16 %v3177, %v3176
    %v3207 = vpack.c.b16 %v3179, %v3178
    %v3208 = vpack.c.b16 %v3181, %v3180
    %v3209 = vpack.c.b16 %v3183, %v3182
    %v3210 = vpack.c.b16 %v3185, %v3184
    %v3211 = vpack.c.b16 %v3187, %v3186
    %v3212 = vpack.c.b16 %v3189, %v3188
    %v3213 = vpack.c.b16 %v3191, %v3190
    %v3214 = vpack.c.b16 %v3193, %v3192
    %v3215 = vpack.c.b16 %v3195, %v3194
    %v3216 = vpack.c.b16 %v3197, %v3196
    %v3217 = vpack.c.b16 %v3199, %v3198
    %v3218 = vpack.c.b16 %v3201, %v3200
    %v3219 = vpack.c.b16 %v3203, %v3202
    %3236 = vst [vmem:[#allocation8] sm:$0xff] %v3204
    %3237 = vst [vmem:[#allocation8 + $0x8] sm:$0xff] %v3205
    %3238 = vst [vmem:[#allocation8 + $0x10] sm:$0xff] %v3206
    %3239 = vst [vmem:[#allocation8 + $0x18] sm:$0xff] %v3207
    %3240 = vst [vmem:[#allocation8 + $0x20] sm:$0xff] %v3208
    %3241 = vst [vmem:[#allocation8 + $0x28] sm:$0xff] %v3209
    %3242 = vst [vmem:[#allocation8 + $0x30] sm:$0xff] %v3210
    %3243 = vst [vmem:[#allocation8 + $0x38] sm:$0xff] %v3211
    %3244 = vst [vmem:[#allocation8 + $0x40] sm:$0xff] %v3212
    %3245 = vst [vmem:[#allocation8 + $0x48] sm:$0xff] %v3213
    %3246 = vst [vmem:[#allocation8 + $0x50] sm:$0xff] %v3214
    %3247 = vst [vmem:[#allocation8 + $0x58] sm:$0xff] %v3215
    %3248 = vst [vmem:[#allocation8 + $0x60] sm:$0xff] %v3216
    %3249 = vst [vmem:[#allocation8 + $0x68] sm:$0xff] %v3217
    %3250 = vst [vmem:[#allocation8 + $0x70] sm:$0xff] %v3218
    %3251 = vst [vmem:[#allocation8 + $0x78] sm:$0xff] %v3219
    // Predicated region
    $region26: #{feature_extractor_forward.4} parent=1 // pred_check
      _
    $region27: #{feature_extractor_forward.4} parent=1 // pred_check_branch
      %3253 = sbr.rel (0) target = $region29
    $region28: #{feature_extractor_forward.4} parent=1 // pred_region
      %s3255 = ssub.s32 2048, 2048
      %3256 = vsyncadd [#allocation4], %s3255
      %s3257 = sshll.u32 [#allocation8], 4
      %s3258 = int_to_ptr.vmem [resolvable:$true] %s3257
      %3263 = dma.vmem_to_hbm [thread:$0]  %s3258, 2048, %s3, [#allocation4], 512, 512, 32
    $region29: #{feature_extractor_forward.4} parent=1 // pred_fallthru
      _
    // Predicated region
    $region30: #{feature_extractor_forward.4} parent=1 // pred_check
      _
    $region31: #{feature_extractor_forward.4} parent=1 // pred_check_branch
      %3265 = sbr.rel (0) target = $region33
    $region32: #{feature_extractor_forward.4} parent=1 // pred_region
      %3266 = dma.done [#allocation4], 2048
    $region33: #{feature_extractor_forward.4} parent=1 // pred_fallthru
      _
    %3267 = vsyncpa [#allocation3], 1
    %3268 = vsyncpa [#allocation6], 1
    %3269 = vsyncpa [#allocation4], 1

// kernel: feature_extractor_forward.3
$region0: #{feature_extractor_forward.3}
  #allocation0 [shape = 'u32[]', space=smem, size = 0x4, offset = 0x4, fixed_abs, tag = 'smem constant byte address 0x4 - core index']
  #allocation1 [shape = 'u32[144,128]{1,0:T(1,128)}', space=vmem, size = 0x12000, scoped, tag = 'internal scratch']
  %s0 = inlined_call_operand.hbm [shape: bf16[128,256], index: 0, kind: input, shape index: {}]
  %s1 = inlined_call_operand.hbm [shape: bf16[256,512], index: 1, kind: input, shape index: {}]
  %s2 = inlined_call_operand.hbm [shape: f32[1,512], index: 2, kind: input, shape index: {}]
  %s3 = inlined_call_operand.hbm [shape: bf16[128,512], index: 3, kind: output, shape index: {}]
  %s4 = sld [smem:[#allocation0]]
  $region34: #{feature_extractor_forward.3} parent=0
    _
  %s6 = ssub.s32 1, %s4
  %s7 = scalar_select 0, %s6, %s4
  $region1: #{feature_extractor_forward.3} parent=0
    #allocation2 [shape = 'u8[65536]{0}', space=vmem, size = 0x10000, scoped, tag = 'input window, operand 0, single buffered']
    #allocation3 [shape = 's32[1]{0}', space=sflag, size = 0x4, scoped, tag = 'scoped memory for feature_extractor_forward.3']
    #allocation4 [shape = 's32[1]{0}', space=sflag, size = 0x4, scoped, tag = 'scoped memory for feature_extractor_forward.3']
    #allocation5 [shape = 'u8[262144]{0}', space=vmem, size = 0x40000, scoped, tag = 'input window, operand 1, single buffered']
    #allocation6 [shape = 's32[1]{0}', space=sflag, size = 0x4, scoped, tag = 'scoped memory for feature_extractor_forward.3']
    #allocation7 [shape = 'u8[2048]{0}', space=vmem, size = 0x800, scoped, tag = 'input window, operand 2, single buffered']
    #allocation8 [shape = 'u8[131072]{0}', space=vmem, size = 0x20000, scoped, tag = 'output window, operand 0, single buffered']
    %8 = vsyncpa [#allocation3], 0
    %9 = vsyncpa [#allocation6], 0
    %10 = vsyncpa [#allocation4], 0
    // Predicated region
    $region2: #{feature_extractor_forward.3} parent=1 // pred_check
      _
    $region3: #{feature_extractor_forward.3} parent=1 // pred_check_branch
      %12 = sbr.rel (0) target = $region5
    $region4: #{feature_extractor_forward.3} parent=1 // pred_region
      %s14 = ssub.s32 2048, 2048
      %15 = vsyncadd [#allocation3], %s14
      %s16 = sshll.u32 [#allocation2], 4
      %s17 = int_to_ptr.vmem [resolvable:$true] %s16
      %22 = dma.hbm_to_vmem [thread:$0]  %s0, 2048, %s17, [#allocation3], 128, 128, 8
    $region5: #{feature_extractor_forward.3} parent=1 // pred_fallthru
      _
    // Predicated region
    $region6: #{feature_extractor_forward.3} parent=1 // pred_check
      _
    $region7: #{feature_extractor_forward.3} parent=1 // pred_check_branch
      %24 = sbr.rel (0) target = $region9
    $region8: #{feature_extractor_forward.3} parent=1 // pred_region
      %s26 = ssub.s32 8192, 8192
      %27 = vsyncadd [#allocation6], %s26
      %s28 = sshll.u32 [#allocation5], 4
      %s29 = int_to_ptr.vmem [resolvable:$true] %s28
      %34 = dma.hbm_to_vmem [thread:$0]  %s1, 8192, %s29, [#allocation6], 256, 256, 16
    $region9: #{feature_extractor_forward.3} parent=1 // pred_fallthru
      _
    // Predicated region
    $region10: #{feature_extractor_forward.3} parent=1 // pred_check
      _
    $region11: #{feature_extractor_forward.3} parent=1 // pred_check_branch
      %36 = sbr.rel (0) target = $region13
    $region12: #{feature_extractor_forward.3} parent=1 // pred_region
      %s38 = ssub.s32 64, 64
      %39 = vsyncadd [#allocation6], %s38
      %s41 = sshll.u32 [#allocation7], 4
      %s42 = int_to_ptr.vmem [resolvable:$true] %s41
      %44 = dma.hbm_to_vmem [thread:$0]  %s2, 64, %s42, [#allocation6]
    $region13: #{feature_extractor_forward.3} parent=1 // pred_fallthru
      _
    // Predicated region
    $region14: #{feature_extractor_forward.3} parent=1 // pred_check
      _
    $region15: #{feature_extractor_forward.3} parent=1 // pred_check_branch
      %46 = sbr.rel (0) target = $region17
    $region16: #{feature_extractor_forward.3} parent=1 // pred_region
      %47 = dma.done [#allocation3], 2048
    $region17: #{feature_extractor_forward.3} parent=1 // pred_fallthru
      _
    // Predicated region
    $region18: #{feature_extractor_forward.3} parent=1 // pred_check
      _
    $region19: #{feature_extractor_forward.3} parent=1 // pred_check_branch
      %49 = sbr.rel (0) target = $region21
    $region20: #{feature_extractor_forward.3} parent=1 // pred_region
      %50 = dma.done [#allocation6], 8192
    $region21: #{feature_extractor_forward.3} parent=1 // pred_fallthru
      _
    // Predicated region
    $region22: #{feature_extractor_forward.3} parent=1 // pred_check
      _
    $region23: #{feature_extractor_forward.3} parent=1 // pred_check_branch
      %52 = sbr.rel (0) target = $region25
    $region24: #{feature_extractor_forward.3} parent=1 // pred_region
      %53 = dma.done [#allocation6], 64
    $region25: #{feature_extractor_forward.3} parent=1 // pred_fallthru
      _
    %v54 = vld [vmem:[#allocation2] sm:$0xff]
    %v55 = vld [vmem:[#allocation2 + $0x8] sm:$0xff]
    %v56 = vld [vmem:[#allocation2 + $0x10] sm:$0xff]
    %v57 = vld [vmem:[#allocation2 + $0x18] sm:$0xff]
    %v58 = vld [vmem:[#allocation2 + $0x20] sm:$0xff]
    %v59 = vld [vmem:[#allocation2 + $0x28] sm:$0xff]
    %v60 = vld [vmem:[#allocation2 + $0x30] sm:$0xff]
    %v61 = vld [vmem:[#allocation2 + $0x38] sm:$0xff]
    %v62 = vld [vmem:[#allocation2 + $0x40] sm:$0xff]
    %v63 = vld [vmem:[#allocation2 + $0x48] sm:$0xff]
    %v64 = vld [vmem:[#allocation2 + $0x50] sm:$0xff]
    %v65 = vld [vmem:[#allocation2 + $0x58] sm:$0xff]
    %v66 = vld [vmem:[#allocation2 + $0x60] sm:$0xff]
    %v67 = vld [vmem:[#allocation2 + $0x68] sm:$0xff]
    %v68 = vld [vmem:[#allocation2 + $0x70] sm:$0xff]
    %v69 = vld [vmem:[#allocation2 + $0x78] sm:$0xff]
    %v70 = vld [vmem:[#allocation5] sm:$0xff]
    %v71 = vld [vmem:[#allocation5 + $0x8] sm:$0xff]
    %v72 = vld [vmem:[#allocation5 + $0x10] sm:$0xff]
    %v73 = vld [vmem:[#allocation5 + $0x18] sm:$0xff]
    %v74 = vld [vmem:[#allocation5 + $0x20] sm:$0xff]
    %v75 = vld [vmem:[#allocation5 + $0x28] sm:$0xff]
    %v76 = vld [vmem:[#allocation5 + $0x30] sm:$0xff]
    %v77 = vld [vmem:[#allocation5 + $0x38] sm:$0xff]
    %v78 = vld [vmem:[#allocation5 + $0x40] sm:$0xff]
    %v79 = vld [vmem:[#allocation5 + $0x48] sm:$0xff]
    %v80 = vld [vmem:[#allocation5 + $0x50] sm:$0xff]
    %v81 = vld [vmem:[#allocation5 + $0x58] sm:$0xff]
    %v82 = vld [vmem:[#allocation5 + $0x60] sm:$0xff]
    %v83 = vld [vmem:[#allocation5 + $0x68] sm:$0xff]
    %v84 = vld [vmem:[#allocation5 + $0x70] sm:$0xff]
    %v85 = vld [vmem:[#allocation5 + $0x78] sm:$0xff]
    %v86 = vld [vmem:[#allocation5 + $0x80] sm:$0xff]
    %v87 = vld [vmem:[#allocation5 + $0x88] sm:$0xff]
    %v88 = vld [vmem:[#allocation5 + $0x90] sm:$0xff]
    %v89 = vld [vmem:[#allocation5 + $0x98] sm:$0xff]
    %v90 = vld [vmem:[#allocation5 + $0xa0] sm:$0xff]
    %v91 = vld [vmem:[#allocation5 + $0xa8] sm:$0xff]
    %v92 = vld [vmem:[#allocation5 + $0xb0] sm:$0xff]
    %v93 = vld [vmem:[#allocation5 + $0xb8] sm:$0xff]
    %v94 = vld [vmem:[#allocation5 + $0xc0] sm:$0xff]
    %v95 = vld [vmem:[#allocation5 + $0xc8] sm:$0xff]
    %v96 = vld [vmem:[#allocation5 + $0xd0] sm:$0xff]
    %v97 = vld [vmem:[#allocation5 + $0xd8] sm:$0xff]
    %v98 = vld [vmem:[#allocation5 + $0xe0] sm:$0xff]
    %v99 = vld [vmem:[#allocation5 + $0xe8] sm:$0xff]
    %v100 = vld [vmem:[#allocation5 + $0xf0] sm:$0xff]
    %v101 = vld [vmem:[#allocation5 + $0xf8] sm:$0xff]
    %v102 = vld [vmem:[#allocation5 + $0x100] sm:$0xff]
    %v103 = vld [vmem:[#allocation5 + $0x108] sm:$0xff]
    %v104 = vld [vmem:[#allocation5 + $0x110] sm:$0xff]
    %v105 = vld [vmem:[#allocation5 + $0x118] sm:$0xff]
    %v106 = vld [vmem:[#allocation5 + $0x120] sm:$0xff]
    %v107 = vld [vmem:[#allocation5 + $0x128] sm:$0xff]
    %v108 = vld [vmem:[#allocation5 + $0x130] sm:$0xff]
    %v109 = vld [vmem:[#allocation5 + $0x138] sm:$0xff]
    %v110 = vld [vmem:[#allocation5 + $0x140] sm:$0xff]
    %v111 = vld [vmem:[#allocation5 + $0x148] sm:$0xff]
    %v112 = vld [vmem:[#allocation5 + $0x150] sm:$0xff]
    %v113 = vld [vmem:[#allocation5 + $0x158] sm:$0xff]
    %v114 = vld [vmem:[#allocation5 + $0x160] sm:$0xff]
    %v115 = vld [vmem:[#allocation5 + $0x168] sm:$0xff]
    %v116 = vld [vmem:[#allocation5 + $0x170] sm:$0xff]
    %v117 = vld [vmem:[#allocation5 + $0x178] sm:$0xff]
    %v118 = vld [vmem:[#allocation5 + $0x180] sm:$0xff]
    %v119 = vld [vmem:[#allocation5 + $0x188] sm:$0xff]
    %v120 = vld [vmem:[#allocation5 + $0x190] sm:$0xff]
    %v121 = vld [vmem:[#allocation5 + $0x198] sm:$0xff]
    %v122 = vld [vmem:[#allocation5 + $0x1a0] sm:$0xff]
    %v123 = vld [vmem:[#allocation5 + $0x1a8] sm:$0xff]
    %v124 = vld [vmem:[#allocation5 + $0x1b0] sm:$0xff]
    %v125 = vld [vmem:[#allocation5 + $0x1b8] sm:$0xff]
    %v126 = vld [vmem:[#allocation5 + $0x1c0] sm:$0xff]
    %v127 = vld [vmem:[#allocation5 + $0x1c8] sm:$0xff]
    %v128 = vld [vmem:[#allocation5 + $0x1d0] sm:$0xff]
    %v129 = vld [vmem:[#allocation5 + $0x1d8] sm:$0xff]
    %v130 = vld [vmem:[#allocation5 + $0x1e0] sm:$0xff]
    %v131 = vld [vmem:[#allocation5 + $0x1e8] sm:$0xff]
    %v132 = vld [vmem:[#allocation5 + $0x1f0] sm:$0xff]
    %v133 = vld [vmem:[#allocation5 + $0x1f8] sm:$0xff]
    %v134 = vld [vmem:[#allocation7] sm:$0xf]
    %v136 = vlaneseq
    %v137 = vshrl.u32 %v136, 7
    %v138 = vsub.s32 0, %v137
    %v139 = vrot.slane %v134, %v138
    %v140 = vlaneseq
    %v141 = vshrl.u32 %v140, 7
    %v142 = vsub.s32 1, %v141
    %v143 = vrot.slane %v134, %v142
    %v144 = vlaneseq
    %v145 = vshrl.u32 %v144, 7
    %v146 = vsub.s32 2, %v145
    %v147 = vrot.slane %v134, %v146
    %v148 = vlaneseq
    %v149 = vshrl.u32 %v148, 7
    %v150 = vsub.s32 3, %v149
    %v151 = vrot.slane %v134, %v150
    %v172 = vunpack.c.l.b16 %v54
    %v173 = vunpack.c.h.b16 %v54
    %v174 = vunpack.c.l.b16 %v55
    %v175 = vunpack.c.h.b16 %v55
    %v176 = vunpack.c.l.b16 %v56
    %v177 = vunpack.c.h.b16 %v56
    %v178 = vunpack.c.l.b16 %v57
    %v179 = vunpack.c.h.b16 %v57
    %v180 = vunpack.c.l.b16 %v58
    %v181 = vunpack.c.h.b16 %v58
    %v182 = vunpack.c.l.b16 %v59
    %v183 = vunpack.c.h.b16 %v59
    %v184 = vunpack.c.l.b16 %v60
    %v185 = vunpack.c.h.b16 %v60
    %v186 = vunpack.c.l.b16 %v61
    %v187 = vunpack.c.h.b16 %v61
    %v188 = vunpack.c.l.b16 %v62
    %v189 = vunpack.c.h.b16 %v62
    %v190 = vunpack.c.l.b16 %v63
    %v191 = vunpack.c.h.b16 %v63
    %v192 = vunpack.c.l.b16 %v64
    %v193 = vunpack.c.h.b16 %v64
    %v194 = vunpack.c.l.b16 %v65
    %v195 = vunpack.c.h.b16 %v65
    %v196 = vunpack.c.l.b16 %v66
    %v197 = vunpack.c.h.b16 %v66
    %v198 = vunpack.c.l.b16 %v67
    %v199 = vunpack.c.h.b16 %v67
    %v200 = vunpack.c.l.b16 %v68
    %v201 = vunpack.c.h.b16 %v68
    %v202 = vunpack.c.l.b16 %v69
    %v203 = vunpack.c.h.b16 %v69
    %v204 = vpack.c.b16 %v174, %v172
    %v205 = vpack.c.b16 %v175, %v173
    %v206 = vpack.c.b16 %v178, %v176
    %v207 = vpack.c.b16 %v179, %v177
    %v208 = vpack.c.b16 %v182, %v180
    %v209 = vpack.c.b16 %v183, %v181
    %v210 = vpack.c.b16 %v186, %v184
    %v211 = vpack.c.b16 %v187, %v185
    %v212 = vpack.c.b16 %v190, %v188
    %v213 = vpack.c.b16 %v191, %v189
    %v214 = vpack.c.b16 %v194, %v192
    %v215 = vpack.c.b16 %v195, %v193
    %v216 = vpack.c.b16 %v198, %v196
    %v217 = vpack.c.b16 %v199, %v197
    %v218 = vpack.c.b16 %v202, %v200
    %v219 = vpack.c.b16 %v203, %v201
    %v300 = vunpack.c.l.b16 %v70
    %v301 = vunpack.c.h.b16 %v70
    %v302 = vunpack.c.l.b16 %v71
    %v303 = vunpack.c.h.b16 %v71
    %v304 = vunpack.c.l.b16 %v72
    %v305 = vunpack.c.h.b16 %v72
    %v306 = vunpack.c.l.b16 %v73
    %v307 = vunpack.c.h.b16 %v73
    %v308 = vunpack.c.l.b16 %v74
    %v309 = vunpack.c.h.b16 %v74
    %v310 = vunpack.c.l.b16 %v75
    %v311 = vunpack.c.h.b16 %v75
    %v312 = vunpack.c.l.b16 %v76
    %v313 = vunpack.c.h.b16 %v76
    %v314 = vunpack.c.l.b16 %v77
    %v315 = vunpack.c.h.b16 %v77
    %v316 = vunpack.c.l.b16 %v78
    %v317 = vunpack.c.h.b16 %v78
    %v318 = vunpack.c.l.b16 %v79
    %v319 = vunpack.c.h.b16 %v79
    %v320 = vunpack.c.l.b16 %v80
    %v321 = vunpack.c.h.b16 %v80
    %v322 = vunpack.c.l.b16 %v81
    %v323 = vunpack.c.h.b16 %v81
    %v324 = vunpack.c.l.b16 %v82
    %v325 = vunpack.c.h.b16 %v82
    %v326 = vunpack.c.l.b16 %v83
    %v327 = vunpack.c.h.b16 %v83
    %v328 = vunpack.c.l.b16 %v84
    %v329 = vunpack.c.h.b16 %v84
    %v330 = vunpack.c.l.b16 %v85
    %v331 = vunpack.c.h.b16 %v85
    %v332 = vunpack.c.l.b16 %v86
    %v333 = vunpack.c.h.b16 %v86
    %v334 = vunpack.c.l.b16 %v87
    %v335 = vunpack.c.h.b16 %v87
    %v336 = vunpack.c.l.b16 %v88
    %v337 = vunpack.c.h.b16 %v88
    %v338 = vunpack.c.l.b16 %v89
    %v339 = vunpack.c.h.b16 %v89
    %v340 = vunpack.c.l.b16 %v90
    %v341 = vunpack.c.h.b16 %v90
    %v342 = vunpack.c.l.b16 %v91
    %v343 = vunpack.c.h.b16 %v91
    %v344 = vunpack.c.l.b16 %v92
    %v345 = vunpack.c.h.b16 %v92
    %v346 = vunpack.c.l.b16 %v93
    %v347 = vunpack.c.h.b16 %v93
    %v348 = vunpack.c.l.b16 %v94
    %v349 = vunpack.c.h.b16 %v94
    %v350 = vunpack.c.l.b16 %v95
    %v351 = vunpack.c.h.b16 %v95
    %v352 = vunpack.c.l.b16 %v96
    %v353 = vunpack.c.h.b16 %v96
    %v354 = vunpack.c.l.b16 %v97
    %v355 = vunpack.c.h.b16 %v97
    %v356 = vunpack.c.l.b16 %v98
    %v357 = vunpack.c.h.b16 %v98
    %v358 = vunpack.c.l.b16 %v99
    %v359 = vunpack.c.h.b16 %v99
    %v360 = vunpack.c.l.b16 %v100
    %v361 = vunpack.c.h.b16 %v100
    %v362 = vunpack.c.l.b16 %v101
    %v363 = vunpack.c.h.b16 %v101
    %v364 = vunpack.c.l.b16 %v102
    %v365 = vunpack.c.h.b16 %v102
    %v366 = vunpack.c.l.b16 %v103
    %v367 = vunpack.c.h.b16 %v103
    %v368 = vunpack.c.l.b16 %v104
    %v369 = vunpack.c.h.b16 %v104
    %v370 = vunpack.c.l.b16 %v105
    %v371 = vunpack.c.h.b16 %v105
    %v372 = vunpack.c.l.b16 %v106
    %v373 = vunpack.c.h.b16 %v106
    %v374 = vunpack.c.l.b16 %v107
    %v375 = vunpack.c.h.b16 %v107
    %v376 = vunpack.c.l.b16 %v108
    %v377 = vunpack.c.h.b16 %v108
    %v378 = vunpack.c.l.b16 %v109
    %v379 = vunpack.c.h.b16 %v109
    %v380 = vunpack.c.l.b16 %v110
    %v381 = vunpack.c.h.b16 %v110
    %v382 = vunpack.c.l.b16 %v111
    %v383 = vunpack.c.h.b16 %v111
    %v384 = vunpack.c.l.b16 %v112
    %v385 = vunpack.c.h.b16 %v112
    %v386 = vunpack.c.l.b16 %v113
    %v387 = vunpack.c.h.b16 %v113
    %v388 = vunpack.c.l.b16 %v114
    %v389 = vunpack.c.h.b16 %v114
    %v390 = vunpack.c.l.b16 %v115
    %v391 = vunpack.c.h.b16 %v115
    %v392 = vunpack.c.l.b16 %v116
    %v393 = vunpack.c.h.b16 %v116
    %v394 = vunpack.c.l.b16 %v117
    %v395 = vunpack.c.h.b16 %v117
    %v396 = vunpack.c.l.b16 %v118
    %v397 = vunpack.c.h.b16 %v118
    %v398 = vunpack.c.l.b16 %v119
    %v399 = vunpack.c.h.b16 %v119
    %v400 = vunpack.c.l.b16 %v120
    %v401 = vunpack.c.h.b16 %v120
    %v402 = vunpack.c.l.b16 %v121
    %v403 = vunpack.c.h.b16 %v121
    %v404 = vunpack.c.l.b16 %v122
    %v405 = vunpack.c.h.b16 %v122
    %v406 = vunpack.c.l.b16 %v123
    %v407 = vunpack.c.h.b16 %v123
    %v408 = vunpack.c.l.b16 %v124
    %v409 = vunpack.c.h.b16 %v124
    %v410 = vunpack.c.l.b16 %v125
    %v411 = vunpack.c.h.b16 %v125
    %v412 = vunpack.c.l.b16 %v126
    %v413 = vunpack.c.h.b16 %v126
    %v414 = vunpack.c.l.b16 %v127
    %v415 = vunpack.c.h.b16 %v127
    %v416 = vunpack.c.l.b16 %v128
    %v417 = vunpack.c.h.b16 %v128
    %v418 = vunpack.c.l.b16 %v129
    %v419 = vunpack.c.h.b16 %v129
    %v420 = vunpack.c.l.b16 %v130
    %v421 = vunpack.c.h.b16 %v130
    %v422 = vunpack.c.l.b16 %v131
    %v423 = vunpack.c.h.b16 %v131
    %v424 = vunpack.c.l.b16 %v132
    %v425 = vunpack.c.h.b16 %v132
    %v426 = vunpack.c.l.b16 %v133
    %v427 = vunpack.c.h.b16 %v133
    %v428 = vpack.c.b16 %v304, %v300
    %v429 = vpack.c.b16 %v305, %v301
    %v430 = vpack.c.b16 %v306, %v302
    %v431 = vpack.c.b16 %v307, %v303
    %v432 = vpack.c.b16 %v312, %v308
    %v433 = vpack.c.b16 %v313, %v309
    %v434 = vpack.c.b16 %v314, %v310
    %v435 = vpack.c.b16 %v315, %v311
    %v436 = vpack.c.b16 %v320, %v316
    %v437 = vpack.c.b16 %v321, %v317
    %v438 = vpack.c.b16 %v322, %v318
    %v439 = vpack.c.b16 %v323, %v319
    %v440 = vpack.c.b16 %v328, %v324
    %v441 = vpack.c.b16 %v329, %v325
    %v442 = vpack.c.b16 %v330, %v326
    %v443 = vpack.c.b16 %v331, %v327
    %v444 = vpack.c.b16 %v336, %v332
    %v445 = vpack.c.b16 %v337, %v333
    %v446 = vpack.c.b16 %v338, %v334
    %v447 = vpack.c.b16 %v339, %v335
    %v448 = vpack.c.b16 %v344, %v340
    %v449 = vpack.c.b16 %v345, %v341
    %v450 = vpack.c.b16 %v346, %v342
    %v451 = vpack.c.b16 %v347, %v343
    %v452 = vpack.c.b16 %v352, %v348
    %v453 = vpack.c.b16 %v353, %v349
    %v454 = vpack.c.b16 %v354, %v350
    %v455 = vpack.c.b16 %v355, %v351
    %v456 = vpack.c.b16 %v360, %v356
    %v457 = vpack.c.b16 %v361, %v357
    %v458 = vpack.c.b16 %v362, %v358
    %v459 = vpack.c.b16 %v363, %v359
    %v460 = vpack.c.b16 %v368, %v364
    %v461 = vpack.c.b16 %v369, %v365
    %v462 = vpack.c.b16 %v370, %v366
    %v463 = vpack.c.b16 %v371, %v367
    %v464 = vpack.c.b16 %v376, %v372
    %v465 = vpack.c.b16 %v377, %v373
    %v466 = vpack.c.b16 %v378, %v374
    %v467 = vpack.c.b16 %v379, %v375
    %v468 = vpack.c.b16 %v384, %v380
    %v469 = vpack.c.b16 %v385, %v381
    %v470 = vpack.c.b16 %v386, %v382
    %v471 = vpack.c.b16 %v387, %v383
    %v472 = vpack.c.b16 %v392, %v388
    %v473 = vpack.c.b16 %v393, %v389
    %v474 = vpack.c.b16 %v394, %v390
    %v475 = vpack.c.b16 %v395, %v391
    %v476 = vpack.c.b16 %v400, %v396
    %v477 = vpack.c.b16 %v401, %v397
    %v478 = vpack.c.b16 %v402, %v398
    %v479 = vpack.c.b16 %v403, %v399
    %v480 = vpack.c.b16 %v408, %v404
    %v481 = vpack.c.b16 %v409, %v405
    %v482 = vpack.c.b16 %v410, %v406
    %v483 = vpack.c.b16 %v411, %v407
    %v484 = vpack.c.b16 %v416, %v412
    %v485 = vpack.c.b16 %v417, %v413
    %v486 = vpack.c.b16 %v418, %v414
    %v487 = vpack.c.b16 %v419, %v415
    %v488 = vpack.c.b16 %v424, %v420
    %v489 = vpack.c.b16 %v425, %v421
    %v490 = vpack.c.b16 %v426, %v422
    %v491 = vpack.c.b16 %v427, %v423
    %556 = vmatprep.subr.bf16.mxu0 %v429
    %557 = vmatpush1.bf16.msra.mxu0 %v428
    %558 = vmatprep.subr.bf16.mxu0 %v433
    %559 = vmatpush1.bf16.msra.mxu0 %v432
    %560 = vmatprep.subr.bf16.mxu0 %v437
    %561 = vmatpush1.bf16.msra.mxu0 %v436
    %562 = vmatprep.subr.bf16.mxu0 %v441
    %563 = vmatpush1.bf16.msra.mxu0 %v440
    %564 = vmatprep.subr.bf16.mxu0 %v445
    %565 = vmatpush1.bf16.msra.mxu0 %v444
    %566 = vmatprep.subr.bf16.mxu0 %v449
    %567 = vmatpush1.bf16.msra.mxu0 %v448
    %568 = vmatprep.subr.bf16.mxu0 %v453
    %569 = vmatpush1.bf16.msra.mxu0 %v452
    %570 = vmatprep.subr.bf16.mxu0 %v457
    %571 = vmatpush1.bf16.msra.mxu0 %v456
    %572 = vmatprep.subr.bf16.mxu0 %v461
    %573 = vmatpush1.bf16.msra.mxu0 %v460
    %574 = vmatprep.subr.bf16.mxu0 %v465
    %575 = vmatpush1.bf16.msra.mxu0 %v464
    %576 = vmatprep.subr.bf16.mxu0 %v469
    %577 = vmatpush1.bf16.msra.mxu0 %v468
    %578 = vmatprep.subr.bf16.mxu0 %v473
    %579 = vmatpush1.bf16.msra.mxu0 %v472
    %580 = vmatprep.subr.bf16.mxu0 %v477
    %581 = vmatpush1.bf16.msra.mxu0 %v476
    %582 = vmatprep.subr.bf16.mxu0 %v481
    %583 = vmatpush1.bf16.msra.mxu0 %v480
    %584 = vmatprep.subr.bf16.mxu0 %v485
    %585 = vmatpush1.bf16.msra.mxu0 %v484
    %586 = vmatprep.subr.bf16.mxu0 %v489
    %587 = vmatpush1.bf16.msra.mxu0 %v488
    %588 = vmatprep.mubr.bf16.mxu0 %v205
    %589 = vmatmul.mubr.bf16.gmra.mrb[0].mxu0 %v204
    %v590 = vpop.f32.mrb[0].mxu0
    %v591 = vadd.f32 %v139, %v590
    %v592 = vpop.f32.mrb[0].mxu0
    %v593 = vadd.f32 %v143, %v592
    %v594 = vpop.f32.mrb[0].mxu0
    %v595 = vadd.f32 %v139, %v594
    %v596 = vpop.f32.mrb[0].mxu0
    %v597 = vadd.f32 %v143, %v596
    %598 = vmatprep.mubr.bf16.mxu0 %v207
    %599 = vmatmul.mubr.bf16.gmra.mrb[0].mxu0 %v206
    %v600 = vpop.f32.mrb[0].mxu0
    %v601 = vadd.f32 %v139, %v600
    %v602 = vpop.f32.mrb[0].mxu0
    %v603 = vadd.f32 %v143, %v602
    %v604 = vpop.f32.mrb[0].mxu0
    %v605 = vadd.f32 %v139, %v604
    %v606 = vpop.f32.mrb[0].mxu0
    %v607 = vadd.f32 %v143, %v606
    %608 = vmatprep.mubr.bf16.mxu0 %v209
    %609 = vmatmul.mubr.bf16.gmra.mrb[0].mxu0 %v208
    %v610 = vpop.f32.mrb[0].mxu0
    %v611 = vadd.f32 %v139, %v610
    %v612 = vpop.f32.mrb[0].mxu0
    %v613 = vadd.f32 %v143, %v612
    %v614 = vpop.f32.mrb[0].mxu0
    %v615 = vadd.f32 %v139, %v614
    %v616 = vpop.f32.mrb[0].mxu0
    %v617 = vadd.f32 %v143, %v616
    %618 = vmatprep.mubr.bf16.mxu0 %v211
    %619 = vmatmul.mubr.bf16.gmra.mrb[0].mxu0 %v210
    %v620 = vpop.f32.mrb[0].mxu0
    %v621 = vadd.f32 %v139, %v620
    %v622 = vpop.f32.mrb[0].mxu0
    %v623 = vadd.f32 %v143, %v622
    %v624 = vpop.f32.mrb[0].mxu0
    %v625 = vadd.f32 %v139, %v624
    %v626 = vpop.f32.mrb[0].mxu0
    %v627 = vadd.f32 %v143, %v626
    %628 = vmatprep.mubr.bf16.mxu0 %v213
    %629 = vmatmul.mubr.bf16.gmra.mrb[0].mxu0 %v212
    %v630 = vpop.f32.mrb[0].mxu0
    %v631 = vadd.f32 %v139, %v630
    %v632 = vpop.f32.mrb[0].mxu0
    %v633 = vadd.f32 %v143, %v632
    %v634 = vpop.f32.mrb[0].mxu0
    %v635 = vadd.f32 %v139, %v634
    %v636 = vpop.f32.mrb[0].mxu0
    %v637 = vadd.f32 %v143, %v636
    %638 = vmatprep.mubr.bf16.mxu0 %v215
    %639 = vmatmul.mubr.bf16.gmra.mrb[0].mxu0 %v214
    %v640 = vpop.f32.mrb[0].mxu0
    %v641 = vadd.f32 %v139, %v640
    %v642 = vpop.f32.mrb[0].mxu0
    %v643 = vadd.f32 %v143, %v642
    %v644 = vpop.f32.mrb[0].mxu0
    %v645 = vadd.f32 %v139, %v644
    %v646 = vpop.f32.mrb[0].mxu0
    %v647 = vadd.f32 %v143, %v646
    %648 = vmatprep.mubr.bf16.mxu0 %v217
    %649 = vmatmul.mubr.bf16.gmra.mrb[0].mxu0 %v216
    %v650 = vpop.f32.mrb[0].mxu0
    %v651 = vadd.f32 %v139, %v650
    %v652 = vpop.f32.mrb[0].mxu0
    %v653 = vadd.f32 %v143, %v652
    %v654 = vpop.f32.mrb[0].mxu0
    %v655 = vadd.f32 %v139, %v654
    %v656 = vpop.f32.mrb[0].mxu0
    %v657 = vadd.f32 %v143, %v656
    %658 = vmatprep.mubr.bf16.mxu0 %v219
    %659 = vmatmul.mubr.bf16.gmra.mrb[0].mxu0 %v218
    %v660 = vpop.f32.mrb[0].mxu0
    %v661 = vadd.f32 %v139, %v660
    %v662 = vpop.f32.mrb[0].mxu0
    %v663 = vadd.f32 %v143, %v662
    %v664 = vpop.f32.mrb[0].mxu0
    %v665 = vadd.f32 %v139, %v664
    %v666 = vpop.f32.mrb[0].mxu0
    %v667 = vadd.f32 %v143, %v666
    %668 = vdwg.mxu0
    %669 = vmatprep.subr.bf16.mxu0 %v431
    %670 = vmatpush1.bf16.msra.mxu0 %v430
    %671 = vmatprep.subr.bf16.mxu0 %v435
    %672 = vmatpush1.bf16.msra.mxu0 %v434
    %673 = vmatprep.subr.bf16.mxu0 %v439
    %674 = vmatpush1.bf16.msra.mxu0 %v438
    %675 = vmatprep.subr.bf16.mxu0 %v443
    %676 = vmatpush1.bf16.msra.mxu0 %v442
    %677 = vmatprep.subr.bf16.mxu0 %v447
    %678 = vmatpush1.bf16.msra.mxu0 %v446
    %679 = vmatprep.subr.bf16.mxu0 %v451
    %680 = vmatpush1.bf16.msra.mxu0 %v450
    %681 = vmatprep.subr.bf16.mxu0 %v455
    %682 = vmatpush1.bf16.msra.mxu0 %v454
    %683 = vmatprep.subr.bf16.mxu0 %v459
    %684 = vmatpush1.bf16.msra.mxu0 %v458
    %685 = vmatprep.subr.bf16.mxu0 %v463
    %686 = vmatpush1.bf16.msra.mxu0 %v462
    %687 = vmatprep.subr.bf16.mxu0 %v467
    %688 = vmatpush1.bf16.msra.mxu0 %v466
    %689 = vmatprep.subr.bf16.mxu0 %v471
    %690 = vmatpush1.bf16.msra.mxu0 %v470
    %691 = vmatprep.subr.bf16.mxu0 %v475
    %692 = vmatpush1.bf16.msra.mxu0 %v474
    %693 = vmatprep.subr.bf16.mxu0 %v479
    %694 = vmatpush1.bf16.msra.mxu0 %v478
    %695 = vmatprep.subr.bf16.mxu0 %v483
    %696 = vmatpush1.bf16.msra.mxu0 %v482
    %697 = vmatprep.subr.bf16.mxu0 %v487
    %698 = vmatpush1.bf16.msra.mxu0 %v486
    %699 = vmatprep.subr.bf16.mxu0 %v491
    %700 = vmatpush1.bf16.msra.mxu0 %v490
    %701 = vmatprep.mubr.bf16.mxu0 %v205
    %702 = vmatmul.mubr.bf16.gmra.mrb[0].mxu0 %v204
    %v703 = vpop.f32.mrb[0].mxu0
    %v704 = vadd.f32 %v147, %v703
    %v705 = vpop.f32.mrb[0].mxu0
    %v706 = vadd.f32 %v151, %v705
    %v707 = vpop.f32.mrb[0].mxu0
    %v708 = vadd.f32 %v147, %v707
    %v709 = vpop.f32.mrb[0].mxu0
    %v710 = vadd.f32 %v151, %v709
    %711 = vmatprep.mubr.bf16.mxu0 %v207
    %712 = vmatmul.mubr.bf16.gmra.mrb[0].mxu0 %v206
    %v713 = vpop.f32.mrb[0].mxu0
    %v714 = vadd.f32 %v147, %v713
    %v715 = vpop.f32.mrb[0].mxu0
    %v716 = vadd.f32 %v151, %v715
    %v717 = vpop.f32.mrb[0].mxu0
    %v718 = vadd.f32 %v147, %v717
    %v719 = vpop.f32.mrb[0].mxu0
    %v720 = vadd.f32 %v151, %v719
    %721 = vmatprep.mubr.bf16.mxu0 %v209
    %722 = vmatmul.mubr.bf16.gmra.mrb[0].mxu0 %v208
    %v723 = vpop.f32.mrb[0].mxu0
    %v724 = vadd.f32 %v147, %v723
    %v725 = vpop.f32.mrb[0].mxu0
    %v726 = vadd.f32 %v151, %v725
    %v727 = vpop.f32.mrb[0].mxu0
    %v728 = vadd.f32 %v147, %v727
    %v729 = vpop.f32.mrb[0].mxu0
    %v730 = vadd.f32 %v151, %v729
    %731 = vmatprep.mubr.bf16.mxu0 %v211
    %732 = vmatmul.mubr.bf16.gmra.mrb[0].mxu0 %v210
    %v733 = vpop.f32.mrb[0].mxu0
    %v734 = vadd.f32 %v147, %v733
    %v735 = vpop.f32.mrb[0].mxu0
    %v736 = vadd.f32 %v151, %v735
    %v737 = vpop.f32.mrb[0].mxu0
    %v738 = vadd.f32 %v147, %v737
    %v739 = vpop.f32.mrb[0].mxu0
    %v740 = vadd.f32 %v151, %v739
    %741 = vmatprep.mubr.bf16.mxu0 %v213
    %742 = vmatmul.mubr.bf16.gmra.mrb[0].mxu0 %v212
    %v743 = vpop.f32.mrb[0].mxu0
    %v744 = vadd.f32 %v147, %v743
    %v745 = vpop.f32.mrb[0].mxu0
    %v746 = vadd.f32 %v151, %v745
    %v747 = vpop.f32.mrb[0].mxu0
    %v748 = vadd.f32 %v147, %v747
    %v749 = vpop.f32.mrb[0].mxu0
    %v750 = vadd.f32 %v151, %v749
    %751 = vmatprep.mubr.bf16.mxu0 %v215
    %752 = vmatmul.mubr.bf16.gmra.mrb[0].mxu0 %v214
    %v753 = vpop.f32.mrb[0].mxu0
    %v754 = vadd.f32 %v147, %v753
    %v755 = vpop.f32.mrb[0].mxu0
    %v756 = vadd.f32 %v151, %v755
    %v757 = vpop.f32.mrb[0].mxu0
    %v758 = vadd.f32 %v147, %v757
    %v759 = vpop.f32.mrb[0].mxu0
    %v760 = vadd.f32 %v151, %v759
    %761 = vmatprep.mubr.bf16.mxu0 %v217
    %762 = vmatmul.mubr.bf16.gmra.mrb[0].mxu0 %v216
    %v763 = vpop.f32.mrb[0].mxu0
    %v764 = vadd.f32 %v147, %v763
    %v765 = vpop.f32.mrb[0].mxu0
    %v766 = vadd.f32 %v151, %v765
    %v767 = vpop.f32.mrb[0].mxu0
    %v768 = vadd.f32 %v147, %v767
    %v769 = vpop.f32.mrb[0].mxu0
    %v770 = vadd.f32 %v151, %v769
    %771 = vmatprep.mubr.bf16.mxu0 %v219
    %772 = vmatmul.mubr.bf16.gmra.mrb[0].mxu0 %v218
    %v773 = vpop.f32.mrb[0].mxu0
    %v774 = vadd.f32 %v147, %v773
    %v775 = vpop.f32.mrb[0].mxu0
    %v776 = vadd.f32 %v151, %v775
    %v777 = vpop.f32.mrb[0].mxu0
    %v778 = vadd.f32 %v147, %v777
    %v779 = vpop.f32.mrb[0].mxu0
    %v780 = vadd.f32 %v151, %v779
    %781 = vdwg.mxu0
    %v782 = vmax.f32 %v591, 0.0
    %v783 = vmax.f32 %v593, 0.0
    %v784 = vmax.f32 %v704, 0.0
    %v785 = vmax.f32 %v706, 0.0
    %v786 = vmax.f32 %v595, 0.0
    %v787 = vmax.f32 %v597, 0.0
    %v788 = vmax.f32 %v708, 0.0
    %v789 = vmax.f32 %v710, 0.0
    %v790 = vmax.f32 %v601, 0.0
    %v791 = vmax.f32 %v603, 0.0
    %v792 = vmax.f32 %v714, 0.0
    %v793 = vmax.f32 %v716, 0.0
    %v794 = vmax.f32 %v605, 0.0
    %v795 = vmax.f32 %v607, 0.0
    %v796 = vmax.f32 %v718, 0.0
    %v797 = vmax.f32 %v720, 0.0
    %v798 = vmax.f32 %v611, 0.0
    %v799 = vmax.f32 %v613, 0.0
    %v800 = vmax.f32 %v724, 0.0
    %v801 = vmax.f32 %v726, 0.0
    %v802 = vmax.f32 %v615, 0.0
    %v803 = vmax.f32 %v617, 0.0
    %v804 = vmax.f32 %v728, 0.0
    %v805 = vmax.f32 %v730, 0.0
    %v806 = vmax.f32 %v621, 0.0
    %v807 = vmax.f32 %v623, 0.0
    %v808 = vmax.f32 %v734, 0.0
    %v809 = vmax.f32 %v736, 0.0
    %v810 = vmax.f32 %v625, 0.0
    %v811 = vmax.f32 %v627, 0.0
    %v812 = vmax.f32 %v738, 0.0
    %v813 = vmax.f32 %v740, 0.0
    %v814 = vmax.f32 %v631, 0.0
    %v815 = vmax.f32 %v633, 0.0
    %v816 = vmax.f32 %v744, 0.0
    %v817 = vmax.f32 %v746, 0.0
    %v818 = vmax.f32 %v635, 0.0
    %v819 = vmax.f32 %v637, 0.0
    %v820 = vmax.f32 %v748, 0.0
    %v821 = vmax.f32 %v750, 0.0
    %v822 = vmax.f32 %v641, 0.0
    %v823 = vmax.f32 %v643, 0.0
    %v824 = vmax.f32 %v754, 0.0
    %v825 = vmax.f32 %v756, 0.0
    %v826 = vmax.f32 %v645, 0.0
    %v827 = vmax.f32 %v647, 0.0
    %v828 = vmax.f32 %v758, 0.0
    %v829 = vmax.f32 %v760, 0.0
    %v830 = vmax.f32 %v651, 0.0
    %v831 = vmax.f32 %v653, 0.0
    %v832 = vmax.f32 %v764, 0.0
    %v833 = vmax.f32 %v766, 0.0
    %v834 = vmax.f32 %v655, 0.0
    %v835 = vmax.f32 %v657, 0.0
    %v836 = vmax.f32 %v768, 0.0
    %v837 = vmax.f32 %v770, 0.0
    %v838 = vmax.f32 %v661, 0.0
    %v839 = vmax.f32 %v663, 0.0
    %v840 = vmax.f32 %v774, 0.0
    %v841 = vmax.f32 %v776, 0.0
    %v842 = vmax.f32 %v665, 0.0
    %v843 = vmax.f32 %v667, 0.0
    %v844 = vmax.f32 %v778, 0.0
    %v845 = vmax.f32 %v780, 0.0
    %v846 = vpack.c.bf16 %v786, %v782
    %v847 = vpack.c.bf16 %v787, %v783
    %v848 = vpack.c.bf16 %v788, %v784
    %v849 = vpack.c.bf16 %v789, %v785
    %v850 = vpack.c.bf16 %v794, %v790
    %v851 = vpack.c.bf16 %v795, %v791
    %v852 = vpack.c.bf16 %v796, %v792
    %v853 = vpack.c.bf16 %v797, %v793
    %v854 = vpack.c.bf16 %v802, %v798
    %v855 = vpack.c.bf16 %v803, %v799
    %v856 = vpack.c.bf16 %v804, %v800
    %v857 = vpack.c.bf16 %v805, %v801
    %v858 = vpack.c.bf16 %v810, %v806
    %v859 = vpack.c.bf16 %v811, %v807
    %v860 = vpack.c.bf16 %v812, %v808
    %v861 = vpack.c.bf16 %v813, %v809
    %v862 = vpack.c.bf16 %v818, %v814
    %v863 = vpack.c.bf16 %v819, %v815
    %v864 = vpack.c.bf16 %v820, %v816
    %v865 = vpack.c.bf16 %v821, %v817
    %v866 = vpack.c.bf16 %v826, %v822
    %v867 = vpack.c.bf16 %v827, %v823
    %v868 = vpack.c.bf16 %v828, %v824
    %v869 = vpack.c.bf16 %v829, %v825
    %v870 = vpack.c.bf16 %v834, %v830
    %v871 = vpack.c.bf16 %v835, %v831
    %v872 = vpack.c.bf16 %v836, %v832
    %v873 = vpack.c.bf16 %v837, %v833
    %v874 = vpack.c.bf16 %v842, %v838
    %v875 = vpack.c.bf16 %v843, %v839
    %v876 = vpack.c.bf16 %v844, %v840
    %v877 = vpack.c.bf16 %v845, %v841
    %v910 = vunpack.c.l.b16 %v846
    %v911 = vunpack.c.l.b16 %v847
    %v912 = vunpack.c.l.b16 %v848
    %v913 = vunpack.c.l.b16 %v849
    %v914 = vunpack.c.h.b16 %v846
    %v915 = vunpack.c.h.b16 %v847
    %v916 = vunpack.c.h.b16 %v848
    %v917 = vunpack.c.h.b16 %v849
    %v918 = vunpack.c.l.b16 %v850
    %v919 = vunpack.c.l.b16 %v851
    %v920 = vunpack.c.l.b16 %v852
    %v921 = vunpack.c.l.b16 %v853
    %v922 = vunpack.c.h.b16 %v850
    %v923 = vunpack.c.h.b16 %v851
    %v924 = vunpack.c.h.b16 %v852
    %v925 = vunpack.c.h.b16 %v853
    %v926 = vunpack.c.l.b16 %v854
    %v927 = vunpack.c.l.b16 %v855
    %v928 = vunpack.c.l.b16 %v856
    %v929 = vunpack.c.l.b16 %v857
    %v930 = vunpack.c.h.b16 %v854
    %v931 = vunpack.c.h.b16 %v855
    %v932 = vunpack.c.h.b16 %v856
    %v933 = vunpack.c.h.b16 %v857
    %v934 = vunpack.c.l.b16 %v858
    %v935 = vunpack.c.l.b16 %v859
    %v936 = vunpack.c.l.b16 %v860
    %v937 = vunpack.c.l.b16 %v861
    %v938 = vunpack.c.h.b16 %v858
    %v939 = vunpack.c.h.b16 %v859
    %v940 = vunpack.c.h.b16 %v860
    %v941 = vunpack.c.h.b16 %v861
    %v942 = vunpack.c.l.b16 %v862
    %v943 = vunpack.c.l.b16 %v863
    %v944 = vunpack.c.l.b16 %v864
    %v945 = vunpack.c.l.b16 %v865
    %v946 = vunpack.c.h.b16 %v862
    %v947 = vunpack.c.h.b16 %v863
    %v948 = vunpack.c.h.b16 %v864
    %v949 = vunpack.c.h.b16 %v865
    %v950 = vunpack.c.l.b16 %v866
    %v951 = vunpack.c.l.b16 %v867
    %v952 = vunpack.c.l.b16 %v868
    %v953 = vunpack.c.l.b16 %v869
    %v954 = vunpack.c.h.b16 %v866
    %v955 = vunpack.c.h.b16 %v867
    %v956 = vunpack.c.h.b16 %v868
    %v957 = vunpack.c.h.b16 %v869
    %v958 = vunpack.c.l.b16 %v870
    %v959 = vunpack.c.l.b16 %v871
    %v960 = vunpack.c.l.b16 %v872
    %v961 = vunpack.c.l.b16 %v873
    %v962 = vunpack.c.h.b16 %v870
    %v963 = vunpack.c.h.b16 %v871
    %v964 = vunpack.c.h.b16 %v872
    %v965 = vunpack.c.h.b16 %v873
    %v966 = vunpack.c.l.b16 %v874
    %v967 = vunpack.c.l.b16 %v875
    %v968 = vunpack.c.l.b16 %v876
    %v969 = vunpack.c.l.b16 %v877
    %v970 = vunpack.c.h.b16 %v874
    %v971 = vunpack.c.h.b16 %v875
    %v972 = vunpack.c.h.b16 %v876
    %v973 = vunpack.c.h.b16 %v877
    %v974 = vpack.c.b16 %v911, %v910
    %v975 = vpack.c.b16 %v913, %v912
    %v976 = vpack.c.b16 %v915, %v914
    %v977 = vpack.c.b16 %v917, %v916
    %v978 = vpack.c.b16 %v919, %v918
    %v979 = vpack.c.b16 %v921, %v920
    %v980 = vpack.c.b16 %v923, %v922
    %v981 = vpack.c.b16 %v925, %v924
    %v982 = vpack.c.b16 %v927, %v926
    %v983 = vpack.c.b16 %v929, %v928
    %v984 = vpack.c.b16 %v931, %v930
    %v985 = vpack.c.b16 %v933, %v932
    %v986 = vpack.c.b16 %v935, %v934
    %v987 = vpack.c.b16 %v937, %v936
    %v988 = vpack.c.b16 %v939, %v938
    %v989 = vpack.c.b16 %v941, %v940
    %v990 = vpack.c.b16 %v943, %v942
    %v991 = vpack.c.b16 %v945, %v944
    %v992 = vpack.c.b16 %v947, %v946
    %v993 = vpack.c.b16 %v949, %v948
    %v994 = vpack.c.b16 %v951, %v950
    %v995 = vpack.c.b16 %v953, %v952
    %v996 = vpack.c.b16 %v955, %v954
    %v997 = vpack.c.b16 %v957, %v956
    %v998 = vpack.c.b16 %v959, %v958
    %v999 = vpack.c.b16 %v961, %v960
    %v1000 = vpack.c.b16 %v963, %v962
    %v1001 = vpack.c.b16 %v965, %v964
    %v1002 = vpack.c.b16 %v967, %v966
    %v1003 = vpack.c.b16 %v969, %v968
    %v1004 = vpack.c.b16 %v971, %v970
    %v1005 = vpack.c.b16 %v973, %v972
    %1038 = vst [vmem:[#allocation8] sm:$0xff] %v974
    %1039 = vst [vmem:[#allocation8 + $0x8] sm:$0xff] %v975
    %1040 = vst [vmem:[#allocation8 + $0x10] sm:$0xff] %v976
    %1041 = vst [vmem:[#allocation8 + $0x18] sm:$0xff] %v977
    %1042 = vst [vmem:[#allocation8 + $0x20] sm:$0xff] %v978
    %1043 = vst [vmem:[#allocation8 + $0x28] sm:$0xff] %v979
    %1044 = vst [vmem:[#allocation8 + $0x30] sm:$0xff] %v980
    %1045 = vst [vmem:[#allocation8 + $0x38] sm:$0xff] %v981
    %1046 = vst [vmem:[#allocation8 + $0x40] sm:$0xff] %v982
    %1047 = vst [vmem:[#allocation8 + $0x48] sm:$0xff] %v983
    %1048 = vst [vmem:[#allocation8 + $0x50] sm:$0xff] %v984
    %1049 = vst [vmem:[#allocation8 + $0x58] sm:$0xff] %v985
    %1050 = vst [vmem:[#allocation8 + $0x60] sm:$0xff] %v986
    %1051 = vst [vmem:[#allocation8 + $0x68] sm:$0xff] %v987
    %1052 = vst [vmem:[#allocation8 + $0x70] sm:$0xff] %v988
    %1053 = vst [vmem:[#allocation8 + $0x78] sm:$0xff] %v989
    %1054 = vst [vmem:[#allocation8 + $0x80] sm:$0xff] %v990
    %1055 = vst [vmem:[#allocation8 + $0x88] sm:$0xff] %v991
    %1056 = vst [vmem:[#allocation8 + $0x90] sm:$0xff] %v992
    %1057 = vst [vmem:[#allocation8 + $0x98] sm:$0xff] %v993
    %1058 = vst [vmem:[#allocation8 + $0xa0] sm:$0xff] %v994
    %1059 = vst [vmem:[#allocation8 + $0xa8] sm:$0xff] %v995
    %1060 = vst [vmem:[#allocation8 + $0xb0] sm:$0xff] %v996
    %1061 = vst [vmem:[#allocation8 + $0xb8] sm:$0xff] %v997
    %1062 = vst [vmem:[#allocation8 + $0xc0] sm:$0xff] %v998
    %1063 = vst [vmem:[#allocation8 + $0xc8] sm:$0xff] %v999
    %1064 = vst [vmem:[#allocation8 + $0xd0] sm:$0xff] %v1000
    %1065 = vst [vmem:[#allocation8 + $0xd8] sm:$0xff] %v1001
    %1066 = vst [vmem:[#allocation8 + $0xe0] sm:$0xff] %v1002
    %1067 = vst [vmem:[#allocation8 + $0xe8] sm:$0xff] %v1003
    %1068 = vst [vmem:[#allocation8 + $0xf0] sm:$0xff] %v1004
    %1069 = vst [vmem:[#allocation8 + $0xf8] sm:$0xff] %v1005
    // Predicated region
    $region26: #{feature_extractor_forward.3} parent=1 // pred_check
      _
    $region27: #{feature_extractor_forward.3} parent=1 // pred_check_branch
      %1071 = sbr.rel (0) target = $region29
    $region28: #{feature_extractor_forward.3} parent=1 // pred_region
      %s1073 = ssub.s32 4096, 4096
      %1074 = vsyncadd [#allocation4], %s1073
      %s1075 = sshll.u32 [#allocation8], 4
      %s1076 = int_to_ptr.vmem [resolvable:$true] %s1075
      %1081 = dma.vmem_to_hbm [thread:$0]  %s1076, 4096, %s3, [#allocation4], 256, 256, 16
    $region29: #{feature_extractor_forward.3} parent=1 // pred_fallthru
      _
    // Predicated region
    $region30: #{feature_extractor_forward.3} parent=1 // pred_check
      _
    $region31: #{feature_extractor_forward.3} parent=1 // pred_check_branch
      %1083 = sbr.rel (0) target = $region33
    $region32: #{feature_extractor_forward.3} parent=1 // pred_region
      %1084 = dma.done [#allocation4], 4096
    $region33: #{feature_extractor_forward.3} parent=1 // pred_fallthru
      _
    %1085 = vsyncpa [#allocation3], 1
    %1086 = vsyncpa [#allocation6], 1
    %1087 = vsyncpa [#allocation4], 1

// kernel: feature_extractor_forward.5
$region0: #{feature_extractor_forward.5}
  #allocation0 [shape = 'u32[]', space=smem, size = 0x4, offset = 0x4, fixed_abs, tag = 'smem constant byte address 0x4 - core index']
  #allocation1 [shape = 'u32[144,128]{1,0:T(1,128)}', space=vmem, size = 0x12000, scoped, tag = 'internal scratch']
  %s0 = inlined_call_operand.hbm [shape: bf16[2,8,4096], index: 0, kind: input, shape index: {}]
  %s1 = inlined_call_operand.hbm [shape: bf16[2,16,1024], index: 1, kind: input, shape index: {}]
  %s2 = inlined_call_operand.hbm [shape: bf16[8,8], index: 2, kind: input, shape index: {}]
  %s3 = inlined_call_operand.hbm [shape: bf16[64,16], index: 3, kind: input, shape index: {}]
  %s4 = inlined_call_operand.hbm [shape: bf16[2,8,8,1536], index: 4, kind: output, shape index: {}]
  %s5 = sld [smem:[#allocation0]]
  $region65: #{feature_extractor_forward.5} parent=0
    _
  %s7 = ssub.s32 1, %s5
  %s8 = scalar_select 0, %s7, %s5
  $region1: #{feature_extractor_forward.5} parent=0
    #allocation2 [shape = 'u8[131072]{0}', space=vmem, size = 0x20000, scoped, tag = 'input window, operand 0']
    #allocation3 [shape = 's32[2]{0}', space=sflag, size = 0x8, scoped, tag = 'scoped memory for feature_extractor_forward.5']
    #allocation4 [shape = 's32[2]{0}', space=sflag, size = 0x8, scoped, tag = 'scoped memory for feature_extractor_forward.5']
    #allocation5 [shape = 'u8[65536]{0}', space=vmem, size = 0x10000, scoped, tag = 'input window, operand 1']
    #allocation6 [shape = 's32[2]{0}', space=sflag, size = 0x8, scoped, tag = 'scoped memory for feature_extractor_forward.5']
    #allocation7 [shape = 'u8[2048]{0}', space=vmem, size = 0x800, scoped, tag = 'input window, operand 2, single buffered']
    #allocation8 [shape = 'u8[16384]{0}', space=vmem, size = 0x4000, scoped, tag = 'input window, operand 3, single buffered']
    #allocation9 [shape = 's32[1]{0}', space=sflag, size = 0x4, scoped, tag = 'scoped memory for feature_extractor_forward.5']
    #allocation10 [shape = 'u8[393216]{0}', space=vmem, size = 0x60000, scoped, tag = 'output window, operand 0']
    %9 = vsyncpa [#allocation3], 0
    %s10 = scalar_lea.sflag [#allocation3], 1
    %11 = vsyncpa %s10, 0
    %12 = vsyncpa [#allocation6], 0
    %s13 = scalar_lea.sflag [#allocation6], 1
    %14 = vsyncpa %s13, 0
    %15 = vsyncpa [#allocation9], 0
    %16 = vsyncpa [#allocation4], 0
    %s17 = scalar_lea.sflag [#allocation4], 1
    %18 = vsyncpa %s17, 0
    loop: start=0, step=1, limit=4
    $region2: #{feature_extractor_forward.5} parent=1 // loop_pre_header
      _
    $region3: #{feature_extractor_forward.5} parent=1 // loop_header
      %s20 = sphi 0, %s24
      %p21 = scmp.ge.s32.totalorder %s20, 4
      %s27 = sphi 0, %s39
      %s28 = sphi 0, %s35
      %s29 = sphi 0, %s27
      %s30 = sphi 0, %s28
      %s31 = sphi 0, %s29
      %s32 = sphi 0, %s30
      %s42 = sphi 0, %s44
      %s45 = sphi 0, %s42
      %s46 = sphi 0, %s45
      %s62 = sphi 0, %s46
      %s68 = sphi 0, %s70
      %s71 = sphi 0, %s68
      %s72 = sphi 0, %s71
      %s88 = sphi 0, %s72
      %s94 = sphi 0, %s96
      %s97 = sphi 0, %s94
      %s98 = sphi 0, %s97
      %s114 = sphi 0, %s98
      %s120 = sphi 0, %s122
      %s123 = sphi 0, %s120
      %s124 = sphi 0, %s123
      %s140 = sphi 0, %s124
      %s148 = sphi 0, %s150
      %s151 = sphi 0, %s148
      %s152 = sphi 0, %s151
      %s168 = sphi 0, %s152
    $region4: #{feature_extractor_forward.5} parent=1 // loop_header_branch
      %23 = sbr.rel (%p21) target = $region8
    $region5: #{feature_extractor_forward.5} parent=1 // loop_body
      %s25 = ssub.s32 %s20, 1
      %s26 = ssub.s32 %s20, 2
      %s33 = sadd.s32 1, %s28
      %p34 = scmp.ge.s32.totalorder %s33, 1
      %s35 = scalar_select %p34, 0, %s33
      %s36 = sadd.s32 1, %s27
      %s37 = scalar_select %p34, %s36, %s27
      %p38 = scmp.ge.s32.totalorder %s37, 2
      %s39 = scalar_select %p38, 0, %s37
      %s40 = ssub.s32 %s27, %s39
      %p41 = scmp.eq.s32.totalorder %s40, 0
      %s43 = sadd.s32 %s42, 1
      %s44 = scalar_select %p41, %s42, %s43
      %p47 = pneg %p41
      %p48 = scmp.eq.s32.totalorder %s20, 1
      %p49 = por %p47, %p48
      %p50 = scmp.ne.s32.totalorder %s42, %s45
      %p51 = scmp.eq.s32.totalorder %s20, 0
      %p52 = por %p50, %p51
      %p53 = scmp.ne.s32.totalorder %s42, %s45
      %p54 = scmp.eq.s32.totalorder %s25, 1
      %p55 = por %p53, %p54
      %p56 = scmp.ne.s32.totalorder %s45, %s46
      %p57 = scmp.eq.s32.totalorder %s25, 0
      %p58 = por %p56, %p57
      %p59 = scmp.ne.s32.totalorder %s45, %s46
      %p60 = scmp.eq.s32.totalorder %s26, 1
      %p61 = por %p59, %p60
      %p63 = scmp.ne.s32.totalorder %s46, %s62
      %p64 = scmp.eq.s32.totalorder %s26, 0
      %p65 = por %p63, %p64
      %s66 = ssub.s32 %s27, %s39
      %p67 = scmp.eq.s32.totalorder %s66, 0
      %s69 = sadd.s32 %s68, 1
      %s70 = scalar_select %p67, %s68, %s69
      %p73 = pneg %p67
      %p74 = scmp.eq.s32.totalorder %s20, 1
      %p75 = por %p73, %p74
      %p76 = scmp.ne.s32.totalorder %s68, %s71
      %p77 = scmp.eq.s32.totalorder %s20, 0
      %p78 = por %p76, %p77
      %p79 = scmp.ne.s32.totalorder %s68, %s71
      %p80 = scmp.eq.s32.totalorder %s25, 1
      %p81 = por %p79, %p80
      %p82 = scmp.ne.s32.totalorder %s71, %s72
      %p83 = scmp.eq.s32.totalorder %s25, 0
      %p84 = por %p82, %p83
      %p85 = scmp.ne.s32.totalorder %s71, %s72
      %p86 = scmp.eq.s32.totalorder %s26, 1
      %p87 = por %p85, %p86
      %p89 = scmp.ne.s32.totalorder %s72, %s88
      %p90 = scmp.eq.s32.totalorder %s26, 0
      %p91 = por %p89, %p90
      %s92 = ssub.s32 %s28, %s35
      %p93 = scmp.eq.s32.totalorder %s92, 0
      %s95 = sadd.s32 %s94, 1
      %s96 = scalar_select %p93, %s94, %s95
      %p99 = pneg %p93
      %p100 = scmp.eq.s32.totalorder %s20, 1
      %p101 = por %p99, %p100
      %p102 = scmp.ne.s32.totalorder %s94, %s97
      %p103 = scmp.eq.s32.totalorder %s20, 0
      %p104 = por %p102, %p103
      %p105 = scmp.ne.s32.totalorder %s94, %s97
      %p106 = scmp.eq.s32.totalorder %s25, 1
      %p107 = por %p105, %p106
      %p108 = scmp.ne.s32.totalorder %s97, %s98
      %p109 = scmp.eq.s32.totalorder %s25, 0
      %p110 = por %p108, %p109
      %p111 = scmp.ne.s32.totalorder %s97, %s98
      %p112 = scmp.eq.s32.totalorder %s26, 1
      %p113 = por %p111, %p112
      %p115 = scmp.ne.s32.totalorder %s98, %s114
      %p116 = scmp.eq.s32.totalorder %s26, 0
      %p117 = por %p115, %p116
      %s118 = ssub.s32 %s28, %s35
      %p119 = scmp.eq.s32.totalorder %s118, 0
      %s121 = sadd.s32 %s120, 1
      %s122 = scalar_select %p119, %s120, %s121
      %p125 = pneg %p119
      %p126 = scmp.eq.s32.totalorder %s20, 1
      %p127 = por %p125, %p126
      %p128 = scmp.ne.s32.totalorder %s120, %s123
      %p129 = scmp.eq.s32.totalorder %s20, 0
      %p130 = por %p128, %p129
      %p131 = scmp.ne.s32.totalorder %s120, %s123
      %p132 = scmp.eq.s32.totalorder %s25, 1
      %p133 = por %p131, %p132
      %p134 = scmp.ne.s32.totalorder %s123, %s124
      %p135 = scmp.eq.s32.totalorder %s25, 0
      %p136 = por %p134, %p135
      %p137 = scmp.ne.s32.totalorder %s123, %s124
      %p138 = scmp.eq.s32.totalorder %s26, 1
      %p139 = por %p137, %p138
      %p141 = scmp.ne.s32.totalorder %s124, %s140
      %p142 = scmp.eq.s32.totalorder %s26, 0
      %p143 = por %p141, %p142
      %s144 = ssub.s32 %s27, %s39
      %s145 = ssub.s32 %s28, %s35
      %s146 = sor.u32 %s144, %s145
      %p147 = scmp.eq.s32.totalorder %s146, 0
      %s149 = sadd.s32 %s148, 1
      %s150 = scalar_select %p147, %s148, %s149
      %p153 = pneg %p147
      %p154 = scmp.eq.s32.totalorder %s20, 1
      %p155 = por %p153, %p154
      %p156 = scmp.ne.s32.totalorder %s148, %s151
      %p157 = scmp.eq.s32.totalorder %s20, 0
      %p158 = por %p156, %p157
      %p159 = scmp.ne.s32.totalorder %s148, %s151
      %p160 = scmp.eq.s32.totalorder %s25, 1
      %p161 = por %p159, %p160
      %p162 = scmp.ne.s32.totalorder %s151, %s152
      %p163 = scmp.eq.s32.totalorder %s25, 0
      %p164 = por %p162, %p163
      %p165 = scmp.ne.s32.totalorder %s151, %s152
      %p166 = scmp.eq.s32.totalorder %s26, 1
      %p167 = por %p165, %p166
      %p169 = scmp.ne.s32.totalorder %s152, %s168
      %p170 = scmp.eq.s32.totalorder %s26, 0
      %p171 = por %p169, %p170
      %p172 = scmp.le.s32.totalorder 1, %s20
      %p173 = scmp.lt.s32.totalorder %s20, 3
      %p174 = pnand %p172, %p173
      %p175 = pneg %p174
      // Predicated region
      $region9: #{feature_extractor_forward.5} parent=5 // pred_check
        _
      $region10: #{feature_extractor_forward.5} parent=5 // pred_check_branch
        %177 = sbr.rel (%p174) target = $region12
      $region11: #{feature_extractor_forward.5} parent=5 // pred_region
        %s178 = ssub.s32 %s20, 1
        // Predicated region
        $region13: #{feature_extractor_forward.5} parent=11 // pred_check
          %p179 = pneg %p110
        $region14: #{feature_extractor_forward.5} parent=11 // pred_check_branch
          %181 = sbr.rel (%p179) target = $region16
        $region15: #{feature_extractor_forward.5} parent=11 // pred_region
          %s183 = ssub.s32 64, 64
          %184 = vsyncadd [#allocation6], %s183
          %s185 = smul.addr %s30, 64
          %s186 = scalar_lea.hbm %s2, %s185
          %s188 = sshll.u32 [#allocation7], 4
          %s189 = int_to_ptr.vmem [resolvable:$true] %s188
          %191 = dma.hbm_to_vmem [thread:$0]  %s186, 64, %s189, [#allocation6]
        $region16: #{feature_extractor_forward.5} parent=11 // pred_fallthru
          _
        // Predicated region
        $region17: #{feature_extractor_forward.5} parent=11 // pred_check
          %p192 = pneg %p136
        $region18: #{feature_extractor_forward.5} parent=11 // pred_check_branch
          %194 = sbr.rel (%p192) target = $region20
        $region19: #{feature_extractor_forward.5} parent=11 // pred_region
          %s195 = smul.u32 8, %s30
          %s197 = ssub.s32 512, 512
          %198 = vsyncadd [#allocation9], %s197
          %s199 = smul.addr %s195, 64
          %s200 = scalar_lea.hbm %s3, %s199
          %s201 = sshll.u32 [#allocation8], 4
          %s202 = int_to_ptr.vmem [resolvable:$true] %s201
          %207 = dma.hbm_to_vmem [thread:$0]  %s200, 512, %s202, [#allocation9], 64, 64, 4
        $region20: #{feature_extractor_forward.5} parent=11 // pred_fallthru
          _
      $region12: #{feature_extractor_forward.5} parent=5 // pred_fallthru
        _
      %p208 = scmp.lt.s32.totalorder %s20, 2
      // Predicated region
      $region21: #{feature_extractor_forward.5} parent=5 // pred_check
        %p209 = pneg %p208
      $region22: #{feature_extractor_forward.5} parent=5 // pred_check_branch
        %211 = sbr.rel (%p209) target = $region24
      $region23: #{feature_extractor_forward.5} parent=5 // pred_region
        // Predicated region
        $region25: #{feature_extractor_forward.5} parent=23 // pred_check
          %p212 = pneg %p52
        $region26: #{feature_extractor_forward.5} parent=23 // pred_check_branch
          %214 = sbr.rel (%p212) target = $region28
        $region27: #{feature_extractor_forward.5} parent=23 // pred_region
          %s215 = sand.u32 %s42, 1
          %s216 = scalar_lea.sflag [#allocation3], %s215
          %s217 = sand.u32 %s42, 1
          %s218 = smul.addr %s217, 128
          %s219 = scalar_lea.vmem [#allocation2], %s218
          %s221 = ssub.s32 2048, 2048
          %222 = vsyncadd %s216, %s221
          %s223 = smul.addr %s27, 32
          %s224 = smul.addr %s223, 64
          %s225 = scalar_lea.hbm %s0, %s224
          %s227 = sshll.u32 %s219, 4
          %s228 = int_to_ptr.vmem [resolvable:$true] %s227
          %230 = dma.hbm_to_vmem [thread:$0]  %s225, 2048, %s228, %s216
        $region28: #{feature_extractor_forward.5} parent=23 // pred_fallthru
          _
        // Predicated region
        $region29: #{feature_extractor_forward.5} parent=23 // pred_check
          %p231 = pneg %p78
        $region30: #{feature_extractor_forward.5} parent=23 // pred_check_branch
          %233 = sbr.rel (%p231) target = $region32
        $region31: #{feature_extractor_forward.5} parent=23 // pred_region
          %s234 = sand.u32 %s20, 1
          %s235 = scalar_lea.sflag [#allocation6], %s234
          %s236 = sand.u32 %s68, 1
          %s237 = smul.addr %s236, 64
          %s238 = scalar_lea.vmem [#allocation5], %s237
          %s240 = ssub.s32 1024, 1024
          %241 = vsyncadd %s235, %s240
          %s242 = smul.addr %s27, 16
          %s243 = smul.addr %s242, 64
          %s244 = scalar_lea.hbm %s1, %s243
          %s245 = sshll.u32 %s238, 4
          %s246 = int_to_ptr.vmem [resolvable:$true] %s245
          %251 = dma.hbm_to_vmem [thread:$0]  %s244, 1024, %s246, %s235, 512, 512, 32
        $region32: #{feature_extractor_forward.5} parent=23 // pred_fallthru
          _
      $region24: #{feature_extractor_forward.5} parent=5 // pred_fallthru
        _
      %p252 = scmp.le.s32.totalorder 1, %s20
      %p253 = scmp.lt.s32.totalorder %s20, 3
      %p254 = pnand %p252, %p253
      %p255 = pneg %p254
      // Predicated region
      $region33: #{feature_extractor_forward.5} parent=5 // pred_check
        _
      $region34: #{feature_extractor_forward.5} parent=5 // pred_check_branch
        %257 = sbr.rel (%p254) target = $region36
      $region35: #{feature_extractor_forward.5} parent=5 // pred_region
        %s258 = ssub.s32 %s20, 1
        %s259 = sand.u32 %s45, 1
        %s260 = scalar_lea.sflag [#allocation3], %s259
        %s261 = sand.u32 %s45, 1
        %s262 = smul.addr %s261, 128
        %s263 = scalar_lea.vmem [#allocation2], %s262
        // Predicated region
        $region37: #{feature_extractor_forward.5} parent=35 // pred_check
          %p264 = pneg %p58
        $region38: #{feature_extractor_forward.5} parent=35 // pred_check_branch
          %266 = sbr.rel (%p264) target = $region40
        $region39: #{feature_extractor_forward.5} parent=35 // pred_region
          %267 = dma.done %s260, 2048
        $region40: #{feature_extractor_forward.5} parent=35 // pred_fallthru
          _
        %s268 = sand.u32 %s25, 1
        %s269 = scalar_lea.sflag [#allocation6], %s268
        %s270 = sand.u32 %s71, 1
        %s271 = smul.addr %s270, 64
        %s272 = scalar_lea.vmem [#allocation5], %s271
        // Predicated region
        $region41: #{feature_extractor_forward.5} parent=35 // pred_check
          %p273 = pneg %p84
        $region42: #{feature_extractor_forward.5} parent=35 // pred_check_branch
          %275 = sbr.rel (%p273) target = $region44
        $region43: #{feature_extractor_forward.5} parent=35 // pred_region
          %276 = dma.done %s269, 1024
        $region44: #{feature_extractor_forward.5} parent=35 // pred_fallthru
          _
        // Predicated region
        $region45: #{feature_extractor_forward.5} parent=35 // pred_check
          %p277 = pneg %p110
        $region46: #{feature_extractor_forward.5} parent=35 // pred_check_branch
          %279 = sbr.rel (%p277) target = $region48
        $region47: #{feature_extractor_forward.5} parent=35 // pred_region
          %280 = dma.done [#allocation6], 64
        $region48: #{feature_extractor_forward.5} parent=35 // pred_fallthru
          _
        // Predicated region
        $region49: #{feature_extractor_forward.5} parent=35 // pred_check
          %p281 = pneg %p136
        $region50: #{feature_extractor_forward.5} parent=35 // pred_check_branch
          %283 = sbr.rel (%p281) target = $region52
        $region51: #{feature_extractor_forward.5} parent=35 // pred_region
          %284 = dma.done [#allocation9], 512
        $region52: #{feature_extractor_forward.5} parent=35 // pred_fallthru
          _
        %s285 = sand.u32 %s45, 1
        %s286 = scalar_lea.sflag [#allocation3], %s285
        %s287 = sand.u32 %s45, 1
        %s288 = smul.addr %s287, 128
        %s289 = scalar_lea.vmem [#allocation2], %s288
        %p290 = pneg %p58
        %p291 = pneg %p55
        %s292 = sand.u32 %s25, 1
        %s293 = scalar_lea.sflag [#allocation6], %s292
        %s294 = sand.u32 %s71, 1
        %s295 = smul.addr %s294, 64
        %s296 = scalar_lea.vmem [#allocation5], %s295
        %p297 = pneg %p84
        %p298 = pneg %p81
        %p299 = pneg %p110
        %p300 = pneg %p107
        %p301 = pneg %p136
        %p302 = pneg %p133
        %p303 = pneg %p164
        %p304 = pneg %p161
        %s305 = sand.u32 %s151, 1
        %s306 = scalar_lea.sflag [#allocation4], %s305
        %s307 = sand.u32 %s151, 1
        %s308 = smul.addr %s307, 384
        %s309 = scalar_lea.vmem [#allocation10], %s308
        %s310 = smul.u32 8, %s30
        %s311 = smul.u32 8, %s30
        %v313 = vld [vmem:[#allocation7] sm:$0xf]
        %v314 = vld [vmem:[%s263] sm:$0xff]
        %v315 = vld [vmem:[%s263 + $0x8] sm:$0xff]
        %v316 = vld [vmem:[%s263 + $0x10] sm:$0xff]
        %v317 = vld [vmem:[%s263 + $0x18] sm:$0xff]
        %v318 = vld [vmem:[%s263 + $0x20] sm:$0xff]
        %v319 = vld [vmem:[%s263 + $0x28] sm:$0xff]
        %v320 = vld [vmem:[%s263 + $0x30] sm:$0xff]
        %v321 = vld [vmem:[%s263 + $0x38] sm:$0xff]
        %v322 = vld [vmem:[%s263 + $0x40] sm:$0xff]
        %v323 = vld [vmem:[%s263 + $0x48] sm:$0xff]
        %v324 = vld [vmem:[%s263 + $0x50] sm:$0xff]
        %v325 = vld [vmem:[%s263 + $0x58] sm:$0xff]
        %v326 = vld [vmem:[%s263 + $0x60] sm:$0xff]
        %v327 = vld [vmem:[%s263 + $0x68] sm:$0xff]
        %v328 = vld [vmem:[%s263 + $0x70] sm:$0xff]
        %v329 = vld [vmem:[%s263 + $0x78] sm:$0xff]
        %v346 = vunpack.c.l.b16 %v314
        %v347 = vunpack.c.h.b16 %v314
        %v348 = vunpack.c.l.b16 %v315
        %v349 = vunpack.c.h.b16 %v315
        %v350 = vunpack.c.l.b16 %v316
        %v351 = vunpack.c.h.b16 %v316
        %v352 = vunpack.c.l.b16 %v317
        %v353 = vunpack.c.h.b16 %v317
        %v354 = vunpack.c.l.b16 %v318
        %v355 = vunpack.c.h.b16 %v318
        %v356 = vunpack.c.l.b16 %v319
        %v357 = vunpack.c.h.b16 %v319
        %v358 = vunpack.c.l.b16 %v320
        %v359 = vunpack.c.h.b16 %v320
        %v360 = vunpack.c.l.b16 %v321
        %v361 = vunpack.c.h.b16 %v321
        %v362 = vunpack.c.l.b16 %v322
        %v363 = vunpack.c.h.b16 %v322
        %v364 = vunpack.c.l.b16 %v323
        %v365 = vunpack.c.h.b16 %v323
        %v366 = vunpack.c.l.b16 %v324
        %v367 = vunpack.c.h.b16 %v324
        %v368 = vunpack.c.l.b16 %v325
        %v369 = vunpack.c.h.b16 %v325
        %v370 = vunpack.c.l.b16 %v326
        %v371 = vunpack.c.h.b16 %v326
        %v372 = vunpack.c.l.b16 %v327
        %v373 = vunpack.c.h.b16 %v327
        %v374 = vunpack.c.l.b16 %v328
        %v375 = vunpack.c.h.b16 %v328
        %v376 = vunpack.c.l.b16 %v329
        %v377 = vunpack.c.h.b16 %v329
        %v378 = vpack.c.b16 %v346, %v346
        %v379 = vpack.c.b16 %v347, %v347
        %v380 = vpack.c.b16 %v348, %v348
        %v381 = vpack.c.b16 %v349, %v349
        %v382 = vpack.c.b16 %v350, %v350
        %v383 = vpack.c.b16 %v351, %v351
        %v384 = vpack.c.b16 %v352, %v352
        %v385 = vpack.c.b16 %v353, %v353
        %v386 = vpack.c.b16 %v354, %v354
        %v387 = vpack.c.b16 %v355, %v355
        %v388 = vpack.c.b16 %v356, %v356
        %v389 = vpack.c.b16 %v357, %v357
        %v390 = vpack.c.b16 %v358, %v358
        %v391 = vpack.c.b16 %v359, %v359
        %v392 = vpack.c.b16 %v360, %v360
        %v393 = vpack.c.b16 %v361, %v361
        %v394 = vpack.c.b16 %v362, %v362
        %v395 = vpack.c.b16 %v363, %v363
        %v396 = vpack.c.b16 %v364, %v364
        %v397 = vpack.c.b16 %v365, %v365
        %v398 = vpack.c.b16 %v366, %v366
        %v399 = vpack.c.b16 %v367, %v367
        %v400 = vpack.c.b16 %v368, %v368
        %v401 = vpack.c.b16 %v369, %v369
        %v402 = vpack.c.b16 %v370, %v370
        %v403 = vpack.c.b16 %v371, %v371
        %v404 = vpack.c.b16 %v372, %v372
        %v405 = vpack.c.b16 %v373, %v373
        %v406 = vpack.c.b16 %v374, %v374
        %v407 = vpack.c.b16 %v375, %v375
        %v408 = vpack.c.b16 %v376, %v376
        %v409 = vpack.c.b16 %v377, %v377
        %vm410 = vcmask 64512
        %v412 = vsel %vm410, %v313, 0
        %vm414 = vcmask 1043456
        %v416 = vsel %vm414, %v378, 0
        %v419 = vsel %vm414, %v379, 0
        %v422 = vsel %vm414, %v380, 0
        %v425 = vsel %vm414, %v381, 0
        %v428 = vsel %vm414, %v382, 0
        %v431 = vsel %vm414, %v383, 0
        %v434 = vsel %vm414, %v384, 0
        %v437 = vsel %vm414, %v385, 0
        %v440 = vsel %vm414, %v386, 0
        %v443 = vsel %vm414, %v387, 0
        %v446 = vsel %vm414, %v388, 0
        %v449 = vsel %vm414, %v389, 0
        %v452 = vsel %vm414, %v390, 0
        %v455 = vsel %vm414, %v391, 0
        %v458 = vsel %vm414, %v392, 0
        %v461 = vsel %vm414, %v393, 0
        %v464 = vsel %vm414, %v394, 0
        %v467 = vsel %vm414, %v395, 0
        %v470 = vsel %vm414, %v396, 0
        %v473 = vsel %vm414, %v397, 0
        %v476 = vsel %vm414, %v398, 0
        %v479 = vsel %vm414, %v399, 0
        %v482 = vsel %vm414, %v400, 0
        %v485 = vsel %vm414, %v401, 0
        %v488 = vsel %vm414, %v402, 0
        %v491 = vsel %vm414, %v403, 0
        %v494 = vsel %vm414, %v404, 0
        %v497 = vsel %vm414, %v405, 0
        %v500 = vsel %vm414, %v406, 0
        %v503 = vsel %vm414, %v407, 0
        %v506 = vsel %vm414, %v408, 0
        %v509 = vsel %vm414, %v409, 0
        %511 = vmatprep.subr.bf16.mxu0 %v419
        %512 = vmatpush1.bf16.msra.mxu0 %v416
        %513 = vmatprep.subr.bf16.mxu0 0
        %514 = vmatpush1.bf16.msra.mxu0 0
        %515 = vmatprep.subr.bf16.mxu0 0
        %516 = vmatpush1.bf16.msra.mxu0 0
        %517 = vmatprep.subr.bf16.mxu0 0
        %518 = vmatpush1.bf16.msra.mxu0 0
        %519 = vmatprep.subr.bf16.mxu0 0
        %520 = vmatpush1.bf16.msra.mxu0 0
        %521 = vmatprep.subr.bf16.mxu0 0
        %522 = vmatpush1.bf16.msra.mxu0 0
        %523 = vmatprep.subr.bf16.mxu0 0
        %524 = vmatpush1.bf16.msra.mxu0 0
        %525 = vmatprep.subr.bf16.mxu0 0
        %526 = vmatpush1.bf16.msra.mxu0 0
        %527 = vmatprep.subr.bf16.mxu0 0
        %528 = vmatpush1.bf16.msra.mxu0 0
        %529 = vmatprep.subr.bf16.mxu0 0
        %530 = vmatpush1.bf16.msra.mxu0 0
        %531 = vmatprep.subr.bf16.mxu0 0
        %532 = vmatpush1.bf16.msra.mxu0 0
        %533 = vmatprep.subr.bf16.mxu0 0
        %534 = vmatpush1.bf16.msra.mxu0 0
        %535 = vmatprep.subr.bf16.mxu0 0
        %536 = vmatpush1.bf16.msra.mxu0 0
        %537 = vmatprep.subr.bf16.mxu0 0
        %538 = vmatpush1.bf16.msra.mxu0 0
        %539 = vmatprep.subr.bf16.mxu0 0
        %540 = vmatpush1.bf16.msra.mxu0 0
        %541 = vmatprep.subr.bf16.mxu0 0
        %542 = vmatpush1.bf16.msra.mxu0 0
        %543 = vmatprep.mubr.bf16.mxu0 0
        %544 = vmatmul.mubr.bf16.gmra.mrb[0].mxu0 %v412
        %v545 = vpop.f32.mrb[0].mxu0
        %v546 = vadd.f32 0.0, %v545
        %v547 = vpop.f32.mrb[0].mxu0
        %v548 = vadd.f32 0.0, %v547
        %v549 = vpop.f32.mrb[0].mxu0
        %v550 = vpop.f32.mrb[0].mxu0
        %551 = vdwg.mxu0
        %552 = vmatprep.subr.bf16.mxu0 %v425
        %553 = vmatpush1.bf16.msra.mxu0 %v422
        %554 = vmatprep.subr.bf16.mxu0 0
        %555 = vmatpush1.bf16.msra.mxu0 0
        %556 = vmatprep.subr.bf16.mxu0 0
        %557 = vmatpush1.bf16.msra.mxu0 0
        %558 = vmatprep.subr.bf16.mxu0 0
        %559 = vmatpush1.bf16.msra.mxu0 0
        %560 = vmatprep.subr.bf16.mxu0 0
        %561 = vmatpush1.bf16.msra.mxu0 0
        %562 = vmatprep.subr.bf16.mxu0 0
        %563 = vmatpush1.bf16.msra.mxu0 0
        %564 = vmatprep.subr.bf16.mxu0 0
        %565 = vmatpush1.bf16.msra.mxu0 0
        %566 = vmatprep.subr.bf16.mxu0 0
        %567 = vmatpush1.bf16.msra.mxu0 0
        %568 = vmatprep.subr.bf16.mxu0 0
        %569 = vmatpush1.bf16.msra.mxu0 0
        %570 = vmatprep.subr.bf16.mxu0 0
        %571 = vmatpush1.bf16.msra.mxu0 0
        %572 = vmatprep.subr.bf16.mxu0 0
        %573 = vmatpush1.bf16.msra.mxu0 0
        %574 = vmatprep.subr.bf16.mxu0 0
        %575 = vmatpush1.bf16.msra.mxu0 0
        %576 = vmatprep.subr.bf16.mxu0 0
        %577 = vmatpush1.bf16.msra.mxu0 0
        %578 = vmatprep.subr.bf16.mxu0 0
        %579 = vmatpush1.bf16.msra.mxu0 0
        %580 = vmatprep.subr.bf16.mxu0 0
        %581 = vmatpush1.bf16.msra.mxu0 0
        %582 = vmatprep.subr.bf16.mxu0 0
        %583 = vmatpush1.bf16.msra.mxu0 0
        %584 = vmatprep.mubr.bf16.mxu0 0
        %585 = vmatmul.mubr.bf16.gmra.mrb[0].mxu0 %v412
        %v586 = vpop.f32.mrb[0].mxu0
        %v587 = vadd.f32 0.0, %v586
        %v588 = vpop.f32.mrb[0].mxu0
        %v589 = vadd.f32 0.0, %v588
        %v590 = vpop.f32.mrb[0].mxu0
        %v591 = vpop.f32.mrb[0].mxu0
        %592 = vdwg.mxu0
        %593 = vmatprep.subr.bf16.mxu0 %v431
        %594 = vmatpush1.bf16.msra.mxu0 %v428
        %595 = vmatprep.subr.bf16.mxu0 0
        %596 = vmatpush1.bf16.msra.mxu0 0
        %597 = vmatprep.subr.bf16.mxu0 0
        %598 = vmatpush1.bf16.msra.mxu0 0
        %599 = vmatprep.subr.bf16.mxu0 0
        %600 = vmatpush1.bf16.msra.mxu0 0
        %601 = vmatprep.subr.bf16.mxu0 0
        %602 = vmatpush1.bf16.msra.mxu0 0
        %603 = vmatprep.subr.bf16.mxu0 0
        %604 = vmatpush1.bf16.msra.mxu0 0
        %605 = vmatprep.subr.bf16.mxu0 0
        %606 = vmatpush1.bf16.msra.mxu0 0
        %607 = vmatprep.subr.bf16.mxu0 0
        %608 = vmatpush1.bf16.msra.mxu0 0
        %609 = vmatprep.subr.bf16.mxu0 0
        %610 = vmatpush1.bf16.msra.mxu0 0
        %611 = vmatprep.subr.bf16.mxu0 0
        %612 = vmatpush1.bf16.msra.mxu0 0
        %613 = vmatprep.subr.bf16.mxu0 0
        %614 = vmatpush1.bf16.msra.mxu0 0
        %615 = vmatprep.subr.bf16.mxu0 0
        %616 = vmatpush1.bf16.msra.mxu0 0
        %617 = vmatprep.subr.bf16.mxu0 0
        %618 = vmatpush1.bf16.msra.mxu0 0
        %619 = vmatprep.subr.bf16.mxu0 0
        %620 = vmatpush1.bf16.msra.mxu0 0
        %621 = vmatprep.subr.bf16.mxu0 0
        %622 = vmatpush1.bf16.msra.mxu0 0
        %623 = vmatprep.subr.bf16.mxu0 0
        %624 = vmatpush1.bf16.msra.mxu0 0
        %625 = vmatprep.mubr.bf16.mxu0 0
        %626 = vmatmul.mubr.bf16.gmra.mrb[0].mxu0 %v412
        %v627 = vpop.f32.mrb[0].mxu0
        %v628 = vadd.f32 0.0, %v627
        %v629 = vpop.f32.mrb[0].mxu0
        %v630 = vadd.f32 0.0, %v629
        %v631 = vpop.f32.mrb[0].mxu0
        %v632 = vpop.f32.mrb[0].mxu0
        %633 = vdwg.mxu0
        %634 = vmatprep.subr.bf16.mxu0 %v437
        %635 = vmatpush1.bf16.msra.mxu0 %v434
        %636 = vmatprep.subr.bf16.mxu0 0
        %637 = vmatpush1.bf16.msra.mxu0 0
        %638 = vmatprep.subr.bf16.mxu0 0
        %639 = vmatpush1.bf16.msra.mxu0 0
        %640 = vmatprep.subr.bf16.mxu0 0
        %641 = vmatpush1.bf16.msra.mxu0 0
        %642 = vmatprep.subr.bf16.mxu0 0
        %643 = vmatpush1.bf16.msra.mxu0 0
        %644 = vmatprep.subr.bf16.mxu0 0
        %645 = vmatpush1.bf16.msra.mxu0 0
        %646 = vmatprep.subr.bf16.mxu0 0
        %647 = vmatpush1.bf16.msra.mxu0 0
        %648 = vmatprep.subr.bf16.mxu0 0
        %649 = vmatpush1.bf16.msra.mxu0 0
        %650 = vmatprep.subr.bf16.mxu0 0
        %651 = vmatpush1.bf16.msra.mxu0 0
        %652 = vmatprep.subr.bf16.mxu0 0
        %653 = vmatpush1.bf16.msra.mxu0 0
        %654 = vmatprep.subr.bf16.mxu0 0
        %655 = vmatpush1.bf16.msra.mxu0 0
        %656 = vmatprep.subr.bf16.mxu0 0
        %657 = vmatpush1.bf16.msra.mxu0 0
        %658 = vmatprep.subr.bf16.mxu0 0
        %659 = vmatpush1.bf16.msra.mxu0 0
        %660 = vmatprep.subr.bf16.mxu0 0
        %661 = vmatpush1.bf16.msra.mxu0 0
        %662 = vmatprep.subr.bf16.mxu0 0
        %663 = vmatpush1.bf16.msra.mxu0 0
        %664 = vmatprep.subr.bf16.mxu0 0
        %665 = vmatpush1.bf16.msra.mxu0 0
        %666 = vmatprep.mubr.bf16.mxu0 0
        %667 = vmatmul.mubr.bf16.gmra.mrb[0].mxu0 %v412
        %v668 = vpop.f32.mrb[0].mxu0
        %v669 = vadd.f32 0.0, %v668
        %v670 = vpop.f32.mrb[0].mxu0
        %v671 = vadd.f32 0.0, %v670
        %v672 = vpop.f32.mrb[0].mxu0
        %v673 = vpop.f32.mrb[0].mxu0
        %674 = vdwg.mxu0
        %675 = vmatprep.subr.bf16.mxu0 %v443
        %676 = vmatpush1.bf16.msra.mxu0 %v440
        %677 = vmatprep.subr.bf16.mxu0 0
        %678 = vmatpush1.bf16.msra.mxu0 0
        %679 = vmatprep.subr.bf16.mxu0 0
        %680 = vmatpush1.bf16.msra.mxu0 0
        %681 = vmatprep.subr.bf16.mxu0 0
        %682 = vmatpush1.bf16.msra.mxu0 0
        %683 = vmatprep.subr.bf16.mxu0 0
        %684 = vmatpush1.bf16.msra.mxu0 0
        %685 = vmatprep.subr.bf16.mxu0 0
        %686 = vmatpush1.bf16.msra.mxu0 0
        %687 = vmatprep.subr.bf16.mxu0 0
        %688 = vmatpush1.bf16.msra.mxu0 0
        %689 = vmatprep.subr.bf16.mxu0 0
        %690 = vmatpush1.bf16.msra.mxu0 0
        %691 = vmatprep.subr.bf16.mxu0 0
        %692 = vmatpush1.bf16.msra.mxu0 0
        %693 = vmatprep.subr.bf16.mxu0 0
        %694 = vmatpush1.bf16.msra.mxu0 0
        %695 = vmatprep.subr.bf16.mxu0 0
        %696 = vmatpush1.bf16.msra.mxu0 0
        %697 = vmatprep.subr.bf16.mxu0 0
        %698 = vmatpush1.bf16.msra.mxu0 0
        %699 = vmatprep.subr.bf16.mxu0 0
        %700 = vmatpush1.bf16.msra.mxu0 0
        %701 = vmatprep.subr.bf16.mxu0 0
        %702 = vmatpush1.bf16.msra.mxu0 0
        %703 = vmatprep.subr.bf16.mxu0 0
        %704 = vmatpush1.bf16.msra.mxu0 0
        %705 = vmatprep.subr.bf16.mxu0 0
        %706 = vmatpush1.bf16.msra.mxu0 0
        %707 = vmatprep.mubr.bf16.mxu0 0
        %708 = vmatmul.mubr.bf16.gmra.mrb[0].mxu0 %v412
        %v709 = vpop.f32.mrb[0].mxu0
        %v710 = vadd.f32 0.0, %v709
        %v711 = vpop.f32.mrb[0].mxu0
        %v712 = vadd.f32 0.0, %v711
        %v713 = vpop.f32.mrb[0].mxu0
        %v714 = vpop.f32.mrb[0].mxu0
        %715 = vdwg.mxu0
        %716 = vmatprep.subr.bf16.mxu0 %v449
        %717 = vmatpush1.bf16.msra.mxu0 %v446
        %718 = vmatprep.subr.bf16.mxu0 0
        %719 = vmatpush1.bf16.msra.mxu0 0
        %720 = vmatprep.subr.bf16.mxu0 0
        %721 = vmatpush1.bf16.msra.mxu0 0
        %722 = vmatprep.subr.bf16.mxu0 0
        %723 = vmatpush1.bf16.msra.mxu0 0
        %724 = vmatprep.subr.bf16.mxu0 0
        %725 = vmatpush1.bf16.msra.mxu0 0
        %726 = vmatprep.subr.bf16.mxu0 0
        %727 = vmatpush1.bf16.msra.mxu0 0
        %728 = vmatprep.subr.bf16.mxu0 0
        %729 = vmatpush1.bf16.msra.mxu0 0
        %730 = vmatprep.subr.bf16.mxu0 0
        %731 = vmatpush1.bf16.msra.mxu0 0
        %732 = vmatprep.subr.bf16.mxu0 0
        %733 = vmatpush1.bf16.msra.mxu0 0
        %734 = vmatprep.subr.bf16.mxu0 0
        %735 = vmatpush1.bf16.msra.mxu0 0
        %736 = vmatprep.subr.bf16.mxu0 0
        %737 = vmatpush1.bf16.msra.mxu0 0
        %738 = vmatprep.subr.bf16.mxu0 0
        %739 = vmatpush1.bf16.msra.mxu0 0
        %740 = vmatprep.subr.bf16.mxu0 0
        %741 = vmatpush1.bf16.msra.mxu0 0
        %742 = vmatprep.subr.bf16.mxu0 0
        %743 = vmatpush1.bf16.msra.mxu0 0
        %744 = vmatprep.subr.bf16.mxu0 0
        %745 = vmatpush1.bf16.msra.mxu0 0
        %746 = vmatprep.subr.bf16.mxu0 0
        %747 = vmatpush1.bf16.msra.mxu0 0
        %748 = vmatprep.mubr.bf16.mxu0 0
        %749 = vmatmul.mubr.bf16.gmra.mrb[0].mxu0 %v412
        %v750 = vpop.f32.mrb[0].mxu0
        %v751 = vadd.f32 0.0, %v750
        %v752 = vpop.f32.mrb[0].mxu0
        %v753 = vadd.f32 0.0, %v752
        %v754 = vpop.f32.mrb[0].mxu0
        %v755 = vpop.f32.mrb[0].mxu0
        %756 = vdwg.mxu0
        %757 = vmatprep.subr.bf16.mxu0 %v455
        %758 = vmatpush1.bf16.msra.mxu0 %v452
        %759 = vmatprep.subr.bf16.mxu0 0
        %760 = vmatpush1.bf16.msra.mxu0 0
        %761 = vmatprep.subr.bf16.mxu0 0
        %762 = vmatpush1.bf16.msra.mxu0 0
        %763 = vmatprep.subr.bf16.mxu0 0
        %764 = vmatpush1.bf16.msra.mxu0 0
        %765 = vmatprep.subr.bf16.mxu0 0
        %766 = vmatpush1.bf16.msra.mxu0 0
        %767 = vmatprep.subr.bf16.mxu0 0
        %768 = vmatpush1.bf16.msra.mxu0 0
        %769 = vmatprep.subr.bf16.mxu0 0
        %770 = vmatpush1.bf16.msra.mxu0 0
        %771 = vmatprep.subr.bf16.mxu0 0
        %772 = vmatpush1.bf16.msra.mxu0 0
        %773 = vmatprep.subr.bf16.mxu0 0
        %774 = vmatpush1.bf16.msra.mxu0 0
        %775 = vmatprep.subr.bf16.mxu0 0
        %776 = vmatpush1.bf16.msra.mxu0 0
        %777 = vmatprep.subr.bf16.mxu0 0
        %778 = vmatpush1.bf16.msra.mxu0 0
        %779 = vmatprep.subr.bf16.mxu0 0
        %780 = vmatpush1.bf16.msra.mxu0 0
        %781 = vmatprep.subr.bf16.mxu0 0
        %782 = vmatpush1.bf16.msra.mxu0 0
        %783 = vmatprep.subr.bf16.mxu0 0
        %784 = vmatpush1.bf16.msra.mxu0 0
        %785 = vmatprep.subr.bf16.mxu0 0
        %786 = vmatpush1.bf16.msra.mxu0 0
        %787 = vmatprep.subr.bf16.mxu0 0
        %788 = vmatpush1.bf16.msra.mxu0 0
        %789 = vmatprep.mubr.bf16.mxu0 0
        %790 = vmatmul.mubr.bf16.gmra.mrb[0].mxu0 %v412
        %v791 = vpop.f32.mrb[0].mxu0
        %v792 = vadd.f32 0.0, %v791
        %v793 = vpop.f32.mrb[0].mxu0
        %v794 = vadd.f32 0.0, %v793
        %v795 = vpop.f32.mrb[0].mxu0
        %v796 = vpop.f32.mrb[0].mxu0
        %797 = vdwg.mxu0
        %798 = vmatprep.subr.bf16.mxu0 %v461
        %799 = vmatpush1.bf16.msra.mxu0 %v458
        %800 = vmatprep.subr.bf16.mxu0 0
        %801 = vmatpush1.bf16.msra.mxu0 0
        %802 = vmatprep.subr.bf16.mxu0 0
        %803 = vmatpush1.bf16.msra.mxu0 0
        %804 = vmatprep.subr.bf16.mxu0 0
        %805 = vmatpush1.bf16.msra.mxu0 0
        %806 = vmatprep.subr.bf16.mxu0 0
        %807 = vmatpush1.bf16.msra.mxu0 0
        %808 = vmatprep.subr.bf16.mxu0 0
        %809 = vmatpush1.bf16.msra.mxu0 0
        %810 = vmatprep.subr.bf16.mxu0 0
        %811 = vmatpush1.bf16.msra.mxu0 0
        %812 = vmatprep.subr.bf16.mxu0 0
        %813 = vmatpush1.bf16.msra.mxu0 0
        %814 = vmatprep.subr.bf16.mxu0 0
        %815 = vmatpush1.bf16.msra.mxu0 0
        %816 = vmatprep.subr.bf16.mxu0 0
        %817 = vmatpush1.bf16.msra.mxu0 0
        %818 = vmatprep.subr.bf16.mxu0 0
        %819 = vmatpush1.bf16.msra.mxu0 0
        %820 = vmatprep.subr.bf16.mxu0 0
        %821 = vmatpush1.bf16.msra.mxu0 0
        %822 = vmatprep.subr.bf16.mxu0 0
        %823 = vmatpush1.bf16.msra.mxu0 0
        %824 = vmatprep.subr.bf16.mxu0 0
        %825 = vmatpush1.bf16.msra.mxu0 0
        %826 = vmatprep.subr.bf16.mxu0 0
        %827 = vmatpush1.bf16.msra.mxu0 0
        %828 = vmatprep.subr.bf16.mxu0 0
        %829 = vmatpush1.bf16.msra.mxu0 0
        %830 = vmatprep.mubr.bf16.mxu0 0
        %831 = vmatmul.mubr.bf16.gmra.mrb[0].mxu0 %v412
        %v832 = vpop.f32.mrb[0].mxu0
        %v833 = vadd.f32 0.0, %v832
        %v834 = vpop.f32.mrb[0].mxu0
        %v835 = vadd.f32 0.0, %v834
        %v836 = vpop.f32.mrb[0].mxu0
        %v837 = vpop.f32.mrb[0].mxu0
        %838 = vdwg.mxu0
        %839 = vmatprep.subr.bf16.mxu0 %v467
        %840 = vmatpush1.bf16.msra.mxu0 %v464
        %841 = vmatprep.subr.bf16.mxu0 0
        %842 = vmatpush1.bf16.msra.mxu0 0
        %843 = vmatprep.subr.bf16.mxu0 0
        %844 = vmatpush1.bf16.msra.mxu0 0
        %845 = vmatprep.subr.bf16.mxu0 0
        %846 = vmatpush1.bf16.msra.mxu0 0
        %847 = vmatprep.subr.bf16.mxu0 0
        %848 = vmatpush1.bf16.msra.mxu0 0
        %849 = vmatprep.subr.bf16.mxu0 0
        %850 = vmatpush1.bf16.msra.mxu0 0
        %851 = vmatprep.subr.bf16.mxu0 0
        %852 = vmatpush1.bf16.msra.mxu0 0
        %853 = vmatprep.subr.bf16.mxu0 0
        %854 = vmatpush1.bf16.msra.mxu0 0
        %855 = vmatprep.subr.bf16.mxu0 0
        %856 = vmatpush1.bf16.msra.mxu0 0
        %857 = vmatprep.subr.bf16.mxu0 0
        %858 = vmatpush1.bf16.msra.mxu0 0
        %859 = vmatprep.subr.bf16.mxu0 0
        %860 = vmatpush1.bf16.msra.mxu0 0
        %861 = vmatprep.subr.bf16.mxu0 0
        %862 = vmatpush1.bf16.msra.mxu0 0
        %863 = vmatprep.subr.bf16.mxu0 0
        %864 = vmatpush1.bf16.msra.mxu0 0
        %865 = vmatprep.subr.bf16.mxu0 0
        %866 = vmatpush1.bf16.msra.mxu0 0
        %867 = vmatprep.subr.bf16.mxu0 0
        %868 = vmatpush1.bf16.msra.mxu0 0
        %869 = vmatprep.subr.bf16.mxu0 0
        %870 = vmatpush1.bf16.msra.mxu0 0
        %871 = vmatprep.mubr.bf16.mxu0 0
        %872 = vmatmul.mubr.bf16.gmra.mrb[0].mxu0 %v412
        %v873 = vpop.f32.mrb[0].mxu0
        %v874 = vadd.f32 0.0, %v873
        %v875 = vpop.f32.mrb[0].mxu0
        %v876 = vadd.f32 0.0, %v875
        %v877 = vpop.f32.mrb[0].mxu0
        %v878 = vpop.f32.mrb[0].mxu0
        %879 = vdwg.mxu0
        %880 = vmatprep.subr.bf16.mxu0 %v473
        %881 = vmatpush1.bf16.msra.mxu0 %v470
        %882 = vmatprep.subr.bf16.mxu0 0
        %883 = vmatpush1.bf16.msra.mxu0 0
        %884 = vmatprep.subr.bf16.mxu0 0
        %885 = vmatpush1.bf16.msra.mxu0 0
        %886 = vmatprep.subr.bf16.mxu0 0
        %887 = vmatpush1.bf16.msra.mxu0 0
        %888 = vmatprep.subr.bf16.mxu0 0
        %889 = vmatpush1.bf16.msra.mxu0 0
        %890 = vmatprep.subr.bf16.mxu0 0
        %891 = vmatpush1.bf16.msra.mxu0 0
        %892 = vmatprep.subr.bf16.mxu0 0
        %893 = vmatpush1.bf16.msra.mxu0 0
        %894 = vmatprep.subr.bf16.mxu0 0
        %895 = vmatpush1.bf16.msra.mxu0 0
        %896 = vmatprep.subr.bf16.mxu0 0
        %897 = vmatpush1.bf16.msra.mxu0 0
        %898 = vmatprep.subr.bf16.mxu0 0
        %899 = vmatpush1.bf16.msra.mxu0 0
        %900 = vmatprep.subr.bf16.mxu0 0
        %901 = vmatpush1.bf16.msra.mxu0 0
        %902 = vmatprep.subr.bf16.mxu0 0
        %903 = vmatpush1.bf16.msra.mxu0 0
        %904 = vmatprep.subr.bf16.mxu0 0
        %905 = vmatpush1.bf16.msra.mxu0 0
        %906 = vmatprep.subr.bf16.mxu0 0
        %907 = vmatpush1.bf16.msra.mxu0 0
        %908 = vmatprep.subr.bf16.mxu0 0
        %909 = vmatpush1.bf16.msra.mxu0 0
        %910 = vmatprep.subr.bf16.mxu0 0
        %911 = vmatpush1.bf16.msra.mxu0 0
        %912 = vmatprep.mubr.bf16.mxu0 0
        %913 = vmatmul.mubr.bf16.gmra.mrb[0].mxu0 %v412
        %v914 = vpop.f32.mrb[0].mxu0
        %v915 = vadd.f32 0.0, %v914
        %v916 = vpop.f32.mrb[0].mxu0
        %v917 = vadd.f32 0.0, %v916
        %v918 = vpop.f32.mrb[0].mxu0
        %v919 = vpop.f32.mrb[0].mxu0
        %920 = vdwg.mxu0
        %921 = vmatprep.subr.bf16.mxu0 %v479
        %922 = vmatpush1.bf16.msra.mxu0 %v476
        %923 = vmatprep.subr.bf16.mxu0 0
        %924 = vmatpush1.bf16.msra.mxu0 0
        %925 = vmatprep.subr.bf16.mxu0 0
        %926 = vmatpush1.bf16.msra.mxu0 0
        %927 = vmatprep.subr.bf16.mxu0 0
        %928 = vmatpush1.bf16.msra.mxu0 0
        %929 = vmatprep.subr.bf16.mxu0 0
        %930 = vmatpush1.bf16.msra.mxu0 0
        %931 = vmatprep.subr.bf16.mxu0 0
        %932 = vmatpush1.bf16.msra.mxu0 0
        %933 = vmatprep.subr.bf16.mxu0 0
        %934 = vmatpush1.bf16.msra.mxu0 0
        %935 = vmatprep.subr.bf16.mxu0 0
        %936 = vmatpush1.bf16.msra.mxu0 0
        %937 = vmatprep.subr.bf16.mxu0 0
        %938 = vmatpush1.bf16.msra.mxu0 0
        %939 = vmatprep.subr.bf16.mxu0 0
        %940 = vmatpush1.bf16.msra.mxu0 0
        %941 = vmatprep.subr.bf16.mxu0 0
        %942 = vmatpush1.bf16.msra.mxu0 0
        %943 = vmatprep.subr.bf16.mxu0 0
        %944 = vmatpush1.bf16.msra.mxu0 0
        %945 = vmatprep.subr.bf16.mxu0 0
        %946 = vmatpush1.bf16.msra.mxu0 0
        %947 = vmatprep.subr.bf16.mxu0 0
        %948 = vmatpush1.bf16.msra.mxu0 0
        %949 = vmatprep.subr.bf16.mxu0 0
        %950 = vmatpush1.bf16.msra.mxu0 0
        %951 = vmatprep.subr.bf16.mxu0 0
        %952 = vmatpush1.bf16.msra.mxu0 0
        %953 = vmatprep.mubr.bf16.mxu0 0
        %954 = vmatmul.mubr.bf16.gmra.mrb[0].mxu0 %v412
        %v955 = vpop.f32.mrb[0].mxu0
        %v956 = vadd.f32 0.0, %v955
        %v957 = vpop.f32.mrb[0].mxu0
        %v958 = vadd.f32 0.0, %v957
        %v959 = vpop.f32.mrb[0].mxu0
        %v960 = vpop.f32.mrb[0].mxu0
        %961 = vdwg.mxu0
        %962 = vmatprep.subr.bf16.mxu0 %v485
        %963 = vmatpush1.bf16.msra.mxu0 %v482
        %964 = vmatprep.subr.bf16.mxu0 0
        %965 = vmatpush1.bf16.msra.mxu0 0
        %966 = vmatprep.subr.bf16.mxu0 0
        %967 = vmatpush1.bf16.msra.mxu0 0
        %968 = vmatprep.subr.bf16.mxu0 0
        %969 = vmatpush1.bf16.msra.mxu0 0
        %970 = vmatprep.subr.bf16.mxu0 0
        %971 = vmatpush1.bf16.msra.mxu0 0
        %972 = vmatprep.subr.bf16.mxu0 0
        %973 = vmatpush1.bf16.msra.mxu0 0
        %974 = vmatprep.subr.bf16.mxu0 0
        %975 = vmatpush1.bf16.msra.mxu0 0
        %976 = vmatprep.subr.bf16.mxu0 0
        %977 = vmatpush1.bf16.msra.mxu0 0
        %978 = vmatprep.subr.bf16.mxu0 0
        %979 = vmatpush1.bf16.msra.mxu0 0
        %980 = vmatprep.subr.bf16.mxu0 0
        %981 = vmatpush1.bf16.msra.mxu0 0
        %982 = vmatprep.subr.bf16.mxu0 0
        %983 = vmatpush1.bf16.msra.mxu0 0
        %984 = vmatprep.subr.bf16.mxu0 0
        %985 = vmatpush1.bf16.msra.mxu0 0
        %986 = vmatprep.subr.bf16.mxu0 0
        %987 = vmatpush1.bf16.msra.mxu0 0
        %988 = vmatprep.subr.bf16.mxu0 0
        %989 = vmatpush1.bf16.msra.mxu0 0
        %990 = vmatprep.subr.bf16.mxu0 0
        %991 = vmatpush1.bf16.msra.mxu0 0
        %992 = vmatprep.subr.bf16.mxu0 0
        %993 = vmatpush1.bf16.msra.mxu0 0
        %994 = vmatprep.mubr.bf16.mxu0 0
        %995 = vmatmul.mubr.bf16.gmra.mrb[0].mxu0 %v412
        %v996 = vpop.f32.mrb[0].mxu0
        %v997 = vadd.f32 0.0, %v996
        %v998 = vpop.f32.mrb[0].mxu0
        %v999 = vadd.f32 0.0, %v998
        %v1000 = vpop.f32.mrb[0].mxu0
        %v1001 = vpop.f32.mrb[0].mxu0
        %1002 = vdwg.mxu0
        %1003 = vmatprep.subr.bf16.mxu0 %v491
        %1004 = vmatpush1.bf16.msra.mxu0 %v488
        %1005 = vmatprep.subr.bf16.mxu0 0
        %1006 = vmatpush1.bf16.msra.mxu0 0
        %1007 = vmatprep.subr.bf16.mxu0 0
        %1008 = vmatpush1.bf16.msra.mxu0 0
        %1009 = vmatprep.subr.bf16.mxu0 0
        %1010 = vmatpush1.bf16.msra.mxu0 0
        %1011 = vmatprep.subr.bf16.mxu0 0
        %1012 = vmatpush1.bf16.msra.mxu0 0
        %1013 = vmatprep.subr.bf16.mxu0 0
        %1014 = vmatpush1.bf16.msra.mxu0 0
        %1015 = vmatprep.subr.bf16.mxu0 0
        %1016 = vmatpush1.bf16.msra.mxu0 0
        %1017 = vmatprep.subr.bf16.mxu0 0
        %1018 = vmatpush1.bf16.msra.mxu0 0
        %1019 = vmatprep.subr.bf16.mxu0 0
        %1020 = vmatpush1.bf16.msra.mxu0 0
        %1021 = vmatprep.subr.bf16.mxu0 0
        %1022 = vmatpush1.bf16.msra.mxu0 0
        %1023 = vmatprep.subr.bf16.mxu0 0
        %1024 = vmatpush1.bf16.msra.mxu0 0
        %1025 = vmatprep.subr.bf16.mxu0 0
        %1026 = vmatpush1.bf16.msra.mxu0 0
        %1027 = vmatprep.subr.bf16.mxu0 0
        %1028 = vmatpush1.bf16.msra.mxu0 0
        %1029 = vmatprep.subr.bf16.mxu0 0
        %1030 = vmatpush1.bf16.msra.mxu0 0
        %1031 = vmatprep.subr.bf16.mxu0 0
        %1032 = vmatpush1.bf16.msra.mxu0 0
        %1033 = vmatprep.subr.bf16.mxu0 0
        %1034 = vmatpush1.bf16.msra.mxu0 0
        %1035 = vmatprep.mubr.bf16.mxu0 0
        %1036 = vmatmul.mubr.bf16.gmra.mrb[0].mxu0 %v412
        %v1037 = vpop.f32.mrb[0].mxu0
        %v1038 = vadd.f32 0.0, %v1037
        %v1039 = vpop.f32.mrb[0].mxu0
        %v1040 = vadd.f32 0.0, %v1039
        %v1041 = vpop.f32.mrb[0].mxu0
        %v1042 = vpop.f32.mrb[0].mxu0
        %1043 = vdwg.mxu0
        %1044 = vmatprep.subr.bf16.mxu0 %v497
        %1045 = vmatpush1.bf16.msra.mxu0 %v494
        %1046 = vmatprep.subr.bf16.mxu0 0
        %1047 = vmatpush1.bf16.msra.mxu0 0
        %1048 = vmatprep.subr.bf16.mxu0 0
        %1049 = vmatpush1.bf16.msra.mxu0 0
        %1050 = vmatprep.subr.bf16.mxu0 0
        %1051 = vmatpush1.bf16.msra.mxu0 0
        %1052 = vmatprep.subr.bf16.mxu0 0
        %1053 = vmatpush1.bf16.msra.mxu0 0
        %1054 = vmatprep.subr.bf16.mxu0 0
        %1055 = vmatpush1.bf16.msra.mxu0 0
        %1056 = vmatprep.subr.bf16.mxu0 0
        %1057 = vmatpush1.bf16.msra.mxu0 0
        %1058 = vmatprep.subr.bf16.mxu0 0
        %1059 = vmatpush1.bf16.msra.mxu0 0
        %1060 = vmatprep.subr.bf16.mxu0 0
        %1061 = vmatpush1.bf16.msra.mxu0 0
        %1062 = vmatprep.subr.bf16.mxu0 0
        %1063 = vmatpush1.bf16.msra.mxu0 0
        %1064 = vmatprep.subr.bf16.mxu0 0
        %1065 = vmatpush1.bf16.msra.mxu0 0
        %1066 = vmatprep.subr.bf16.mxu0 0
        %1067 = vmatpush1.bf16.msra.mxu0 0
        %1068 = vmatprep.subr.bf16.mxu0 0
        %1069 = vmatpush1.bf16.msra.mxu0 0
        %1070 = vmatprep.subr.bf16.mxu0 0
        %1071 = vmatpush1.bf16.msra.mxu0 0
        %1072 = vmatprep.subr.bf16.mxu0 0
        %1073 = vmatpush1.bf16.msra.mxu0 0
        %1074 = vmatprep.subr.bf16.mxu0 0
        %1075 = vmatpush1.bf16.msra.mxu0 0
        %1076 = vmatprep.mubr.bf16.mxu0 0
        %1077 = vmatmul.mubr.bf16.gmra.mrb[0].mxu0 %v412
        %v1078 = vpop.f32.mrb[0].mxu0
        %v1079 = vadd.f32 0.0, %v1078
        %v1080 = vpop.f32.mrb[0].mxu0
        %v1081 = vadd.f32 0.0, %v1080
        %v1082 = vpop.f32.mrb[0].mxu0
        %v1083 = vpop.f32.mrb[0].mxu0
        %1084 = vdwg.mxu0
        %1085 = vmatprep.subr.bf16.mxu0 %v503
        %1086 = vmatpush1.bf16.msra.mxu0 %v500
        %1087 = vmatprep.subr.bf16.mxu0 0
        %1088 = vmatpush1.bf16.msra.mxu0 0
        %1089 = vmatprep.subr.bf16.mxu0 0
        %1090 = vmatpush1.bf16.msra.mxu0 0
        %1091 = vmatprep.subr.bf16.mxu0 0
        %1092 = vmatpush1.bf16.msra.mxu0 0
        %1093 = vmatprep.subr.bf16.mxu0 0
        %1094 = vmatpush1.bf16.msra.mxu0 0
        %1095 = vmatprep.subr.bf16.mxu0 0
        %1096 = vmatpush1.bf16.msra.mxu0 0
        %1097 = vmatprep.subr.bf16.mxu0 0
        %1098 = vmatpush1.bf16.msra.mxu0 0
        %1099 = vmatprep.subr.bf16.mxu0 0
        %1100 = vmatpush1.bf16.msra.mxu0 0
        %1101 = vmatprep.subr.bf16.mxu0 0
        %1102 = vmatpush1.bf16.msra.mxu0 0
        %1103 = vmatprep.subr.bf16.mxu0 0
        %1104 = vmatpush1.bf16.msra.mxu0 0
        %1105 = vmatprep.subr.bf16.mxu0 0
        %1106 = vmatpush1.bf16.msra.mxu0 0
        %1107 = vmatprep.subr.bf16.mxu0 0
        %1108 = vmatpush1.bf16.msra.mxu0 0
        %1109 = vmatprep.subr.bf16.mxu0 0
        %1110 = vmatpush1.bf16.msra.mxu0 0
        %1111 = vmatprep.subr.bf16.mxu0 0
        %1112 = vmatpush1.bf16.msra.mxu0 0
        %1113 = vmatprep.subr.bf16.mxu0 0
        %1114 = vmatpush1.bf16.msra.mxu0 0
        %1115 = vmatprep.subr.bf16.mxu0 0
        %1116 = vmatpush1.bf16.msra.mxu0 0
        %1117 = vmatprep.mubr.bf16.mxu0 0
        %1118 = vmatmul.mubr.bf16.gmra.mrb[0].mxu0 %v412
        %v1119 = vpop.f32.mrb[0].mxu0
        %v1120 = vadd.f32 0.0, %v1119
        %v1121 = vpop.f32.mrb[0].mxu0
        %v1122 = vadd.f32 0.0, %v1121
        %v1123 = vpop.f32.mrb[0].mxu0
        %v1124 = vpop.f32.mrb[0].mxu0
        %1125 = vdwg.mxu0
        %1126 = vmatprep.subr.bf16.mxu0 %v509
        %1127 = vmatpush1.bf16.msra.mxu0 %v506
        %1128 = vmatprep.subr.bf16.mxu0 0
        %1129 = vmatpush1.bf16.msra.mxu0 0
        %1130 = vmatprep.subr.bf16.mxu0 0
        %1131 = vmatpush1.bf16.msra.mxu0 0
        %1132 = vmatprep.subr.bf16.mxu0 0
        %1133 = vmatpush1.bf16.msra.mxu0 0
        %1134 = vmatprep.subr.bf16.mxu0 0
        %1135 = vmatpush1.bf16.msra.mxu0 0
        %1136 = vmatprep.subr.bf16.mxu0 0
        %1137 = vmatpush1.bf16.msra.mxu0 0
        %1138 = vmatprep.subr.bf16.mxu0 0
        %1139 = vmatpush1.bf16.msra.mxu0 0
        %1140 = vmatprep.subr.bf16.mxu0 0
        %1141 = vmatpush1.bf16.msra.mxu0 0
        %1142 = vmatprep.subr.bf16.mxu0 0
        %1143 = vmatpush1.bf16.msra.mxu0 0
        %1144 = vmatprep.subr.bf16.mxu0 0
        %1145 = vmatpush1.bf16.msra.mxu0 0
        %1146 = vmatprep.subr.bf16.mxu0 0
        %1147 = vmatpush1.bf16.msra.mxu0 0
        %1148 = vmatprep.subr.bf16.mxu0 0
        %1149 = vmatpush1.bf16.msra.mxu0 0
        %1150 = vmatprep.subr.bf16.mxu0 0
        %1151 = vmatpush1.bf16.msra.mxu0 0
        %1152 = vmatprep.subr.bf16.mxu0 0
        %1153 = vmatpush1.bf16.msra.mxu0 0
        %1154 = vmatprep.subr.bf16.mxu0 0
        %1155 = vmatpush1.bf16.msra.mxu0 0
        %1156 = vmatprep.subr.bf16.mxu0 0
        %1157 = vmatpush1.bf16.msra.mxu0 0
        %1158 = vmatprep.mubr.bf16.mxu0 0
        %1159 = vmatmul.mubr.bf16.gmra.mrb[0].mxu0 %v412
        %v1160 = vpop.f32.mrb[0].mxu0
        %v1161 = vadd.f32 0.0, %v1160
        %v1162 = vpop.f32.mrb[0].mxu0
        %v1163 = vadd.f32 0.0, %v1162
        %v1164 = vpop.f32.mrb[0].mxu0
        %v1165 = vpop.f32.mrb[0].mxu0
        %1166 = vdwg.mxu0
        %v1167 = vadd.f32 %v546, 0.0
        %v1168 = vadd.f32 %v548, 0.0
        %v1169 = vadd.f32 %v587, 0.0
        %v1170 = vadd.f32 %v589, 0.0
        %v1171 = vadd.f32 %v546, %v628
        %v1172 = vadd.f32 %v548, %v630
        %v1173 = vadd.f32 %v587, %v669
        %v1174 = vadd.f32 %v589, %v671
        %v1175 = vadd.f32 %v628, %v710
        %v1176 = vadd.f32 %v630, %v712
        %v1177 = vadd.f32 %v669, %v751
        %v1178 = vadd.f32 %v671, %v753
        %v1179 = vadd.f32 %v710, %v792
        %v1180 = vadd.f32 %v712, %v794
        %v1181 = vadd.f32 %v751, %v833
        %v1182 = vadd.f32 %v753, %v835
        %v1183 = vadd.f32 %v792, %v874
        %v1184 = vadd.f32 %v794, %v876
        %v1185 = vadd.f32 %v833, %v915
        %v1186 = vadd.f32 %v835, %v917
        %v1187 = vadd.f32 %v874, %v956
        %v1188 = vadd.f32 %v876, %v958
        %v1189 = vadd.f32 %v915, %v997
        %v1190 = vadd.f32 %v917, %v999
        %v1191 = vadd.f32 %v956, %v1038
        %v1192 = vadd.f32 %v958, %v1040
        %v1193 = vadd.f32 %v997, %v1079
        %v1194 = vadd.f32 %v999, %v1081
        %v1195 = vadd.f32 %v1038, %v1120
        %v1196 = vadd.f32 %v1040, %v1122
        %v1197 = vadd.f32 %v1079, %v1161
        %v1198 = vadd.f32 %v1081, %v1163
        %v1199 = vadd.f32 %v1167, %v628
        %v1200 = vadd.f32 %v1168, %v630
        %v1201 = vadd.f32 %v1169, %v669
        %v1202 = vadd.f32 %v1170, %v671
        %v1203 = vadd.f32 %v1171, %v710
        %v1204 = vadd.f32 %v1172, %v712
        %v1205 = vadd.f32 %v1173, %v751
        %v1206 = vadd.f32 %v1174, %v753
        %v1207 = vadd.f32 %v1175, %v792
        %v1208 = vadd.f32 %v1176, %v794
        %v1209 = vadd.f32 %v1177, %v833
        %v1210 = vadd.f32 %v1178, %v835
        %v1211 = vadd.f32 %v1179, %v874
        %v1212 = vadd.f32 %v1180, %v876
        %v1213 = vadd.f32 %v1181, %v915
        %v1214 = vadd.f32 %v1182, %v917
        %v1215 = vadd.f32 %v1183, %v956
        %v1216 = vadd.f32 %v1184, %v958
        %v1217 = vadd.f32 %v1185, %v997
        %v1218 = vadd.f32 %v1186, %v999
        %v1219 = vadd.f32 %v1187, %v1038
        %v1220 = vadd.f32 %v1188, %v1040
        %v1221 = vadd.f32 %v1189, %v1079
        %v1222 = vadd.f32 %v1190, %v1081
        %v1223 = vadd.f32 %v1191, %v1120
        %v1224 = vadd.f32 %v1192, %v1122
        %v1225 = vadd.f32 %v1193, %v1161
        %v1226 = vadd.f32 %v1194, %v1163
        %v1227 = vadd.f32 %v1195, 0.0
        %v1228 = vadd.f32 %v1196, 0.0
        %v1229 = vadd.f32 %v1197, 0.0
        %v1230 = vadd.f32 %v1198, 0.0
        %v1231 = vmul.f32 %v1199, 0.33333334
        %v1232 = vmul.f32 %v1200, 0.33333334
        %v1233 = vmul.f32 %v1201, 0.33333334
        %v1234 = vmul.f32 %v1202, 0.33333334
        %v1235 = vmul.f32 %v1203, 0.33333334
        %v1236 = vmul.f32 %v1204, 0.33333334
        %v1237 = vmul.f32 %v1205, 0.33333334
        %v1238 = vmul.f32 %v1206, 0.33333334
        %v1239 = vmul.f32 %v1207, 0.33333334
        %v1240 = vmul.f32 %v1208, 0.33333334
        %v1241 = vmul.f32 %v1209, 0.33333334
        %v1242 = vmul.f32 %v1210, 0.33333334
        %v1243 = vmul.f32 %v1211, 0.33333334
        %v1244 = vmul.f32 %v1212, 0.33333334
        %v1245 = vmul.f32 %v1213, 0.33333334
        %v1246 = vmul.f32 %v1214, 0.33333334
        %v1247 = vmul.f32 %v1215, 0.33333334
        %v1248 = vmul.f32 %v1216, 0.33333334
        %v1249 = vmul.f32 %v1217, 0.33333334
        %v1250 = vmul.f32 %v1218, 0.33333334
        %v1251 = vmul.f32 %v1219, 0.33333334
        %v1252 = vmul.f32 %v1220, 0.33333334
        %v1253 = vmul.f32 %v1221, 0.33333334
        %v1254 = vmul.f32 %v1222, 0.33333334
        %v1255 = vmul.f32 %v1223, 0.33333334
        %v1256 = vmul.f32 %v1224, 0.33333334
        %v1257 = vmul.f32 %v1225, 0.33333334
        %v1258 = vmul.f32 %v1226, 0.33333334
        %v1259 = vmul.f32 %v1227, 0.33333334
        %v1260 = vmul.f32 %v1228, 0.33333334
        %v1261 = vmul.f32 %v1229, 0.33333334
        %v1262 = vmul.f32 %v1230, 0.33333334
        %v1263 = vcombine.low %v1231, %v1239
        %v1264 = vcombine.high %v1231, %v1239
        %v1266 = vunpack.c.l.s4 1983009808
        %v1267 = vunpack.c.0.s8 %v1266
        %v1268 = vlaneseq
        %v1269 = vshrl.u32 %v1268, 7
        %v1270 = vsub.s32 %v1267, %v1269
        %v1271 = vrot.slane %v1263, %v1270
        %v1273 = vunpack.c.l.s4 1983009808
        %v1274 = vunpack.c.0.s8 %v1273
        %v1275 = vlaneseq
        %v1276 = vshrl.u32 %v1275, 7
        %v1277 = vsub.s32 %v1274, %v1276
        %v1278 = vrot.slane %v1264, %v1277
        %v1279 = vcombine.low %v1235, %v1243
        %v1280 = vcombine.high %v1235, %v1243
        %v1282 = vunpack.c.l.s4 1983009808
        %v1283 = vunpack.c.0.s8 %v1282
        %v1284 = vlaneseq
        %v1285 = vshrl.u32 %v1284, 7
        %v1286 = vsub.s32 %v1283, %v1285
        %v1287 = vrot.slane %v1279, %v1286
        %v1289 = vunpack.c.l.s4 1983009808
        %v1290 = vunpack.c.0.s8 %v1289
        %v1291 = vlaneseq
        %v1292 = vshrl.u32 %v1291, 7
        %v1293 = vsub.s32 %v1290, %v1292
        %v1294 = vrot.slane %v1280, %v1293
        %v1295 = vcombine.low %v1247, %v1255
        %v1296 = vcombine.high %v1247, %v1255
        %v1298 = vunpack.c.l.s4 1983009808
        %v1299 = vunpack.c.0.s8 %v1298
        %v1300 = vlaneseq
        %v1301 = vshrl.u32 %v1300, 7
        %v1302 = vsub.s32 %v1299, %v1301
        %v1303 = vrot.slane %v1295, %v1302
        %v1305 = vunpack.c.l.s4 1983009808
        %v1306 = vunpack.c.0.s8 %v1305
        %v1307 = vlaneseq
        %v1308 = vshrl.u32 %v1307, 7
        %v1309 = vsub.s32 %v1306, %v1308
        %v1310 = vrot.slane %v1296, %v1309
        %v1311 = vcombine.low %v1251, %v1259
        %v1312 = vcombine.high %v1251, %v1259
        %v1314 = vunpack.c.l.s4 1983009808
        %v1315 = vunpack.c.0.s8 %v1314
        %v1316 = vlaneseq
        %v1317 = vshrl.u32 %v1316, 7
        %v1318 = vsub.s32 %v1315, %v1317
        %v1319 = vrot.slane %v1311, %v1318
        %v1321 = vunpack.c.l.s4 1983009808
        %v1322 = vunpack.c.0.s8 %v1321
        %v1323 = vlaneseq
        %v1324 = vshrl.u32 %v1323, 7
        %v1325 = vsub.s32 %v1322, %v1324
        %v1326 = vrot.slane %v1312, %v1325
        %v1327 = vcombine.low %v1271, %v1287
        %v1328 = vcombine.high %v1271, %v1287
        %v1330 = vunpack.c.l.s4 1934713408
        %v1331 = vunpack.c.0.s8 %v1330
        %v1332 = vlaneseq
        %v1333 = vshrl.u32 %v1332, 7
        %v1334 = vsub.s32 %v1331, %v1333
        %v1335 = vrot.slane %v1327, %v1334
        %v1337 = vunpack.c.l.s4 1934713408
        %v1338 = vunpack.c.0.s8 %v1337
        %v1339 = vlaneseq
        %v1340 = vshrl.u32 %v1339, 7
        %v1341 = vsub.s32 %v1338, %v1340
        %v1342 = vrot.slane %v1328, %v1341
        %v1343 = vcombine.low %v1278, %v1294
        %v1344 = vcombine.high %v1278, %v1294
        %v1346 = vunpack.c.l.s4 1934713408
        %v1347 = vunpack.c.0.s8 %v1346
        %v1348 = vlaneseq
        %v1349 = vshrl.u32 %v1348, 7
        %v1350 = vsub.s32 %v1347, %v1349
        %v1351 = vrot.slane %v1343, %v1350
        %v1353 = vunpack.c.l.s4 1934713408
        %v1354 = vunpack.c.0.s8 %v1353
        %v1355 = vlaneseq
        %v1356 = vshrl.u32 %v1355, 7
        %v1357 = vsub.s32 %v1354, %v1356
        %v1358 = vrot.slane %v1344, %v1357
        %v1359 = vcombine.low %v1303, %v1319
        %v1360 = vcombine.high %v1303, %v1319
        %v1362 = vunpack.c.l.s4 1934713408
        %v1363 = vunpack.c.0.s8 %v1362
        %v1364 = vlaneseq
        %v1365 = vshrl.u32 %v1364, 7
        %v1366 = vsub.s32 %v1363, %v1365
        %v1367 = vrot.slane %v1359, %v1366
        %v1369 = vunpack.c.l.s4 1934713408
        %v1370 = vunpack.c.0.s8 %v1369
        %v1371 = vlaneseq
        %v1372 = vshrl.u32 %v1371, 7
        %v1373 = vsub.s32 %v1370, %v1372
        %v1374 = vrot.slane %v1360, %v1373
        %v1375 = vcombine.low %v1310, %v1326
        %v1376 = vcombine.high %v1310, %v1326
        %v1378 = vunpack.c.l.s4 1934713408
        %v1379 = vunpack.c.0.s8 %v1378
        %v1380 = vlaneseq
        %v1381 = vshrl.u32 %v1380, 7
        %v1382 = vsub.s32 %v1379, %v1381
        %v1383 = vrot.slane %v1375, %v1382
        %v1385 = vunpack.c.l.s4 1934713408
        %v1386 = vunpack.c.0.s8 %v1385
        %v1387 = vlaneseq
        %v1388 = vshrl.u32 %v1387, 7
        %v1389 = vsub.s32 %v1386, %v1388
        %v1390 = vrot.slane %v1376, %v1389
        %v1391 = vcombine.low %v1335, %v1367
        %v1392 = vcombine.high %v1335, %v1367
        %v1393 = vcombine.low %v1342, %v1374
        %v1394 = vcombine.high %v1342, %v1374
        %v1395 = vcombine.low %v1351, %v1383
        %v1396 = vcombine.high %v1351, %v1383
        %v1397 = vcombine.low %v1358, %v1390
        %v1398 = vcombine.high %v1358, %v1390
        %v1399 = vcombine.low %v1232, %v1240
        %v1400 = vcombine.high %v1232, %v1240
        %v1402 = vunpack.c.l.s4 1983009808
        %v1403 = vunpack.c.0.s8 %v1402
        %v1404 = vlaneseq
        %v1405 = vshrl.u32 %v1404, 7
        %v1406 = vsub.s32 %v1403, %v1405
        %v1407 = vrot.slane %v1399, %v1406
        %v1409 = vunpack.c.l.s4 1983009808
        %v1410 = vunpack.c.0.s8 %v1409
        %v1411 = vlaneseq
        %v1412 = vshrl.u32 %v1411, 7
        %v1413 = vsub.s32 %v1410, %v1412
        %v1414 = vrot.slane %v1400, %v1413
        %v1415 = vcombine.low %v1236, %v1244
        %v1416 = vcombine.high %v1236, %v1244
        %v1418 = vunpack.c.l.s4 1983009808
        %v1419 = vunpack.c.0.s8 %v1418
        %v1420 = vlaneseq
        %v1421 = vshrl.u32 %v1420, 7
        %v1422 = vsub.s32 %v1419, %v1421
        %v1423 = vrot.slane %v1415, %v1422
        %v1425 = vunpack.c.l.s4 1983009808
        %v1426 = vunpack.c.0.s8 %v1425
        %v1427 = vlaneseq
        %v1428 = vshrl.u32 %v1427, 7
        %v1429 = vsub.s32 %v1426, %v1428
        %v1430 = vrot.slane %v1416, %v1429
        %v1431 = vcombine.low %v1248, %v1256
        %v1432 = vcombine.high %v1248, %v1256
        %v1434 = vunpack.c.l.s4 1983009808
        %v1435 = vunpack.c.0.s8 %v1434
        %v1436 = vlaneseq
        %v1437 = vshrl.u32 %v1436, 7
        %v1438 = vsub.s32 %v1435, %v1437
        %v1439 = vrot.slane %v1431, %v1438
        %v1441 = vunpack.c.l.s4 1983009808
        %v1442 = vunpack.c.0.s8 %v1441
        %v1443 = vlaneseq
        %v1444 = vshrl.u32 %v1443, 7
        %v1445 = vsub.s32 %v1442, %v1444
        %v1446 = vrot.slane %v1432, %v1445
        %v1447 = vcombine.low %v1252, %v1260
        %v1448 = vcombine.high %v1252, %v1260
        %v1450 = vunpack.c.l.s4 1983009808
        %v1451 = vunpack.c.0.s8 %v1450
        %v1452 = vlaneseq
        %v1453 = vshrl.u32 %v1452, 7
        %v1454 = vsub.s32 %v1451, %v1453
        %v1455 = vrot.slane %v1447, %v1454
        %v1457 = vunpack.c.l.s4 1983009808
        %v1458 = vunpack.c.0.s8 %v1457
        %v1459 = vlaneseq
        %v1460 = vshrl.u32 %v1459, 7
        %v1461 = vsub.s32 %v1458, %v1460
        %v1462 = vrot.slane %v1448, %v1461
        %v1463 = vcombine.low %v1407, %v1423
        %v1464 = vcombine.high %v1407, %v1423
        %v1466 = vunpack.c.l.s4 1934713408
        %v1467 = vunpack.c.0.s8 %v1466
        %v1468 = vlaneseq
        %v1469 = vshrl.u32 %v1468, 7
        %v1470 = vsub.s32 %v1467, %v1469
        %v1471 = vrot.slane %v1463, %v1470
        %v1473 = vunpack.c.l.s4 1934713408
        %v1474 = vunpack.c.0.s8 %v1473
        %v1475 = vlaneseq
        %v1476 = vshrl.u32 %v1475, 7
        %v1477 = vsub.s32 %v1474, %v1476
        %v1478 = vrot.slane %v1464, %v1477
        %v1479 = vcombine.low %v1414, %v1430
        %v1480 = vcombine.high %v1414, %v1430
        %v1482 = vunpack.c.l.s4 1934713408
        %v1483 = vunpack.c.0.s8 %v1482
        %v1484 = vlaneseq
        %v1485 = vshrl.u32 %v1484, 7
        %v1486 = vsub.s32 %v1483, %v1485
        %v1487 = vrot.slane %v1479, %v1486
        %v1489 = vunpack.c.l.s4 1934713408
        %v1490 = vunpack.c.0.s8 %v1489
        %v1491 = vlaneseq
        %v1492 = vshrl.u32 %v1491, 7
        %v1493 = vsub.s32 %v1490, %v1492
        %v1494 = vrot.slane %v1480, %v1493
        %v1495 = vcombine.low %v1439, %v1455
        %v1496 = vcombine.high %v1439, %v1455
        %v1498 = vunpack.c.l.s4 1934713408
        %v1499 = vunpack.c.0.s8 %v1498
        %v1500 = vlaneseq
        %v1501 = vshrl.u32 %v1500, 7
        %v1502 = vsub.s32 %v1499, %v1501
        %v1503 = vrot.slane %v1495, %v1502
        %v1505 = vunpack.c.l.s4 1934713408
        %v1506 = vunpack.c.0.s8 %v1505
        %v1507 = vlaneseq
        %v1508 = vshrl.u32 %v1507, 7
        %v1509 = vsub.s32 %v1506, %v1508
        %v1510 = vrot.slane %v1496, %v1509
        %v1511 = vcombine.low %v1446, %v1462
        %v1512 = vcombine.high %v1446, %v1462
        %v1514 = vunpack.c.l.s4 1934713408
        %v1515 = vunpack.c.0.s8 %v1514
        %v1516 = vlaneseq
        %v1517 = vshrl.u32 %v1516, 7
        %v1518 = vsub.s32 %v1515, %v1517
        %v1519 = vrot.slane %v1511, %v1518
        %v1521 = vunpack.c.l.s4 1934713408
        %v1522 = vunpack.c.0.s8 %v1521
        %v1523 = vlaneseq
        %v1524 = vshrl.u32 %v1523, 7
        %v1525 = vsub.s32 %v1522, %v1524
        %v1526 = vrot.slane %v1512, %v1525
        %v1527 = vcombine.low %v1471, %v1503
        %v1528 = vcombine.high %v1471, %v1503
        %v1529 = vcombine.low %v1478, %v1510
        %v1530 = vcombine.high %v1478, %v1510
        %v1531 = vcombine.low %v1487, %v1519
        %v1532 = vcombine.high %v1487, %v1519
        %v1533 = vcombine.low %v1494, %v1526
        %v1534 = vcombine.high %v1494, %v1526
        %v1535 = vcombine.low %v1233, %v1241
        %v1536 = vcombine.high %v1233, %v1241
        %v1538 = vunpack.c.l.s4 1983009808
        %v1539 = vunpack.c.0.s8 %v1538
        %v1540 = vlaneseq
        %v1541 = vshrl.u32 %v1540, 7
        %v1542 = vsub.s32 %v1539, %v1541
        %v1543 = vrot.slane %v1535, %v1542
        %v1545 = vunpack.c.l.s4 1983009808
        %v1546 = vunpack.c.0.s8 %v1545
        %v1547 = vlaneseq
        %v1548 = vshrl.u32 %v1547, 7
        %v1549 = vsub.s32 %v1546, %v1548
        %v1550 = vrot.slane %v1536, %v1549
        %v1551 = vcombine.low %v1237, %v1245
        %v1552 = vcombine.high %v1237, %v1245
        %v1554 = vunpack.c.l.s4 1983009808
        %v1555 = vunpack.c.0.s8 %v1554
        %v1556 = vlaneseq
        %v1557 = vshrl.u32 %v1556, 7
        %v1558 = vsub.s32 %v1555, %v1557
        %v1559 = vrot.slane %v1551, %v1558
        %v1561 = vunpack.c.l.s4 1983009808
        %v1562 = vunpack.c.0.s8 %v1561
        %v1563 = vlaneseq
        %v1564 = vshrl.u32 %v1563, 7
        %v1565 = vsub.s32 %v1562, %v1564
        %v1566 = vrot.slane %v1552, %v1565
        %v1567 = vcombine.low %v1249, %v1257
        %v1568 = vcombine.high %v1249, %v1257
        %v1570 = vunpack.c.l.s4 1983009808
        %v1571 = vunpack.c.0.s8 %v1570
        %v1572 = vlaneseq
        %v1573 = vshrl.u32 %v1572, 7
        %v1574 = vsub.s32 %v1571, %v1573
        %v1575 = vrot.slane %v1567, %v1574
        %v1577 = vunpack.c.l.s4 1983009808
        %v1578 = vunpack.c.0.s8 %v1577
        %v1579 = vlaneseq
        %v1580 = vshrl.u32 %v1579, 7
        %v1581 = vsub.s32 %v1578, %v1580
        %v1582 = vrot.slane %v1568, %v1581
        %v1583 = vcombine.low %v1253, %v1261
        %v1584 = vcombine.high %v1253, %v1261
        %v1586 = vunpack.c.l.s4 1983009808
        %v1587 = vunpack.c.0.s8 %v1586
        %v1588 = vlaneseq
        %v1589 = vshrl.u32 %v1588, 7
        %v1590 = vsub.s32 %v1587, %v1589
        %v1591 = vrot.slane %v1583, %v1590
        %v1593 = vunpack.c.l.s4 1983009808
        %v1594 = vunpack.c.0.s8 %v1593
        %v1595 = vlaneseq
        %v1596 = vshrl.u32 %v1595, 7
        %v1597 = vsub.s32 %v1594, %v1596
        %v1598 = vrot.slane %v1584, %v1597
        %v1599 = vcombine.low %v1543, %v1559
        %v1600 = vcombine.high %v1543, %v1559
        %v1602 = vunpack.c.l.s4 1934713408
        %v1603 = vunpack.c.0.s8 %v1602
        %v1604 = vlaneseq
        %v1605 = vshrl.u32 %v1604, 7
        %v1606 = vsub.s32 %v1603, %v1605
        %v1607 = vrot.slane %v1599, %v1606
        %v1609 = vunpack.c.l.s4 1934713408
        %v1610 = vunpack.c.0.s8 %v1609
        %v1611 = vlaneseq
        %v1612 = vshrl.u32 %v1611, 7
        %v1613 = vsub.s32 %v1610, %v1612
        %v1614 = vrot.slane %v1600, %v1613
        %v1615 = vcombine.low %v1550, %v1566
        %v1616 = vcombine.high %v1550, %v1566
        %v1618 = vunpack.c.l.s4 1934713408
        %v1619 = vunpack.c.0.s8 %v1618
        %v1620 = vlaneseq
        %v1621 = vshrl.u32 %v1620, 7
        %v1622 = vsub.s32 %v1619, %v1621
        %v1623 = vrot.slane %v1615, %v1622
        %v1625 = vunpack.c.l.s4 1934713408
        %v1626 = vunpack.c.0.s8 %v1625
        %v1627 = vlaneseq
        %v1628 = vshrl.u32 %v1627, 7
        %v1629 = vsub.s32 %v1626, %v1628
        %v1630 = vrot.slane %v1616, %v1629
        %v1631 = vcombine.low %v1575, %v1591
        %v1632 = vcombine.high %v1575, %v1591
        %v1634 = vunpack.c.l.s4 1934713408
        %v1635 = vunpack.c.0.s8 %v1634
        %v1636 = vlaneseq
        %v1637 = vshrl.u32 %v1636, 7
        %v1638 = vsub.s32 %v1635, %v1637
        %v1639 = vrot.slane %v1631, %v1638
        %v1641 = vunpack.c.l.s4 1934713408
        %v1642 = vunpack.c.0.s8 %v1641
        %v1643 = vlaneseq
        %v1644 = vshrl.u32 %v1643, 7
        %v1645 = vsub.s32 %v1642, %v1644
        %v1646 = vrot.slane %v1632, %v1645
        %v1647 = vcombine.low %v1582, %v1598
        %v1648 = vcombine.high %v1582, %v1598
        %v1650 = vunpack.c.l.s4 1934713408
        %v1651 = vunpack.c.0.s8 %v1650
        %v1652 = vlaneseq
        %v1653 = vshrl.u32 %v1652, 7
        %v1654 = vsub.s32 %v1651, %v1653
        %v1655 = vrot.slane %v1647, %v1654
        %v1657 = vunpack.c.l.s4 1934713408
        %v1658 = vunpack.c.0.s8 %v1657
        %v1659 = vlaneseq
        %v1660 = vshrl.u32 %v1659, 7
        %v1661 = vsub.s32 %v1658, %v1660
        %v1662 = vrot.slane %v1648, %v1661
        %v1663 = vcombine.low %v1607, %v1639
        %v1664 = vcombine.high %v1607, %v1639
        %v1665 = vcombine.low %v1614, %v1646
        %v1666 = vcombine.high %v1614, %v1646
        %v1667 = vcombine.low %v1623, %v1655
        %v1668 = vcombine.high %v1623, %v1655
        %v1669 = vcombine.low %v1630, %v1662
        %v1670 = vcombine.high %v1630, %v1662
        %v1671 = vcombine.low %v1234, %v1242
        %v1672 = vcombine.high %v1234, %v1242
        %v1674 = vunpack.c.l.s4 1983009808
        %v1675 = vunpack.c.0.s8 %v1674
        %v1676 = vlaneseq
        %v1677 = vshrl.u32 %v1676, 7
        %v1678 = vsub.s32 %v1675, %v1677
        %v1679 = vrot.slane %v1671, %v1678
        %v1681 = vunpack.c.l.s4 1983009808
        %v1682 = vunpack.c.0.s8 %v1681
        %v1683 = vlaneseq
        %v1684 = vshrl.u32 %v1683, 7
        %v1685 = vsub.s32 %v1682, %v1684
        %v1686 = vrot.slane %v1672, %v1685
        %v1687 = vcombine.low %v1238, %v1246
        %v1688 = vcombine.high %v1238, %v1246
        %v1690 = vunpack.c.l.s4 1983009808
        %v1691 = vunpack.c.0.s8 %v1690
        %v1692 = vlaneseq
        %v1693 = vshrl.u32 %v1692, 7
        %v1694 = vsub.s32 %v1691, %v1693
        %v1695 = vrot.slane %v1687, %v1694
        %v1697 = vunpack.c.l.s4 1983009808
        %v1698 = vunpack.c.0.s8 %v1697
        %v1699 = vlaneseq
        %v1700 = vshrl.u32 %v1699, 7
        %v1701 = vsub.s32 %v1698, %v1700
        %v1702 = vrot.slane %v1688, %v1701
        %v1703 = vcombine.low %v1250, %v1258
        %v1704 = vcombine.high %v1250, %v1258
        %v1706 = vunpack.c.l.s4 1983009808
        %v1707 = vunpack.c.0.s8 %v1706
        %v1708 = vlaneseq
        %v1709 = vshrl.u32 %v1708, 7
        %v1710 = vsub.s32 %v1707, %v1709
        %v1711 = vrot.slane %v1703, %v1710
        %v1713 = vunpack.c.l.s4 1983009808
        %v1714 = vunpack.c.0.s8 %v1713
        %v1715 = vlaneseq
        %v1716 = vshrl.u32 %v1715, 7
        %v1717 = vsub.s32 %v1714, %v1716
        %v1718 = vrot.slane %v1704, %v1717
        %v1719 = vcombine.low %v1254, %v1262
        %v1720 = vcombine.high %v1254, %v1262
        %v1722 = vunpack.c.l.s4 1983009808
        %v1723 = vunpack.c.0.s8 %v1722
        %v1724 = vlaneseq
        %v1725 = vshrl.u32 %v1724, 7
        %v1726 = vsub.s32 %v1723, %v1725
        %v1727 = vrot.slane %v1719, %v1726
        %v1729 = vunpack.c.l.s4 1983009808
        %v1730 = vunpack.c.0.s8 %v1729
        %v1731 = vlaneseq
        %v1732 = vshrl.u32 %v1731, 7
        %v1733 = vsub.s32 %v1730, %v1732
        %v1734 = vrot.slane %v1720, %v1733
        %v1735 = vcombine.low %v1679, %v1695
        %v1736 = vcombine.high %v1679, %v1695
        %v1738 = vunpack.c.l.s4 1934713408
        %v1739 = vunpack.c.0.s8 %v1738
        %v1740 = vlaneseq
        %v1741 = vshrl.u32 %v1740, 7
        %v1742 = vsub.s32 %v1739, %v1741
        %v1743 = vrot.slane %v1735, %v1742
        %v1745 = vunpack.c.l.s4 1934713408
        %v1746 = vunpack.c.0.s8 %v1745
        %v1747 = vlaneseq
        %v1748 = vshrl.u32 %v1747, 7
        %v1749 = vsub.s32 %v1746, %v1748
        %v1750 = vrot.slane %v1736, %v1749
        %v1751 = vcombine.low %v1686, %v1702
        %v1752 = vcombine.high %v1686, %v1702
        %v1754 = vunpack.c.l.s4 1934713408
        %v1755 = vunpack.c.0.s8 %v1754
        %v1756 = vlaneseq
        %v1757 = vshrl.u32 %v1756, 7
        %v1758 = vsub.s32 %v1755, %v1757
        %v1759 = vrot.slane %v1751, %v1758
        %v1761 = vunpack.c.l.s4 1934713408
        %v1762 = vunpack.c.0.s8 %v1761
        %v1763 = vlaneseq
        %v1764 = vshrl.u32 %v1763, 7
        %v1765 = vsub.s32 %v1762, %v1764
        %v1766 = vrot.slane %v1752, %v1765
        %v1767 = vcombine.low %v1711, %v1727
        %v1768 = vcombine.high %v1711, %v1727
        %v1770 = vunpack.c.l.s4 1934713408
        %v1771 = vunpack.c.0.s8 %v1770
        %v1772 = vlaneseq
        %v1773 = vshrl.u32 %v1772, 7
        %v1774 = vsub.s32 %v1771, %v1773
        %v1775 = vrot.slane %v1767, %v1774
        %v1777 = vunpack.c.l.s4 1934713408
        %v1778 = vunpack.c.0.s8 %v1777
        %v1779 = vlaneseq
        %v1780 = vshrl.u32 %v1779, 7
        %v1781 = vsub.s32 %v1778, %v1780
        %v1782 = vrot.slane %v1768, %v1781
        %v1783 = vcombine.low %v1718, %v1734
        %v1784 = vcombine.high %v1718, %v1734
        %v1786 = vunpack.c.l.s4 1934713408
        %v1787 = vunpack.c.0.s8 %v1786
        %v1788 = vlaneseq
        %v1789 = vshrl.u32 %v1788, 7
        %v1790 = vsub.s32 %v1787, %v1789
        %v1791 = vrot.slane %v1783, %v1790
        %v1793 = vunpack.c.l.s4 1934713408
        %v1794 = vunpack.c.0.s8 %v1793
        %v1795 = vlaneseq
        %v1796 = vshrl.u32 %v1795, 7
        %v1797 = vsub.s32 %v1794, %v1796
        %v1798 = vrot.slane %v1784, %v1797
        %v1799 = vcombine.low %v1743, %v1775
        %v1800 = vcombine.high %v1743, %v1775
        %v1801 = vcombine.low %v1750, %v1782
        %v1802 = vcombine.high %v1750, %v1782
        %v1803 = vcombine.low %v1759, %v1791
        %v1804 = vcombine.high %v1759, %v1791
        %v1805 = vcombine.low %v1766, %v1798
        %v1806 = vcombine.high %v1766, %v1798
        %v1807 = vpack.c.bf16 %v1391, %v1391
        %v1808 = vpack.c.bf16 %v1527, %v1527
        %v1809 = vpack.c.bf16 %v1663, %v1663
        %v1810 = vpack.c.bf16 %v1799, %v1799
        %v1811 = vpack.c.bf16 %v1392, %v1392
        %v1812 = vpack.c.bf16 %v1528, %v1528
        %v1813 = vpack.c.bf16 %v1664, %v1664
        %v1814 = vpack.c.bf16 %v1800, %v1800
        %v1815 = vpack.c.bf16 %v1393, %v1393
        %v1816 = vpack.c.bf16 %v1529, %v1529
        %v1817 = vpack.c.bf16 %v1665, %v1665
        %v1818 = vpack.c.bf16 %v1801, %v1801
        %v1819 = vpack.c.bf16 %v1394, %v1394
        %v1820 = vpack.c.bf16 %v1530, %v1530
        %v1821 = vpack.c.bf16 %v1666, %v1666
        %v1822 = vpack.c.bf16 %v1802, %v1802
        %v1823 = vpack.c.bf16 %v1395, %v1395
        %v1824 = vpack.c.bf16 %v1531, %v1531
        %v1825 = vpack.c.bf16 %v1667, %v1667
        %v1826 = vpack.c.bf16 %v1803, %v1803
        %v1827 = vpack.c.bf16 %v1396, %v1396
        %v1828 = vpack.c.bf16 %v1532, %v1532
        %v1829 = vpack.c.bf16 %v1668, %v1668
        %v1830 = vpack.c.bf16 %v1804, %v1804
        %v1831 = vpack.c.bf16 %v1397, %v1397
        %v1832 = vpack.c.bf16 %v1533, %v1533
        %v1833 = vpack.c.bf16 %v1669, %v1669
        %v1834 = vpack.c.bf16 %v1805, %v1805
        %v1835 = vpack.c.bf16 %v1398, %v1398
        %v1836 = vpack.c.bf16 %v1534, %v1534
        %v1837 = vpack.c.bf16 %v1670, %v1670
        %v1838 = vpack.c.bf16 %v1806, %v1806
        %v1871 = vunpack.c.l.b16 %v1807
        %v1872 = vunpack.c.l.b16 %v1808
        %v1873 = vunpack.c.l.b16 %v1809
        %v1874 = vunpack.c.l.b16 %v1810
        %v1875 = vunpack.c.l.b16 %v1811
        %v1876 = vunpack.c.l.b16 %v1812
        %v1877 = vunpack.c.l.b16 %v1813
        %v1878 = vunpack.c.l.b16 %v1814
        %v1879 = vunpack.c.l.b16 %v1815
        %v1880 = vunpack.c.l.b16 %v1816
        %v1881 = vunpack.c.l.b16 %v1817
        %v1882 = vunpack.c.l.b16 %v1818
        %v1883 = vunpack.c.l.b16 %v1819
        %v1884 = vunpack.c.l.b16 %v1820
        %v1885 = vunpack.c.l.b16 %v1821
        %v1886 = vunpack.c.l.b16 %v1822
        %v1887 = vunpack.c.l.b16 %v1823
        %v1888 = vunpack.c.l.b16 %v1824
        %v1889 = vunpack.c.l.b16 %v1825
        %v1890 = vunpack.c.l.b16 %v1826
        %v1891 = vunpack.c.l.b16 %v1827
        %v1892 = vunpack.c.l.b16 %v1828
        %v1893 = vunpack.c.l.b16 %v1829
        %v1894 = vunpack.c.l.b16 %v1830
        %v1895 = vunpack.c.l.b16 %v1831
        %v1896 = vunpack.c.l.b16 %v1832
        %v1897 = vunpack.c.l.b16 %v1833
        %v1898 = vunpack.c.l.b16 %v1834
        %v1899 = vunpack.c.l.b16 %v1835
        %v1900 = vunpack.c.l.b16 %v1836
        %v1901 = vunpack.c.l.b16 %v1837
        %v1902 = vunpack.c.l.b16 %v1838
        %v1903 = vpack.c.b16 %v1872, %v1871
        %v1904 = vpack.c.b16 %v1874, %v1873
        %v1905 = vpack.c.b16 %v1876, %v1875
        %v1906 = vpack.c.b16 %v1878, %v1877
        %v1907 = vpack.c.b16 %v1880, %v1879
        %v1908 = vpack.c.b16 %v1882, %v1881
        %v1909 = vpack.c.b16 %v1884, %v1883
        %v1910 = vpack.c.b16 %v1886, %v1885
        %v1911 = vpack.c.b16 %v1888, %v1887
        %v1912 = vpack.c.b16 %v1890, %v1889
        %v1913 = vpack.c.b16 %v1892, %v1891
        %v1914 = vpack.c.b16 %v1894, %v1893
        %v1915 = vpack.c.b16 %v1896, %v1895
        %v1916 = vpack.c.b16 %v1898, %v1897
        %v1917 = vpack.c.b16 %v1900, %v1899
        %v1918 = vpack.c.b16 %v1902, %v1901
        %1935 = vst [vmem:[%s309] sm:$0xff] %v1903
        %1936 = vst [vmem:[%s309 + $0x8] sm:$0xff] %v1904
        %1937 = vst [vmem:[%s309 + $0x30] sm:$0xff] %v1905
        %1938 = vst [vmem:[%s309 + $0x38] sm:$0xff] %v1906
        %1939 = vst [vmem:[%s309 + $0x60] sm:$0xff] %v1907
        %1940 = vst [vmem:[%s309 + $0x68] sm:$0xff] %v1908
        %1941 = vst [vmem:[%s309 + $0x90] sm:$0xff] %v1909
        %1942 = vst [vmem:[%s309 + $0x98] sm:$0xff] %v1910
        %1943 = vst [vmem:[%s309 + $0xc0] sm:$0xff] %v1911
        %1944 = vst [vmem:[%s309 + $0xc8] sm:$0xff] %v1912
        %1945 = vst [vmem:[%s309 + $0xf0] sm:$0xff] %v1913
        %1946 = vst [vmem:[%s309 + $0xf8] sm:$0xff] %v1914
        %1947 = vst [vmem:[%s309 + $0x120] sm:$0xff] %v1915
        %1948 = vst [vmem:[%s309 + $0x128] sm:$0xff] %v1916
        %1949 = vst [vmem:[%s309 + $0x150] sm:$0xff] %v1917
        %1950 = vst [vmem:[%s309 + $0x158] sm:$0xff] %v1918
        %v1951 = vld [vmem:[#allocation8] sm:$0xf]
        %v1952 = vld [vmem:[#allocation8 + $0x4] sm:$0xf]
        %v1953 = vld [vmem:[#allocation8 + $0x8] sm:$0xf]
        %v1954 = vld [vmem:[#allocation8 + $0xc] sm:$0xf]
        %v1955 = vld [vmem:[#allocation8 + $0x10] sm:$0xf]
        %v1956 = vld [vmem:[#allocation8 + $0x14] sm:$0xf]
        %v1957 = vld [vmem:[#allocation8 + $0x18] sm:$0xf]
        %v1958 = vld [vmem:[#allocation8 + $0x1c] sm:$0xf]
        %v1959 = vld [vmem:[%s272] sm:$0xff]
        %v1960 = vld [vmem:[%s272 + $0x8] sm:$0xff]
        %v1961 = vld [vmem:[%s272 + $0x10] sm:$0xff]
        %v1962 = vld [vmem:[%s272 + $0x18] sm:$0xff]
        %v1963 = vld [vmem:[%s272 + $0x20] sm:$0xff]
        %v1964 = vld [vmem:[%s272 + $0x28] sm:$0xff]
        %v1965 = vld [vmem:[%s272 + $0x30] sm:$0xff]
        %v1966 = vld [vmem:[%s272 + $0x38] sm:$0xff]
        %v1975 = vunpack.c.l.b16 %v1951
        %v1976 = vunpack.c.l.b16 %v1952
        %v1977 = vunpack.c.l.b16 %v1953
        %v1978 = vunpack.c.l.b16 %v1954
        %v1979 = vunpack.c.l.b16 %v1955
        %v1980 = vunpack.c.l.b16 %v1956
        %v1981 = vunpack.c.l.b16 %v1957
        %v1982 = vunpack.c.l.b16 %v1958
        %v1983 = vpack.c.b16 %v1976, %v1975
        %v1984 = vpack.c.b16 %v1978, %v1977
        %v1985 = vpack.c.b16 %v1980, %v1979
        %v1986 = vpack.c.b16 %v1982, %v1981
        %v1995 = vunpack.c.l.b16 %v1959
        %v1996 = vunpack.c.h.b16 %v1959
        %v1997 = vunpack.c.l.b16 %v1960
        %v1998 = vunpack.c.h.b16 %v1960
        %v1999 = vunpack.c.l.b16 %v1961
        %v2000 = vunpack.c.h.b16 %v1961
        %v2001 = vunpack.c.l.b16 %v1962
        %v2002 = vunpack.c.h.b16 %v1962
        %v2003 = vunpack.c.l.b16 %v1963
        %v2004 = vunpack.c.h.b16 %v1963
        %v2005 = vunpack.c.l.b16 %v1964
        %v2006 = vunpack.c.h.b16 %v1964
        %v2007 = vunpack.c.l.b16 %v1965
        %v2008 = vunpack.c.h.b16 %v1965
        %v2009 = vunpack.c.l.b16 %v1966
        %v2010 = vunpack.c.h.b16 %v1966
        %v2011 = vpack.c.b16 %v2003, %v1995
        %v2012 = vpack.c.b16 %v2004, %v1996
        %v2013 = vpack.c.b16 %v2005, %v1997
        %v2014 = vpack.c.b16 %v2006, %v1998
        %v2015 = vpack.c.b16 %v2007, %v1999
        %v2016 = vpack.c.b16 %v2008, %v2000
        %v2017 = vpack.c.b16 %v2009, %v2001
        %v2018 = vpack.c.b16 %v2010, %v2002
        %vm2027 = vcmask 130048
        %v2029 = vsel %vm2027, %v1983, 0
        %v2032 = vsel %vm2027, %v1984, 0
        %v2035 = vsel %vm2027, %v1985, 0
        %v2038 = vsel %vm2027, %v1986, 0
        %2040 = vmatprep.subr.bf16.mxu0 %v2012
        %2041 = vmatpush1.bf16.msra.mxu0 %v2011
        %2042 = vmatprep.subr.bf16.mxu0 0
        %2043 = vmatpush1.bf16.msra.mxu0 0
        %2044 = vmatprep.subr.bf16.mxu0 0
        %2045 = vmatpush1.bf16.msra.mxu0 0
        %2046 = vmatprep.subr.bf16.mxu0 0
        %2047 = vmatpush1.bf16.msra.mxu0 0
        %2048 = vmatprep.subr.bf16.mxu0 0
        %2049 = vmatpush1.bf16.msra.mxu0 0
        %2050 = vmatprep.subr.bf16.mxu0 0
        %2051 = vmatpush1.bf16.msra.mxu0 0
        %2052 = vmatprep.subr.bf16.mxu0 0
        %2053 = vmatpush1.bf16.msra.mxu0 0
        %2054 = vmatprep.subr.bf16.mxu0 0
        %2055 = vmatpush1.bf16.msra.mxu0 0
        %2056 = vmatprep.subr.bf16.mxu0 0
        %2057 = vmatpush1.bf16.msra.mxu0 0
        %2058 = vmatprep.subr.bf16.mxu0 0
        %2059 = vmatpush1.bf16.msra.mxu0 0
        %2060 = vmatprep.subr.bf16.mxu0 0
        %2061 = vmatpush1.bf16.msra.mxu0 0
        %2062 = vmatprep.subr.bf16.mxu0 0
        %2063 = vmatpush1.bf16.msra.mxu0 0
        %2064 = vmatprep.subr.bf16.mxu0 0
        %2065 = vmatpush1.bf16.msra.mxu0 0
        %2066 = vmatprep.subr.bf16.mxu0 0
        %2067 = vmatpush1.bf16.msra.mxu0 0
        %2068 = vmatprep.subr.bf16.mxu0 0
        %2069 = vmatpush1.bf16.msra.mxu0 0
        %2070 = vmatprep.subr.bf16.mxu0 0
        %2071 = vmatpush1.bf16.msra.mxu0 0
        %2072 = vmatprep.mubr.bf16.mxu0 0
        %2073 = vmatmul.mubr.bf16.gmra.mrb[0].mxu0 %v2029
        %v2074 = vpop.f32.mrb[0].mxu0
        %v2075 = vadd.f32 0.0, %v2074
        %v2076 = vpop.f32.mrb[0].mxu0
        %v2077 = vadd.f32 0.0, %v2076
        %v2078 = vpop.f32.mrb[0].mxu0
        %v2079 = vadd.f32 0.0, %v2078
        %v2080 = vpop.f32.mrb[0].mxu0
        %v2081 = vadd.f32 0.0, %v2080
        %2082 = vmatprep.mubr.bf16.mxu0 0
        %2083 = vmatmul.mubr.bf16.gmra.mrb[0].mxu0 %v2032
        %v2084 = vpop.f32.mrb[0].mxu0
        %v2085 = vadd.f32 0.0, %v2084
        %v2086 = vpop.f32.mrb[0].mxu0
        %v2087 = vadd.f32 0.0, %v2086
        %v2088 = vpop.f32.mrb[0].mxu0
        %v2089 = vadd.f32 0.0, %v2088
        %v2090 = vpop.f32.mrb[0].mxu0
        %v2091 = vadd.f32 0.0, %v2090
        %2092 = vmatprep.mubr.bf16.mxu0 0
        %2093 = vmatmul.mubr.bf16.gmra.mrb[0].mxu0 %v2035
        %v2094 = vpop.f32.mrb[0].mxu0
        %v2095 = vadd.f32 0.0, %v2094
        %v2096 = vpop.f32.mrb[0].mxu0
        %v2097 = vadd.f32 0.0, %v2096
        %v2098 = vpop.f32.mrb[0].mxu0
        %v2099 = vadd.f32 0.0, %v2098
        %v2100 = vpop.f32.mrb[0].mxu0
        %v2101 = vadd.f32 0.0, %v2100
        %2102 = vmatprep.mubr.bf16.mxu0 0
        %2103 = vmatmul.mubr.bf16.gmra.mrb[0].mxu0 %v2038
        %v2104 = vpop.f32.mrb[0].mxu0
        %v2105 = vadd.f32 0.0, %v2104
        %v2106 = vpop.f32.mrb[0].mxu0
        %v2107 = vadd.f32 0.0, %v2106
        %v2108 = vpop.f32.mrb[0].mxu0
        %v2109 = vadd.f32 0.0, %v2108
        %v2110 = vpop.f32.mrb[0].mxu0
        %v2111 = vadd.f32 0.0, %v2110
        %2112 = vdwg.mxu0
        %2113 = vmatprep.subr.bf16.mxu0 %v2014
        %2114 = vmatpush1.bf16.msra.mxu0 %v2013
        %2115 = vmatprep.subr.bf16.mxu0 0
        %2116 = vmatpush1.bf16.msra.mxu0 0
        %2117 = vmatprep.subr.bf16.mxu0 0
        %2118 = vmatpush1.bf16.msra.mxu0 0
        %2119 = vmatprep.subr.bf16.mxu0 0
        %2120 = vmatpush1.bf16.msra.mxu0 0
        %2121 = vmatprep.subr.bf16.mxu0 0
        %2122 = vmatpush1.bf16.msra.mxu0 0
        %2123 = vmatprep.subr.bf16.mxu0 0
        %2124 = vmatpush1.bf16.msra.mxu0 0
        %2125 = vmatprep.subr.bf16.mxu0 0
        %2126 = vmatpush1.bf16.msra.mxu0 0
        %2127 = vmatprep.subr.bf16.mxu0 0
        %2128 = vmatpush1.bf16.msra.mxu0 0
        %2129 = vmatprep.subr.bf16.mxu0 0
        %2130 = vmatpush1.bf16.msra.mxu0 0
        %2131 = vmatprep.subr.bf16.mxu0 0
        %2132 = vmatpush1.bf16.msra.mxu0 0
        %2133 = vmatprep.subr.bf16.mxu0 0
        %2134 = vmatpush1.bf16.msra.mxu0 0
        %2135 = vmatprep.subr.bf16.mxu0 0
        %2136 = vmatpush1.bf16.msra.mxu0 0
        %2137 = vmatprep.subr.bf16.mxu0 0
        %2138 = vmatpush1.bf16.msra.mxu0 0
        %2139 = vmatprep.subr.bf16.mxu0 0
        %2140 = vmatpush1.bf16.msra.mxu0 0
        %2141 = vmatprep.subr.bf16.mxu0 0
        %2142 = vmatpush1.bf16.msra.mxu0 0
        %2143 = vmatprep.subr.bf16.mxu0 0
        %2144 = vmatpush1.bf16.msra.mxu0 0
        %2145 = vmatprep.mubr.bf16.mxu0 0
        %2146 = vmatmul.mubr.bf16.gmra.mrb[0].mxu0 %v2029
        %v2147 = vpop.f32.mrb[0].mxu0
        %v2148 = vadd.f32 0.0, %v2147
        %v2149 = vpop.f32.mrb[0].mxu0
        %v2150 = vadd.f32 0.0, %v2149
        %v2151 = vpop.f32.mrb[0].mxu0
        %v2152 = vadd.f32 0.0, %v2151
        %v2153 = vpop.f32.mrb[0].mxu0
        %v2154 = vadd.f32 0.0, %v2153
        %2155 = vmatprep.mubr.bf16.mxu0 0
        %2156 = vmatmul.mubr.bf16.gmra.mrb[0].mxu0 %v2032
        %v2157 = vpop.f32.mrb[0].mxu0
        %v2158 = vadd.f32 0.0, %v2157
        %v2159 = vpop.f32.mrb[0].mxu0
        %v2160 = vadd.f32 0.0, %v2159
        %v2161 = vpop.f32.mrb[0].mxu0
        %v2162 = vadd.f32 0.0, %v2161
        %v2163 = vpop.f32.mrb[0].mxu0
        %v2164 = vadd.f32 0.0, %v2163
        %2165 = vmatprep.mubr.bf16.mxu0 0
        %2166 = vmatmul.mubr.bf16.gmra.mrb[0].mxu0 %v2035
        %v2167 = vpop.f32.mrb[0].mxu0
        %v2168 = vadd.f32 0.0, %v2167
        %v2169 = vpop.f32.mrb[0].mxu0
        %v2170 = vadd.f32 0.0, %v2169
        %v2171 = vpop.f32.mrb[0].mxu0
        %v2172 = vadd.f32 0.0, %v2171
        %v2173 = vpop.f32.mrb[0].mxu0
        %v2174 = vadd.f32 0.0, %v2173
        %2175 = vmatprep.mubr.bf16.mxu0 0
        %2176 = vmatmul.mubr.bf16.gmra.mrb[0].mxu0 %v2038
        %v2177 = vpop.f32.mrb[0].mxu0
        %v2178 = vadd.f32 0.0, %v2177
        %v2179 = vpop.f32.mrb[0].mxu0
        %v2180 = vadd.f32 0.0, %v2179
        %v2181 = vpop.f32.mrb[0].mxu0
        %v2182 = vadd.f32 0.0, %v2181
        %v2183 = vpop.f32.mrb[0].mxu0
        %v2184 = vadd.f32 0.0, %v2183
        %2185 = vdwg.mxu0
        %2186 = vmatprep.subr.bf16.mxu0 %v2016
        %2187 = vmatpush1.bf16.msra.mxu0 %v2015
        %2188 = vmatprep.subr.bf16.mxu0 0
        %2189 = vmatpush1.bf16.msra.mxu0 0
        %2190 = vmatprep.subr.bf16.mxu0 0
        %2191 = vmatpush1.bf16.msra.mxu0 0
        %2192 = vmatprep.subr.bf16.mxu0 0
        %2193 = vmatpush1.bf16.msra.mxu0 0
        %2194 = vmatprep.subr.bf16.mxu0 0
        %2195 = vmatpush1.bf16.msra.mxu0 0
        %2196 = vmatprep.subr.bf16.mxu0 0
        %2197 = vmatpush1.bf16.msra.mxu0 0
        %2198 = vmatprep.subr.bf16.mxu0 0
        %2199 = vmatpush1.bf16.msra.mxu0 0
        %2200 = vmatprep.subr.bf16.mxu0 0
        %2201 = vmatpush1.bf16.msra.mxu0 0
        %2202 = vmatprep.subr.bf16.mxu0 0
        %2203 = vmatpush1.bf16.msra.mxu0 0
        %2204 = vmatprep.subr.bf16.mxu0 0
        %2205 = vmatpush1.bf16.msra.mxu0 0
        %2206 = vmatprep.subr.bf16.mxu0 0
        %2207 = vmatpush1.bf16.msra.mxu0 0
        %2208 = vmatprep.subr.bf16.mxu0 0
        %2209 = vmatpush1.bf16.msra.mxu0 0
        %2210 = vmatprep.subr.bf16.mxu0 0
        %2211 = vmatpush1.bf16.msra.mxu0 0
        %2212 = vmatprep.subr.bf16.mxu0 0
        %2213 = vmatpush1.bf16.msra.mxu0 0
        %2214 = vmatprep.subr.bf16.mxu0 0
        %2215 = vmatpush1.bf16.msra.mxu0 0
        %2216 = vmatprep.subr.bf16.mxu0 0
        %2217 = vmatpush1.bf16.msra.mxu0 0
        %2218 = vmatprep.mubr.bf16.mxu0 0
        %2219 = vmatmul.mubr.bf16.gmra.mrb[0].mxu0 %v2029
        %v2220 = vpop.f32.mrb[0].mxu0
        %v2221 = vadd.f32 0.0, %v2220
        %v2222 = vpop.f32.mrb[0].mxu0
        %v2223 = vadd.f32 0.0, %v2222
        %v2224 = vpop.f32.mrb[0].mxu0
        %v2225 = vadd.f32 0.0, %v2224
        %v2226 = vpop.f32.mrb[0].mxu0
        %v2227 = vadd.f32 0.0, %v2226
        %2228 = vmatprep.mubr.bf16.mxu0 0
        %2229 = vmatmul.mubr.bf16.gmra.mrb[0].mxu0 %v2032
        %v2230 = vpop.f32.mrb[0].mxu0
        %v2231 = vadd.f32 0.0, %v2230
        %v2232 = vpop.f32.mrb[0].mxu0
        %v2233 = vadd.f32 0.0, %v2232
        %v2234 = vpop.f32.mrb[0].mxu0
        %v2235 = vadd.f32 0.0, %v2234
        %v2236 = vpop.f32.mrb[0].mxu0
        %v2237 = vadd.f32 0.0, %v2236
        %2238 = vmatprep.mubr.bf16.mxu0 0
        %2239 = vmatmul.mubr.bf16.gmra.mrb[0].mxu0 %v2035
        %v2240 = vpop.f32.mrb[0].mxu0
        %v2241 = vadd.f32 0.0, %v2240
        %v2242 = vpop.f32.mrb[0].mxu0
        %v2243 = vadd.f32 0.0, %v2242
        %v2244 = vpop.f32.mrb[0].mxu0
        %v2245 = vadd.f32 0.0, %v2244
        %v2246 = vpop.f32.mrb[0].mxu0
        %v2247 = vadd.f32 0.0, %v2246
        %2248 = vmatprep.mubr.bf16.mxu0 0
        %2249 = vmatmul.mubr.bf16.gmra.mrb[0].mxu0 %v2038
        %v2250 = vpop.f32.mrb[0].mxu0
        %v2251 = vadd.f32 0.0, %v2250
        %v2252 = vpop.f32.mrb[0].mxu0
        %v2253 = vadd.f32 0.0, %v2252
        %v2254 = vpop.f32.mrb[0].mxu0
        %v2255 = vadd.f32 0.0, %v2254
        %v2256 = vpop.f32.mrb[0].mxu0
        %v2257 = vadd.f32 0.0, %v2256
        %2258 = vdwg.mxu0
        %2259 = vmatprep.subr.bf16.mxu0 %v2018
        %2260 = vmatpush1.bf16.msra.mxu0 %v2017
        %2261 = vmatprep.subr.bf16.mxu0 0
        %2262 = vmatpush1.bf16.msra.mxu0 0
        %2263 = vmatprep.subr.bf16.mxu0 0
        %2264 = vmatpush1.bf16.msra.mxu0 0
        %2265 = vmatprep.subr.bf16.mxu0 0
        %2266 = vmatpush1.bf16.msra.mxu0 0
        %2267 = vmatprep.subr.bf16.mxu0 0
        %2268 = vmatpush1.bf16.msra.mxu0 0
        %2269 = vmatprep.subr.bf16.mxu0 0
        %2270 = vmatpush1.bf16.msra.mxu0 0
        %2271 = vmatprep.subr.bf16.mxu0 0
        %2272 = vmatpush1.bf16.msra.mxu0 0
        %2273 = vmatprep.subr.bf16.mxu0 0
        %2274 = vmatpush1.bf16.msra.mxu0 0
        %2275 = vmatprep.subr.bf16.mxu0 0
        %2276 = vmatpush1.bf16.msra.mxu0 0
        %2277 = vmatprep.subr.bf16.mxu0 0
        %2278 = vmatpush1.bf16.msra.mxu0 0
        %2279 = vmatprep.subr.bf16.mxu0 0
        %2280 = vmatpush1.bf16.msra.mxu0 0
        %2281 = vmatprep.subr.bf16.mxu0 0
        %2282 = vmatpush1.bf16.msra.mxu0 0
        %2283 = vmatprep.subr.bf16.mxu0 0
        %2284 = vmatpush1.bf16.msra.mxu0 0
        %2285 = vmatprep.subr.bf16.mxu0 0
        %2286 = vmatpush1.bf16.msra.mxu0 0
        %2287 = vmatprep.subr.bf16.mxu0 0
        %2288 = vmatpush1.bf16.msra.mxu0 0
        %2289 = vmatprep.subr.bf16.mxu0 0
        %2290 = vmatpush1.bf16.msra.mxu0 0
        %2291 = vmatprep.mubr.bf16.mxu0 0
        %2292 = vmatmul.mubr.bf16.gmra.mrb[0].mxu0 %v2029
        %v2293 = vpop.f32.mrb[0].mxu0
        %v2294 = vadd.f32 0.0, %v2293
        %v2295 = vpop.f32.mrb[0].mxu0
        %v2296 = vadd.f32 0.0, %v2295
        %v2297 = vpop.f32.mrb[0].mxu0
        %v2298 = vadd.f32 0.0, %v2297
        %v2299 = vpop.f32.mrb[0].mxu0
        %v2300 = vadd.f32 0.0, %v2299
        %2301 = vmatprep.mubr.bf16.mxu0 0
        %2302 = vmatmul.mubr.bf16.gmra.mrb[0].mxu0 %v2032
        %v2303 = vpop.f32.mrb[0].mxu0
        %v2304 = vadd.f32 0.0, %v2303
        %v2305 = vpop.f32.mrb[0].mxu0
        %v2306 = vadd.f32 0.0, %v2305
        %v2307 = vpop.f32.mrb[0].mxu0
        %v2308 = vadd.f32 0.0, %v2307
        %v2309 = vpop.f32.mrb[0].mxu0
        %v2310 = vadd.f32 0.0, %v2309
        %2311 = vmatprep.mubr.bf16.mxu0 0
        %2312 = vmatmul.mubr.bf16.gmra.mrb[0].mxu0 %v2035
        %v2313 = vpop.f32.mrb[0].mxu0
        %v2314 = vadd.f32 0.0, %v2313
        %v2315 = vpop.f32.mrb[0].mxu0
        %v2316 = vadd.f32 0.0, %v2315
        %v2317 = vpop.f32.mrb[0].mxu0
        %v2318 = vadd.f32 0.0, %v2317
        %v2319 = vpop.f32.mrb[0].mxu0
        %v2320 = vadd.f32 0.0, %v2319
        %2321 = vmatprep.mubr.bf16.mxu0 0
        %2322 = vmatmul.mubr.bf16.gmra.mrb[0].mxu0 %v2038
        %v2323 = vpop.f32.mrb[0].mxu0
        %v2324 = vadd.f32 0.0, %v2323
        %v2325 = vpop.f32.mrb[0].mxu0
        %v2326 = vadd.f32 0.0, %v2325
        %v2327 = vpop.f32.mrb[0].mxu0
        %v2328 = vadd.f32 0.0, %v2327
        %v2329 = vpop.f32.mrb[0].mxu0
        %v2330 = vadd.f32 0.0, %v2329
        %2331 = vdwg.mxu0
        %v2332 = vpack.c.bf16 %v2075, %v2075
        %v2333 = vpack.c.bf16 %v2077, %v2077
        %v2334 = vpack.c.bf16 %v2148, %v2148
        %v2335 = vpack.c.bf16 %v2150, %v2150
        %v2336 = vpack.c.bf16 %v2221, %v2221
        %v2337 = vpack.c.bf16 %v2223, %v2223
        %v2338 = vpack.c.bf16 %v2294, %v2294
        %v2339 = vpack.c.bf16 %v2296, %v2296
        %v2340 = vpack.c.bf16 %v2079, %v2079
        %v2341 = vpack.c.bf16 %v2081, %v2081
        %v2342 = vpack.c.bf16 %v2152, %v2152
        %v2343 = vpack.c.bf16 %v2154, %v2154
        %v2344 = vpack.c.bf16 %v2225, %v2225
        %v2345 = vpack.c.bf16 %v2227, %v2227
        %v2346 = vpack.c.bf16 %v2298, %v2298
        %v2347 = vpack.c.bf16 %v2300, %v2300
        %v2348 = vpack.c.bf16 %v2085, %v2085
        %v2349 = vpack.c.bf16 %v2087, %v2087
        %v2350 = vpack.c.bf16 %v2158, %v2158
        %v2351 = vpack.c.bf16 %v2160, %v2160
        %v2352 = vpack.c.bf16 %v2231, %v2231
        %v2353 = vpack.c.bf16 %v2233, %v2233
        %v2354 = vpack.c.bf16 %v2304, %v2304
        %v2355 = vpack.c.bf16 %v2306, %v2306
        %v2356 = vpack.c.bf16 %v2089, %v2089
        %v2357 = vpack.c.bf16 %v2091, %v2091
        %v2358 = vpack.c.bf16 %v2162, %v2162
        %v2359 = vpack.c.bf16 %v2164, %v2164
        %v2360 = vpack.c.bf16 %v2235, %v2235
        %v2361 = vpack.c.bf16 %v2237, %v2237
        %v2362 = vpack.c.bf16 %v2308, %v2308
        %v2363 = vpack.c.bf16 %v2310, %v2310
        %v2364 = vpack.c.bf16 %v2095, %v2095
        %v2365 = vpack.c.bf16 %v2097, %v2097
        %v2366 = vpack.c.bf16 %v2168, %v2168
        %v2367 = vpack.c.bf16 %v2170, %v2170
        %v2368 = vpack.c.bf16 %v2241, %v2241
        %v2369 = vpack.c.bf16 %v2243, %v2243
        %v2370 = vpack.c.bf16 %v2314, %v2314
        %v2371 = vpack.c.bf16 %v2316, %v2316
        %v2372 = vpack.c.bf16 %v2099, %v2099
        %v2373 = vpack.c.bf16 %v2101, %v2101
        %v2374 = vpack.c.bf16 %v2172, %v2172
        %v2375 = vpack.c.bf16 %v2174, %v2174
        %v2376 = vpack.c.bf16 %v2245, %v2245
        %v2377 = vpack.c.bf16 %v2247, %v2247
        %v2378 = vpack.c.bf16 %v2318, %v2318
        %v2379 = vpack.c.bf16 %v2320, %v2320
        %v2380 = vpack.c.bf16 %v2105, %v2105
        %v2381 = vpack.c.bf16 %v2107, %v2107
        %v2382 = vpack.c.bf16 %v2178, %v2178
        %v2383 = vpack.c.bf16 %v2180, %v2180
        %v2384 = vpack.c.bf16 %v2251, %v2251
        %v2385 = vpack.c.bf16 %v2253, %v2253
        %v2386 = vpack.c.bf16 %v2324, %v2324
        %v2387 = vpack.c.bf16 %v2326, %v2326
        %v2388 = vpack.c.bf16 %v2109, %v2109
        %v2389 = vpack.c.bf16 %v2111, %v2111
        %v2390 = vpack.c.bf16 %v2182, %v2182
        %v2391 = vpack.c.bf16 %v2184, %v2184
        %v2392 = vpack.c.bf16 %v2255, %v2255
        %v2393 = vpack.c.bf16 %v2257, %v2257
        %v2394 = vpack.c.bf16 %v2328, %v2328
        %v2395 = vpack.c.bf16 %v2330, %v2330
        %v2460 = vunpack.c.l.b16 %v2332
        %v2461 = vunpack.c.l.b16 %v2333
        %v2462 = vunpack.c.l.b16 %v2334
        %v2463 = vunpack.c.l.b16 %v2335
        %v2464 = vunpack.c.l.b16 %v2336
        %v2465 = vunpack.c.l.b16 %v2337
        %v2466 = vunpack.c.l.b16 %v2338
        %v2467 = vunpack.c.l.b16 %v2339
        %v2468 = vunpack.c.l.b16 %v2340
        %v2469 = vunpack.c.l.b16 %v2341
        %v2470 = vunpack.c.l.b16 %v2342
        %v2471 = vunpack.c.l.b16 %v2343
        %v2472 = vunpack.c.l.b16 %v2344
        %v2473 = vunpack.c.l.b16 %v2345
        %v2474 = vunpack.c.l.b16 %v2346
        %v2475 = vunpack.c.l.b16 %v2347
        %v2476 = vunpack.c.l.b16 %v2348
        %v2477 = vunpack.c.l.b16 %v2349
        %v2478 = vunpack.c.l.b16 %v2350
        %v2479 = vunpack.c.l.b16 %v2351
        %v2480 = vunpack.c.l.b16 %v2352
        %v2481 = vunpack.c.l.b16 %v2353
        %v2482 = vunpack.c.l.b16 %v2354
        %v2483 = vunpack.c.l.b16 %v2355
        %v2484 = vunpack.c.l.b16 %v2356
        %v2485 = vunpack.c.l.b16 %v2357
        %v2486 = vunpack.c.l.b16 %v2358
        %v2487 = vunpack.c.l.b16 %v2359
        %v2488 = vunpack.c.l.b16 %v2360
        %v2489 = vunpack.c.l.b16 %v2361
        %v2490 = vunpack.c.l.b16 %v2362
        %v2491 = vunpack.c.l.b16 %v2363
        %v2492 = vunpack.c.l.b16 %v2364
        %v2493 = vunpack.c.l.b16 %v2365
        %v2494 = vunpack.c.l.b16 %v2366
        %v2495 = vunpack.c.l.b16 %v2367
        %v2496 = vunpack.c.l.b16 %v2368
        %v2497 = vunpack.c.l.b16 %v2369
        %v2498 = vunpack.c.l.b16 %v2370
        %v2499 = vunpack.c.l.b16 %v2371
        %v2500 = vunpack.c.l.b16 %v2372
        %v2501 = vunpack.c.l.b16 %v2373
        %v2502 = vunpack.c.l.b16 %v2374
        %v2503 = vunpack.c.l.b16 %v2375
        %v2504 = vunpack.c.l.b16 %v2376
        %v2505 = vunpack.c.l.b16 %v2377
        %v2506 = vunpack.c.l.b16 %v2378
        %v2507 = vunpack.c.l.b16 %v2379
        %v2508 = vunpack.c.l.b16 %v2380
        %v2509 = vunpack.c.l.b16 %v2381
        %v2510 = vunpack.c.l.b16 %v2382
        %v2511 = vunpack.c.l.b16 %v2383
        %v2512 = vunpack.c.l.b16 %v2384
        %v2513 = vunpack.c.l.b16 %v2385
        %v2514 = vunpack.c.l.b16 %v2386
        %v2515 = vunpack.c.l.b16 %v2387
        %v2516 = vunpack.c.l.b16 %v2388
        %v2517 = vunpack.c.l.b16 %v2389
        %v2518 = vunpack.c.l.b16 %v2390
        %v2519 = vunpack.c.l.b16 %v2391
        %v2520 = vunpack.c.l.b16 %v2392
        %v2521 = vunpack.c.l.b16 %v2393
        %v2522 = vunpack.c.l.b16 %v2394
        %v2523 = vunpack.c.l.b16 %v2395
        %v2524 = vpack.c.b16 %v2461, %v2460
        %v2525 = vpack.c.b16 %v2463, %v2462
        %v2526 = vpack.c.b16 %v2465, %v2464
        %v2527 = vpack.c.b16 %v2467, %v2466
        %v2528 = vpack.c.b16 %v2469, %v2468
        %v2529 = vpack.c.b16 %v2471, %v2470
        %v2530 = vpack.c.b16 %v2473, %v2472
        %v2531 = vpack.c.b16 %v2475, %v2474
        %v2532 = vpack.c.b16 %v2477, %v2476
        %v2533 = vpack.c.b16 %v2479, %v2478
        %v2534 = vpack.c.b16 %v2481, %v2480
        %v2535 = vpack.c.b16 %v2483, %v2482
        %v2536 = vpack.c.b16 %v2485, %v2484
        %v2537 = vpack.c.b16 %v2487, %v2486
        %v2538 = vpack.c.b16 %v2489, %v2488
        %v2539 = vpack.c.b16 %v2491, %v2490
        %v2540 = vpack.c.b16 %v2493, %v2492
        %v2541 = vpack.c.b16 %v2495, %v2494
        %v2542 = vpack.c.b16 %v2497, %v2496
        %v2543 = vpack.c.b16 %v2499, %v2498
        %v2544 = vpack.c.b16 %v2501, %v2500
        %v2545 = vpack.c.b16 %v2503, %v2502
        %v2546 = vpack.c.b16 %v2505, %v2504
        %v2547 = vpack.c.b16 %v2507, %v2506
        %v2548 = vpack.c.b16 %v2509, %v2508
        %v2549 = vpack.c.b16 %v2511, %v2510
        %v2550 = vpack.c.b16 %v2513, %v2512
        %v2551 = vpack.c.b16 %v2515, %v2514
        %v2552 = vpack.c.b16 %v2517, %v2516
        %v2553 = vpack.c.b16 %v2519, %v2518
        %v2554 = vpack.c.b16 %v2521, %v2520
        %v2555 = vpack.c.b16 %v2523, %v2522
        %2588 = vst [vmem:[%s309 + $0x10] sm:$0xff] %v2524
        %2589 = vst [vmem:[%s309 + $0x18] sm:$0xff] %v2525
        %2590 = vst [vmem:[%s309 + $0x20] sm:$0xff] %v2526
        %2591 = vst [vmem:[%s309 + $0x28] sm:$0xff] %v2527
        %2592 = vst [vmem:[%s309 + $0x40] sm:$0xff] %v2528
        %2593 = vst [vmem:[%s309 + $0x48] sm:$0xff] %v2529
        %2594 = vst [vmem:[%s309 + $0x50] sm:$0xff] %v2530
        %2595 = vst [vmem:[%s309 + $0x58] sm:$0xff] %v2531
        %2596 = vst [vmem:[%s309 + $0x70] sm:$0xff] %v2532
        %2597 = vst [vmem:[%s309 + $0x78] sm:$0xff] %v2533
        %2598 = vst [vmem:[%s309 + $0x80] sm:$0xff] %v2534
        %2599 = vst [vmem:[%s309 + $0x88] sm:$0xff] %v2535
        %2600 = vst [vmem:[%s309 + $0xa0] sm:$0xff] %v2536
        %2601 = vst [vmem:[%s309 + $0xa8] sm:$0xff] %v2537
        %2602 = vst [vmem:[%s309 + $0xb0] sm:$0xff] %v2538
        %2603 = vst [vmem:[%s309 + $0xb8] sm:$0xff] %v2539
        %2604 = vst [vmem:[%s309 + $0xd0] sm:$0xff] %v2540
        %2605 = vst [vmem:[%s309 + $0xd8] sm:$0xff] %v2541
        %2606 = vst [vmem:[%s309 + $0xe0] sm:$0xff] %v2542
        %2607 = vst [vmem:[%s309 + $0xe8] sm:$0xff] %v2543
        %2608 = vst [vmem:[%s309 + $0x100] sm:$0xff] %v2544
        %2609 = vst [vmem:[%s309 + $0x108] sm:$0xff] %v2545
        %2610 = vst [vmem:[%s309 + $0x110] sm:$0xff] %v2546
        %2611 = vst [vmem:[%s309 + $0x118] sm:$0xff] %v2547
        %2612 = vst [vmem:[%s309 + $0x130] sm:$0xff] %v2548
        %2613 = vst [vmem:[%s309 + $0x138] sm:$0xff] %v2549
        %2614 = vst [vmem:[%s309 + $0x140] sm:$0xff] %v2550
        %2615 = vst [vmem:[%s309 + $0x148] sm:$0xff] %v2551
        %2616 = vst [vmem:[%s309 + $0x160] sm:$0xff] %v2552
        %2617 = vst [vmem:[%s309 + $0x168] sm:$0xff] %v2553
        %2618 = vst [vmem:[%s309 + $0x170] sm:$0xff] %v2554
        %2619 = vst [vmem:[%s309 + $0x178] sm:$0xff] %v2555
        %s2620 = sand.u32 %s151, 1
        %s2621 = scalar_lea.sflag [#allocation4], %s2620
        %s2622 = sand.u32 %s151, 1
        %s2623 = smul.addr %s2622, 384
        %s2624 = scalar_lea.vmem [#allocation10], %s2623
        // Predicated region
        $region53: #{feature_extractor_forward.5} parent=35 // pred_check
          %p2625 = pneg %p161
        $region54: #{feature_extractor_forward.5} parent=35 // pred_check_branch
          %2627 = sbr.rel (%p2625) target = $region56
        $region55: #{feature_extractor_forward.5} parent=35 // pred_region
          %s2628 = smul.u32 8, %s30
          %s2630 = ssub.s32 6144, 6144
          %2631 = vsyncadd %s2621, %s2630
          %s2632 = smul.addr %s2628, 12
          %s2633 = smul.addr %s29, 96
          %s2634 = sadd.s32 %s2632, %s2633
          %s2635 = smul.addr %s2634, 64
          %s2636 = scalar_lea.hbm %s4, %s2635
          %s2637 = sshll.u32 %s2624, 4
          %s2638 = int_to_ptr.vmem [resolvable:$true] %s2637
          %2643 = dma.vmem_to_hbm [thread:$0]  %s2638, 6144, %s2636, %s2621, 768, 768, 48
        $region56: #{feature_extractor_forward.5} parent=35 // pred_fallthru
          _
      $region36: #{feature_extractor_forward.5} parent=5 // pred_fallthru
        _
      %p2644 = scmp.le.s32.totalorder 2, %s20
      // Predicated region
      $region57: #{feature_extractor_forward.5} parent=5 // pred_check
        %p2645 = pneg %p2644
      $region58: #{feature_extractor_forward.5} parent=5 // pred_check_branch
        %2647 = sbr.rel (%p2645) target = $region60
      $region59: #{feature_extractor_forward.5} parent=5 // pred_region
        %s2648 = ssub.s32 %s20, 2
        // Predicated region
        $region61: #{feature_extractor_forward.5} parent=59 // pred_check
          %p2649 = pneg %p167
        $region62: #{feature_extractor_forward.5} parent=59 // pred_check_branch
          %2651 = sbr.rel (%p2649) target = $region64
        $region63: #{feature_extractor_forward.5} parent=59 // pred_region
          %s2652 = sand.u32 %s152, 1
          %s2653 = scalar_lea.sflag [#allocation4], %s2652
          %s2654 = sand.u32 %s152, 1
          %s2655 = smul.addr %s2654, 384
          %s2656 = scalar_lea.vmem [#allocation10], %s2655
          %2657 = dma.done %s2653, 6144
        $region64: #{feature_extractor_forward.5} parent=59 // pred_fallthru
          _
      $region60: #{feature_extractor_forward.5} parent=5 // pred_fallthru
        _
    $region6: #{feature_extractor_forward.5} parent=1 // loop_footer
      %s24 = sadd.s32 1, %s20
    $region7: #{feature_extractor_forward.5} parent=1 // loop_footer_branch
      %19 = sbr.rel target = $region3
    $region8: #{feature_extractor_forward.5} parent=1 // loop_exit
      _
    %2658 = vsyncpa [#allocation3], 1
    %s2659 = scalar_lea.sflag [#allocation3], 1
    %2660 = vsyncpa %s2659, 1
    %2661 = vsyncpa [#allocation6], 1
    %s2662 = scalar_lea.sflag [#allocation6], 1
    %2663 = vsyncpa %s2662, 1
    %2664 = vsyncpa [#allocation9], 1
    %2665 = vsyncpa [#allocation4], 1
    %s2666 = scalar_lea.sflag [#allocation4], 1
    %2667 = vsyncpa %s2666, 1

</llo_original>
